<compile_context>
chip_gen: v5e
topology: v5e:2x2
jax: 0.10.0
libtpu: 0.0.40
codegen_flags: <defaults>
</compile_context>

<pallas_src>
import jax
import jax.numpy as jnp
from jax.experimental import pallas as pl
from jax.experimental.pallas import tpu as pltpu


def _make_kernel(*, num_heads, head_dim, mask_groups, has_mask, approx_recip):
    """mask_groups = number of group rows in the delivered mask block."""

    def kernel(*refs):
        if has_mask:
            x_ref, mask_ref, wqkv_ref, wproj_ref, bias_ref, o_ref, heads_ref = refs
        else:
            x_ref, wqkv_ref, wproj_ref, bias_ref, o_ref, heads_ref = refs
            mask_ref = None

        bw, n, c = x_ref.shape

        # ---- fused QKV projection: one (bw*n, C) @ (C, 3C) MXU pass ----------
        # (n is padded to a multiple of 8 by the wrapper -> reshapes are free)
        x2 = x_ref[...].reshape(bw * n, c)
        qkv = jnp.dot(x2, wqkv_ref[...], preferred_element_type=jnp.float32)
        qkv = qkv.astype(x_ref.dtype).reshape(bw, n, 3 * c)   # one cast, whole slab

        if has_mask:
            m = mask_ref[...]                                 # (gB, n, n) f32

        # ---- per-head attention, batched over the bw windows -----------------
        for h in range(num_heads):                            # static unroll
            lo = h * head_dim
            q = qkv[:, :, lo:lo + head_dim]                   # (bw, n, hd)
            k = qkv[:, :, c + lo:c + lo + head_dim]
            v = qkv[:, :, 2 * c + lo:2 * c + lo + head_dim]

            # scores; qk scale already folded into the Wq columns
            s = jnp.einsum('bqd,bkd->bqk', q, k,
                           preferred_element_type=jnp.float32)  # (bw, n, n) f32
            if has_mask:
                if mask_groups == bw:                         # one group per window
                    s = s + m
                else:                                         # bw multiple of nG
                    s = (s.reshape(bw // mask_groups, mask_groups, n, n)
                         + m[None]).reshape(bw, n, n)

            # f32 softmax with deferred normalisation
            s = s - jnp.max(s, axis=-1, keepdims=True)
            p = jnp.exp(s)
            row = jnp.sum(p, axis=-1, keepdims=True)           # (bw, n, 1)

            o_h = jnp.einsum('bqk,bkd->bqd', p.astype(v.dtype), v,
                             preferred_element_type=jnp.float32)  # (bw, n, hd)
            if approx_recip:
                o_h = o_h * pl.reciprocal(row, approx=True)    # EUP slot (bf16 path)
            else:
                o_h = o_h / row                                # exact parity (f32 path)
            heads_ref[:, :, lo:lo + head_dim] = o_h.astype(heads_ref.dtype)

        # ---- output projection: one (bw*n, C) @ (C, C) MXU pass + bias -------
        o2 = heads_ref[...].reshape(bw * n, c)
        out = jnp.dot(o2, wproj_ref[...], preferred_element_type=jnp.float32)
        out = out + bias_ref[...]
        o_ref[...] = out.reshape(bw, n, c).astype(o_ref.dtype)

    return kernel


def _pick_bw(B_, nG, footprint, budget):
    """Largest windows-per-block dividing B_, group-compatible with the mask
    (bw % nG == 0 or nG % bw == 0), fitting the VMEM budget, preferring >= 2
    (and even) grid steps so both v7x TensorCores stay busy."""
    cands = [d for d in range(1, B_ + 1)
             if B_ % d == 0 and (d % nG == 0 or nG % d == 0)]
    feasible = [d for d in cands if footprint(d) <= budget] or [cands[0]]
    multi = [d for d in feasible if B_ // d >= 2] or feasible
    even = [d for d in multi if (B_ // d) % 2 == 0] or multi
    return max(even)


def window_attention_3d(x, mask, wqkv, wproj, bproj, *, num_heads,
                        qk_scale=None, compute_dtype=None,
                        windows_per_block=None):
    """x: (B_, N, C);  mask: (nG, N, N) additive 0/-inf mask or None;
    wqkv: (3C, C) torch Linear weight (qkv_bias=False, the module default);
    wproj: (C, C);  bproj: (C,).
    NOTE: assumes the reference window ordering group(window w) = w % nG,
    matching `attn.view(B_//nG, nG, ...)` in the PyTorch forward."""
    B_, N, C = x.shape
    H = num_heads
    hd = C // H
    assert H * hd == C
    scale = float(qk_scale) if qk_scale is not None else hd ** (-0.5)
    if compute_dtype is None:
        compute_dtype = x.dtype          # pass jnp.bfloat16 for MXU-native operands
    out_dtype = x.dtype
    csize = jnp.dtype(compute_dtype).itemsize
    osize = jnp.dtype(out_dtype).itemsize

    # Pad N up to a multiple of 8 so in-kernel 3D<->2D reshapes are free.
    Np = -(-N // 8) * 8
    pad = Np - N

    # torch Linear computes x @ W.T + b: keep W.T whole and lane-dense, and
    # fold the qk scale into the q columns of Wqkv^T.
    wqkv_t = wqkv.T.astype(jnp.float32)                        # (C, 3C)
    wqkv_t = jnp.concatenate([wqkv_t[:, :C] * scale, wqkv_t[:, C:]], axis=1)
    wqkv_t = wqkv_t.astype(compute_dtype)
    wproj_t = wproj.T.astype(compute_dtype)                    # (C, C)
    bias = bproj.reshape(1, C).astype(jnp.float32)

    has_user_mask = mask is not None
    nG = int(mask.shape[0]) if has_user_mask else 1
    if has_user_mask:
        assert B_ % nG == 0, "B_ must be num_groups * B"

    # Combined additive mask: user window mask (padded) + key-padding mask.
    has_mask = has_user_mask or pad > 0
    if has_mask:
        if has_user_mask:
            m = jnp.pad(mask.astype(jnp.float32), ((0, 0), (0, pad), (0, pad)))
        else:
            m = jnp.zeros((1, Np, Np), jnp.float32)
        if pad:
            key_pad = jnp.where(jnp.arange(Np) >= N, -1e9, 0.0)
            m = m + key_pad.astype(jnp.float32)[None, None, :]
        mask_arr = m                                           # (nG, Np, Np)
    else:
        mask_arr = None

    x_p = jnp.pad(x, ((0, 0), (0, pad), (0, 0))).astype(compute_dtype)

    # ---- windows-per-block from a per-generation VMEM budget ----------------
    try:
        vmem_cap = int(pltpu.get_tpu_info().vmem_capacity_bytes)
    except Exception:
        vmem_cap = 64 * 1024 * 1024                            # v7x-safe default
    vmem_limit = min(int(vmem_cap * 3 // 4), 96 * 1024 * 1024)
    const_bytes = (3 * C * C + C * C + C) * csize \
        + (nG * Np * Np * 4 if has_mask else 0)
    budget = max(vmem_limit // 3 - const_bytes, 2 * 1024 * 1024)

    def footprint(bw):                       # accounted per-grid-step VMEM
        return (2 * bw * Np * C * csize      # x block (double buffered)
                + 2 * bw * Np * C * osize    # out block (double buffered)
                + bw * Np * 3 * C * 4        # f32 QKV slab (transient)
                + 2 * bw * Np * Np * 4       # scores + probs (transient)
                + bw * Np * C * csize)       # per-head output scratch

    if windows_per_block is None:
        bw = _pick_bw(B_, nG, footprint, budget)
    else:
        bw = int(windows_per_block)
        assert B_ % bw == 0
        if has_mask:
            assert bw % nG == 0 or nG % bw == 0

    mask_groups = min(bw, nG) if has_mask else 0
    mask_const = has_mask and bw % nG == 0     # mask block is grid-invariant

    kernel = _make_kernel(
        num_heads=H, head_dim=hd, mask_groups=mask_groups, has_mask=has_mask,
        approx_recip=(jnp.dtype(compute_dtype) == jnp.dtype(jnp.bfloat16)))

    args = [x_p]
    if has_mask:
        args.append(mask_arr)
    args += [wqkv_t, wproj_t, bias]

    def call(single_buffer):
        def const_spec(shape, resident):
            idx = lambda i, _s=shape: (0,) * len(_s)
            if single_buffer and resident:
                # grid-invariant block: one VMEM buffer instead of two
                return pl.BlockSpec(shape, idx, pipeline_mode=pl.Buffered(1))
            return pl.BlockSpec(shape, idx)

        in_specs = [pl.BlockSpec((bw, Np, C), lambda i: (i, 0, 0))]          # x
        if has_mask:
            if mask_const:
                in_specs.append(const_spec((nG, Np, Np), True))              # mask
            else:  # nG % bw == 0: per-step slice of bw consecutive group masks
                in_specs.append(pl.BlockSpec((bw, Np, Np),
                                             lambda i: (i % (nG // bw), 0, 0)))
        in_specs += [const_spec((C, 3 * C), True),                           # Wqkv^T
                     const_spec((C, C), True),                               # Wproj^T
                     const_spec((1, C), True)]                               # bias

        return pl.pallas_call(
            kernel,
            out_shape=jax.ShapeDtypeStruct((B_, Np, C), out_dtype),
            grid_spec=pltpu.PrefetchScalarGridSpec(
                num_scalar_prefetch=0,
                grid=(B_ // bw,),
                in_specs=in_specs,
                out_specs=pl.BlockSpec((bw, Np, C), lambda i: (i, 0, 0)),
                scratch_shapes=[pltpu.VMEM((bw, Np, C), compute_dtype)],
            ),
            compiler_params=pltpu.CompilerParams(
                dimension_semantics=("parallel",),
                vmem_limit_bytes=vmem_limit),
        )(*args)

    try:
        out = call(True)
    except Exception:       # JAX builds without pipeline_mode / Buffered(1)
        out = call(False)

    return out[:, :N, :] if pad else out


def _reference(x, mask, wqkv, wproj, bproj, num_heads, scale):
    """Plain-JAX transcription of the PyTorch forward (for verification)."""
    B_, N, C = x.shape
    hd = C // num_heads
    qkv = (x @ wqkv.T).reshape(B_, N, 3, num_heads, hd)
    qkv = jnp.transpose(qkv, (2, 0, 3, 1, 4))
    q, k, v = qkv[0] * scale, qkv[1], qkv[2]
    attn = q @ jnp.swapaxes(k, -2, -1)                         # (B_, H, N, N)
    if mask is not None:
        nG = mask.shape[0]
        attn = attn.reshape(B_ // nG, nG, num_heads, N, N)
        attn = attn + mask[None, :, None]
        attn = attn.reshape(B_, num_heads, N, N)
    attn = jax.nn.softmax(attn, axis=-1)
    out = jnp.transpose(attn @ v, (0, 2, 1, 3)).reshape(B_, N, C)
    return out @ wproj.T + bproj


if __name__ == "__main__":
    key = jax.random.PRNGKey(0)

    def make_case(k, dim, window_size, nG, B):
        N = window_size[0] * window_size[1] * window_size[2]
        B_ = B * nG
        kx, kqkv, kproj, kbias, kmask = jax.random.split(k, 5)
        x = jax.random.normal(kx, (B_, N, dim), jnp.float32)
        wqkv = 0.02 * jax.random.normal(kqkv, (3 * dim, dim), jnp.float32)
        wproj = 0.02 * jax.random.normal(kproj, (dim, dim), jnp.float32)
        bproj = 0.02 * jax.random.normal(kbias, (dim,), jnp.float32)
        mask_bits = jax.random.bernoulli(kmask, 0.2, (nG, N, N))
        mask = jnp.where(mask_bits, -1e9, 0.0).astype(jnp.float32)
        return x, mask, wqkv, wproj, bproj

    def check(out, ref, atol, rtol, name):
        assert out.shape == ref.shape, (name, out.shape, ref.shape)
        err = float(jnp.max(jnp.abs(out - ref)))
        assert jnp.allclose(out, ref, atol=atol, rtol=rtol), (name, err)

    k1, k2 = jax.random.split(key)

    # Case A: dim=32, window=(2,4,4) -> N=32, heads=4, B=2, nG=2 -> B_=4
    x, mask, wqkv, wproj, bproj = make_case(k1, 32, (2, 4, 4), 2, 2)
    scale = (32 // 4) ** (-0.5)
    ref = _reference(x, mask, wqkv, wproj, bproj, 4, scale)
    ref_nm = _reference(x, None, wqkv, wproj, bproj, 4, scale)

    # 1) masked, f32 (exact-division softmax path)
    out = jax.block_until_ready(
        window_attention_3d(x, mask, wqkv, wproj, bproj, num_heads=4))
    check(out, ref, 1e-3, 1e-3, "masked f32")

    # 2) mask=None, f32 (no mask DMA at all)
    out_nm = jax.block_until_ready(
        window_attention_3d(x, None, wqkv, wproj, bproj, num_heads=4))
    check(out_nm, ref_nm, 1e-3, 1e-3, "maskless f32")

    # 3) bf16 MXU-operand path (v5e/v6e/v7x), f32 accumulation + f32 softmax
    out_bf = jax.block_until_ready(
        window_attention_3d(x, mask, wqkv, wproj, bproj, num_heads=4,
                            compute_dtype=jnp.bfloat16))
    check(out_bf, ref, 1e-2, 1e-2, "masked bf16")

    # 4) explicit small windows-per-block (exercises the bw < nG mask-slice path)
    out_b1 = jax.block_until_ready(
        window_attention_3d(x, mask, wqkv, wproj, bproj, num_heads=4,
                            windows_per_block=1))
    check(out_b1, ref, 1e-3, 1e-3, "masked f32 bw=1")

    # Case B: window=(1,7,7) -> N=49 (not a multiple of 8) exercises padding.
    xb, maskb, wqkvb, wprojb, bprojb = make_case(k2, 16, (1, 7, 7), 2, 2)
    scale_b = (16 // 2) ** (-0.5)
    out_p = jax.block_until_ready(
        window_attention_3d(xb, maskb, wqkvb, wprojb, bprojb, num_heads=2))
    check(out_p, _reference(xb, maskb, wqkvb, wprojb, bprojb, 2, scale_b),
          1e-3, 1e-3, "masked f32 N=49")

    out_pn = jax.block_until_ready(
        window_attention_3d(xb, None, wqkvb, wprojb, bprojb, num_heads=2))
    check(out_pn, _reference(xb, None, wqkvb, wprojb, bprojb, 2, scale_b),
          1e-3, 1e-3, "maskless f32 N=49")

    print("KERNEL_OK")
</pallas_src>

<mosaic_0001>
module attributes {stable_mosaic.version = 11 : i64} {
  func.func @kernel(%arg0: i32, %arg1: memref<2x32x32xf32, #tpu.memory_space<vmem>>, %arg2: memref<2x32x32xf32, #tpu.memory_space<vmem>>, %arg3: memref<32x96xf32, #tpu.memory_space<vmem>>, %arg4: memref<32x32xf32, #tpu.memory_space<vmem>>, %arg5: memref<1x32xf32, #tpu.memory_space<vmem>>, %arg6: memref<2x32x32xf32, #tpu.memory_space<vmem>>, %arg7: memref<2x32x32xf32, #tpu.memory_space<vmem>>) attributes {dimension_semantics = [#tpu.dimension_semantics<parallel>], iteration_bounds = array<i64: 2>, scalar_prefetch = 0 : i64, scratch_operands = 1 : i64, tpu.core_type = #tpu.core_type<tc>, window_params = [{transform_indices = @transform_0, window_bounds = array<i64: 2, 32, 32>}, {pipeline_mode = #tpu.pipeline_mode<synchronous>, transform_indices = @transform_1, window_bounds = array<i64: 2, 32, 32>}, {pipeline_mode = #tpu.pipeline_mode<synchronous>, transform_indices = @transform_2, window_bounds = array<i64: 32, 96>}, {pipeline_mode = #tpu.pipeline_mode<synchronous>, transform_indices = @transform_3, window_bounds = array<i64: 32, 32>}, {pipeline_mode = #tpu.pipeline_mode<synchronous>, transform_indices = @transform_4, window_bounds = array<i64: 1, 32>}, {transform_indices = @transform_5, window_bounds = array<i64: 2, 32, 32>}]} {
    %c0 = arith.constant 0 : index
    %c0_0 = arith.constant 0 : index
    %c0_1 = arith.constant 0 : index
    %0 = vector.load %arg1[%c0, %c0_0, %c0_1] : memref<2x32x32xf32, #tpu.memory_space<vmem>>, vector<2x32x32xf32>
    %1 = vector.shape_cast %0 : vector<2x32x32xf32> to vector<64x32xf32>
    %c0_2 = arith.constant 0 : index
    %c0_3 = arith.constant 0 : index
    %2 = vector.load %arg3[%c0_2, %c0_3] : memref<32x96xf32, #tpu.memory_space<vmem>>, vector<32x96xf32>
    %cst = arith.constant dense<0.000000e+00> : vector<64x96xf32>
    %3 = tpu.matmul %1, %2, %cst {dimension_numbers = #tpu.dot_dimension_numbers<[1], [0], [0], [1], [0, 0, 1, 1], [], []>} : vector<64x32xf32>, vector<32x96xf32>, vector<64x96xf32> -> vector<64x96xf32>
    %4 = vector.shape_cast %3 : vector<64x96xf32> to vector<2x32x96xf32>
    %c0_4 = arith.constant 0 : index
    %c0_5 = arith.constant 0 : index
    %c0_6 = arith.constant 0 : index
    %5 = vector.load %arg2[%c0_4, %c0_5, %c0_6] : memref<2x32x32xf32, #tpu.memory_space<vmem>>, vector<2x32x32xf32>
    %6 = vector.extract_strided_slice %4 {offsets = [0, 0, 0], sizes = [2, 32, 8], strides = [1, 1, 1]} : vector<2x32x96xf32> to vector<2x32x8xf32>
    %7 = vector.extract_strided_slice %4 {offsets = [0, 0, 32], sizes = [2, 32, 8], strides = [1, 1, 1]} : vector<2x32x96xf32> to vector<2x32x8xf32>
    %8 = vector.extract_strided_slice %4 {offsets = [0, 0, 64], sizes = [2, 32, 8], strides = [1, 1, 1]} : vector<2x32x96xf32> to vector<2x32x8xf32>
    "tpu.trace_start"() <{level = 10 : i32, message = "bqd,bkd->bqk"}> : () -> ()
    %cst_7 = arith.constant dense<0.000000e+00> : vector<2x32x32xf32>
    %9 = tpu.matmul %6, %7, %cst_7 {dimension_numbers = #tpu.dot_dimension_numbers<[2], [2], [1], [1], [0, 0, 0, 1, 1, 1], [0], [0]>} : vector<2x32x8xf32>, vector<2x32x8xf32>, vector<2x32x32xf32> -> vector<2x32x32xf32>
    "tpu.trace_stop"() : () -> ()
    %10 = arith.addf %9, %5 : vector<2x32x32xf32>
    %cst_8 = arith.constant dense<0xFF800000> : vector<2x32xf32>
    %11 = vector.multi_reduction <maximumf>, %10, %cst_8 [2] : vector<2x32x32xf32> to vector<2x32xf32>
    %12 = vector.shape_cast %11 : vector<2x32xf32> to vector<2x32x1xf32>
    %13 = vector.broadcast %12 : vector<2x32x1xf32> to vector<2x32x32xf32>
    %14 = arith.subf %10, %13 : vector<2x32x32xf32>
    %15 = math.exp %14 : vector<2x32x32xf32>
    %cst_9 = arith.constant dense<0.000000e+00> : vector<2x32xf32>
    %16 = vector.multi_reduction <add>, %15, %cst_9 [2] : vector<2x32x32xf32> to vector<2x32xf32>
    %17 = vector.shape_cast %16 : vector<2x32xf32> to vector<2x32x1xf32>
    "tpu.trace_start"() <{level = 10 : i32, message = "bqk,bkd->bqd"}> : () -> ()
    %cst_10 = arith.constant dense<0.000000e+00> : vector<2x32x8xf32>
    %18 = tpu.matmul %15, %8, %cst_10 {dimension_numbers = #tpu.dot_dimension_numbers<[2], [1], [1], [2], [0, 0, 0, 1, 1, 2], [0], [0]>} : vector<2x32x32xf32>, vector<2x32x8xf32>, vector<2x32x8xf32> -> vector<2x32x8xf32>
    "tpu.trace_stop"() : () -> ()
    %19 = vector.broadcast %17 : vector<2x32x1xf32> to vector<2x32x8xf32>
    %20 = arith.divf %18, %19 : vector<2x32x8xf32>
    %c0_11 = arith.constant 0 : index
    %c0_12 = arith.constant 0 : index
    %c0_13 = arith.constant 0 : index
    %21 = vector.load %arg7[%c0_11, %c0_12, %c0_13] : memref<2x32x32xf32, #tpu.memory_space<vmem>>, vector<2x32x8xf32>
    tpu.vector_store %arg7[%c0_11, %c0_12, %c0_13], %20 {strides = array<i32>} : memref<2x32x32xf32, #tpu.memory_space<vmem>>, vector<2x32x8xf32>,
    %22 = vector.extract_strided_slice %4 {offsets = [0, 0, 8], sizes = [2, 32, 8], strides = [1, 1, 1]} : vector<2x32x96xf32> to vector<2x32x8xf32>
    %23 = vector.extract_strided_slice %4 {offsets = [0, 0, 40], sizes = [2, 32, 8], strides = [1, 1, 1]} : vector<2x32x96xf32> to vector<2x32x8xf32>
    %24 = vector.extract_strided_slice %4 {offsets = [0, 0, 72], sizes = [2, 32, 8], strides = [1, 1, 1]} : vector<2x32x96xf32> to vector<2x32x8xf32>
    "tpu.trace_start"() <{level = 10 : i32, message = "bqd,bkd->bqk"}> : () -> ()
    %cst_14 = arith.constant dense<0.000000e+00> : vector<2x32x32xf32>
    %25 = tpu.matmul %22, %23, %cst_14 {dimension_numbers = #tpu.dot_dimension_numbers<[2], [2], [1], [1], [0, 0, 0, 1, 1, 1], [0], [0]>} : vector<2x32x8xf32>, vector<2x32x8xf32>, vector<2x32x32xf32> -> vector<2x32x32xf32>
    "tpu.trace_stop"() : () -> ()
    %26 = arith.addf %25, %5 : vector<2x32x32xf32>
    %cst_15 = arith.constant dense<0xFF800000> : vector<2x32xf32>
    %27 = vector.multi_reduction <maximumf>, %26, %cst_15 [2] : vector<2x32x32xf32> to vector<2x32xf32>
    %28 = vector.shape_cast %27 : vector<2x32xf32> to vector<2x32x1xf32>
    %29 = vector.broadcast %28 : vector<2x32x1xf32> to vector<2x32x32xf32>
    %30 = arith.subf %26, %29 : vector<2x32x32xf32>
    %31 = math.exp %30 : vector<2x32x32xf32>
    %cst_16 = arith.constant dense<0.000000e+00> : vector<2x32xf32>
    %32 = vector.multi_reduction <add>, %31, %cst_16 [2] : vector<2x32x32xf32> to vector<2x32xf32>
    %33 = vector.shape_cast %32 : vector<2x32xf32> to vector<2x32x1xf32>
    "tpu.trace_start"() <{level = 10 : i32, message = "bqk,bkd->bqd"}> : () -> ()
    %cst_17 = arith.constant dense<0.000000e+00> : vector<2x32x8xf32>
    %34 = tpu.matmul %31, %24, %cst_17 {dimension_numbers = #tpu.dot_dimension_numbers<[2], [1], [1], [2], [0, 0, 0, 1, 1, 2], [0], [0]>} : vector<2x32x32xf32>, vector<2x32x8xf32>, vector<2x32x8xf32> -> vector<2x32x8xf32>
    "tpu.trace_stop"() : () -> ()
    %35 = vector.broadcast %33 : vector<2x32x1xf32> to vector<2x32x8xf32>
    %36 = arith.divf %34, %35 : vector<2x32x8xf32>
    %c0_18 = arith.constant 0 : index
    %c0_19 = arith.constant 0 : index
    %c8 = arith.constant 8 : index
    %37 = vector.load %arg7[%c0_18, %c0_19, %c8] : memref<2x32x32xf32, #tpu.memory_space<vmem>>, vector<2x32x8xf32>
    tpu.vector_store %arg7[%c0_18, %c0_19, %c8], %36 {strides = array<i32>} : memref<2x32x32xf32, #tpu.memory_space<vmem>>, vector<2x32x8xf32>,
    %38 = vector.extract_strided_slice %4 {offsets = [0, 0, 16], sizes = [2, 32, 8], strides = [1, 1, 1]} : vector<2x32x96xf32> to vector<2x32x8xf32>
    %39 = vector.extract_strided_slice %4 {offsets = [0, 0, 48], sizes = [2, 32, 8], strides = [1, 1, 1]} : vector<2x32x96xf32> to vector<2x32x8xf32>
    %40 = vector.extract_strided_slice %4 {offsets = [0, 0, 80], sizes = [2, 32, 8], strides = [1, 1, 1]} : vector<2x32x96xf32> to vector<2x32x8xf32>
    "tpu.trace_start"() <{level = 10 : i32, message = "bqd,bkd->bqk"}> : () -> ()
    %cst_20 = arith.constant dense<0.000000e+00> : vector<2x32x32xf32>
    %41 = tpu.matmul %38, %39, %cst_20 {dimension_numbers = #tpu.dot_dimension_numbers<[2], [2], [1], [1], [0, 0, 0, 1, 1, 1], [0], [0]>} : vector<2x32x8xf32>, vector<2x32x8xf32>, vector<2x32x32xf32> -> vector<2x32x32xf32>
    "tpu.trace_stop"() : () -> ()
    %42 = arith.addf %41, %5 : vector<2x32x32xf32>
    %cst_21 = arith.constant dense<0xFF800000> : vector<2x32xf32>
    %43 = vector.multi_reduction <maximumf>, %42, %cst_21 [2] : vector<2x32x32xf32> to vector<2x32xf32>
    %44 = vector.shape_cast %43 : vector<2x32xf32> to vector<2x32x1xf32>
    %45 = vector.broadcast %44 : vector<2x32x1xf32> to vector<2x32x32xf32>
    %46 = arith.subf %42, %45 : vector<2x32x32xf32>
    %47 = math.exp %46 : vector<2x32x32xf32>
    %cst_22 = arith.constant dense<0.000000e+00> : vector<2x32xf32>
    %48 = vector.multi_reduction <add>, %47, %cst_22 [2] : vector<2x32x32xf32> to vector<2x32xf32>
    %49 = vector.shape_cast %48 : vector<2x32xf32> to vector<2x32x1xf32>
    "tpu.trace_start"() <{level = 10 : i32, message = "bqk,bkd->bqd"}> : () -> ()
    %cst_23 = arith.constant dense<0.000000e+00> : vector<2x32x8xf32>
    %50 = tpu.matmul %47, %40, %cst_23 {dimension_numbers = #tpu.dot_dimension_numbers<[2], [1], [1], [2], [0, 0, 0, 1, 1, 2], [0], [0]>} : vector<2x32x32xf32>, vector<2x32x8xf32>, vector<2x32x8xf32> -> vector<2x32x8xf32>
    "tpu.trace_stop"() : () -> ()
    %51 = vector.broadcast %49 : vector<2x32x1xf32> to vector<2x32x8xf32>
    %52 = arith.divf %50, %51 : vector<2x32x8xf32>
    %c0_24 = arith.constant 0 : index
    %c0_25 = arith.constant 0 : index
    %c16 = arith.constant 16 : index
    %53 = vector.load %arg7[%c0_24, %c0_25, %c16] : memref<2x32x32xf32, #tpu.memory_space<vmem>>, vector<2x32x8xf32>
    tpu.vector_store %arg7[%c0_24, %c0_25, %c16], %52 {strides = array<i32>} : memref<2x32x32xf32, #tpu.memory_space<vmem>>, vector<2x32x8xf32>,
    %54 = vector.extract_strided_slice %4 {offsets = [0, 0, 24], sizes = [2, 32, 8], strides = [1, 1, 1]} : vector<2x32x96xf32> to vector<2x32x8xf32>
    %55 = vector.extract_strided_slice %4 {offsets = [0, 0, 56], sizes = [2, 32, 8], strides = [1, 1, 1]} : vector<2x32x96xf32> to vector<2x32x8xf32>
    %56 = vector.extract_strided_slice %4 {offsets = [0, 0, 88], sizes = [2, 32, 8], strides = [1, 1, 1]} : vector<2x32x96xf32> to vector<2x32x8xf32>
    "tpu.trace_start"() <{level = 10 : i32, message = "bqd,bkd->bqk"}> : () -> ()
    %cst_26 = arith.constant dense<0.000000e+00> : vector<2x32x32xf32>
    %57 = tpu.matmul %54, %55, %cst_26 {dimension_numbers = #tpu.dot_dimension_numbers<[2], [2], [1], [1], [0, 0, 0, 1, 1, 1], [0], [0]>} : vector<2x32x8xf32>, vector<2x32x8xf32>, vector<2x32x32xf32> -> vector<2x32x32xf32>
    "tpu.trace_stop"() : () -> ()
    %58 = arith.addf %57, %5 : vector<2x32x32xf32>
    %cst_27 = arith.constant dense<0xFF800000> : vector<2x32xf32>
    %59 = vector.multi_reduction <maximumf>, %58, %cst_27 [2] : vector<2x32x32xf32> to vector<2x32xf32>
    %60 = vector.shape_cast %59 : vector<2x32xf32> to vector<2x32x1xf32>
    %61 = vector.broadcast %60 : vector<2x32x1xf32> to vector<2x32x32xf32>
    %62 = arith.subf %58, %61 : vector<2x32x32xf32>
    %63 = math.exp %62 : vector<2x32x32xf32>
    %cst_28 = arith.constant dense<0.000000e+00> : vector<2x32xf32>
    %64 = vector.multi_reduction <add>, %63, %cst_28 [2] : vector<2x32x32xf32> to vector<2x32xf32>
    %65 = vector.shape_cast %64 : vector<2x32xf32> to vector<2x32x1xf32>
    "tpu.trace_start"() <{level = 10 : i32, message = "bqk,bkd->bqd"}> : () -> ()
    %cst_29 = arith.constant dense<0.000000e+00> : vector<2x32x8xf32>
    %66 = tpu.matmul %63, %56, %cst_29 {dimension_numbers = #tpu.dot_dimension_numbers<[2], [1], [1], [2], [0, 0, 0, 1, 1, 2], [0], [0]>} : vector<2x32x32xf32>, vector<2x32x8xf32>, vector<2x32x8xf32> -> vector<2x32x8xf32>
    "tpu.trace_stop"() : () -> ()
    %67 = vector.broadcast %65 : vector<2x32x1xf32> to vector<2x32x8xf32>
    %68 = arith.divf %66, %67 : vector<2x32x8xf32>
    %c0_30 = arith.constant 0 : index
    %c0_31 = arith.constant 0 : index
    %c24 = arith.constant 24 : index
    %69 = vector.load %arg7[%c0_30, %c0_31, %c24] : memref<2x32x32xf32, #tpu.memory_space<vmem>>, vector<2x32x8xf32>
    tpu.vector_store %arg7[%c0_30, %c0_31, %c24], %68 {strides = array<i32>} : memref<2x32x32xf32, #tpu.memory_space<vmem>>, vector<2x32x8xf32>,
    %c0_32 = arith.constant 0 : index
    %c0_33 = arith.constant 0 : index
    %c0_34 = arith.constant 0 : index
    %70 = vector.load %arg7[%c0_32, %c0_33, %c0_34] : memref<2x32x32xf32, #tpu.memory_space<vmem>>, vector<2x32x32xf32>
    %71 = vector.shape_cast %70 : vector<2x32x32xf32> to vector<64x32xf32>
    %c0_35 = arith.constant 0 : index
    %c0_36 = arith.constant 0 : index
    %72 = vector.load %arg4[%c0_35, %c0_36] : memref<32x32xf32, #tpu.memory_space<vmem>>, vector<32x32xf32>
    %cst_37 = arith.constant dense<0.000000e+00> : vector<64x32xf32>
    %73 = tpu.matmul %71, %72, %cst_37 {dimension_numbers = #tpu.dot_dimension_numbers<[1], [0], [0], [1], [0, 0, 1, 1], [], []>} : vector<64x32xf32>, vector<32x32xf32>, vector<64x32xf32> -> vector<64x32xf32>
    %c0_38 = arith.constant 0 : index
    %c0_39 = arith.constant 0 : index
    %74 = vector.load %arg5[%c0_38, %c0_39] : memref<1x32xf32, #tpu.memory_space<vmem>>, vector<1x32xf32>
    %75 = vector.broadcast %74 : vector<1x32xf32> to vector<64x32xf32>
    %76 = arith.addf %73, %75 : vector<64x32xf32>
    %77 = vector.shape_cast %76 : vector<64x32xf32> to vector<2x32x32xf32>
    %c0_40 = arith.constant 0 : index
    %c0_41 = arith.constant 0 : index
    %c0_42 = arith.constant 0 : index
    %78 = vector.load %arg6[%c0_40, %c0_41, %c0_42] : memref<2x32x32xf32, #tpu.memory_space<vmem>>, vector<2x32x32xf32>
    tpu.vector_store %arg6[%c0_40, %c0_41, %c0_42], %77 {strides = array<i32>} : memref<2x32x32xf32, #tpu.memory_space<vmem>>, vector<2x32x32xf32>,
    return
  }
  func.func @transform_0(%arg0: i32) -> (i32, i32, i32) {
    %c0_i32 = arith.constant 0 : i32
    %c0_i32_0 = arith.constant 0 : i32
    %c0_i32_1 = arith.constant 0 : i32
    return %arg0, %c0_i32, %c0_i32_0 : i32, i32, i32
  }
  func.func @transform_1(%arg0: i32) -> (i32, i32, i32) {
    %c0_i32 = arith.constant 0 : i32
    %c0_i32_0 = arith.constant 0 : i32
    %c0_i32_1 = arith.constant 0 : i32
    %c0_i32_2 = arith.constant 0 : i32
    return %c0_i32, %c0_i32_0, %c0_i32_1 : i32, i32, i32
  }
  func.func @transform_2(%arg0: i32) -> (i32, i32) {
    %c0_i32 = arith.constant 0 : i32
    %c0_i32_0 = arith.constant 0 : i32
    %c0_i32_1 = arith.constant 0 : i32
    return %c0_i32, %c0_i32_0 : i32, i32
  }
  func.func @transform_3(%arg0: i32) -> (i32, i32) {
    %c0_i32 = arith.constant 0 : i32
    %c0_i32_0 = arith.constant 0 : i32
    %c0_i32_1 = arith.constant 0 : i32
    return %c0_i32, %c0_i32_0 : i32, i32
  }
  func.func @transform_4(%arg0: i32) -> (i32, i32) {
    %c0_i32 = arith.constant 0 : i32
    %c0_i32_0 = arith.constant 0 : i32
    %c0_i32_1 = arith.constant 0 : i32
    return %c0_i32, %c0_i32_0 : i32, i32
  }
  func.func @transform_5(%arg0: i32) -> (i32, i32, i32) {
    %c0_i32 = arith.constant 0 : i32
    %c0_i32_0 = arith.constant 0 : i32
    %c0_i32_1 = arith.constant 0 : i32
    return %arg0, %c0_i32, %c0_i32_0 : i32, i32, i32
  }
}

module attributes {stable_mosaic.version = 11 : i64} {
  func.func @kernel(%arg0: i32, %arg1: memref<2x32x32xf32, #tpu.memory_space<vmem>>, %arg2: memref<2x32x32xf32, #tpu.memory_space<vmem>>, %arg3: memref<32x96xf32, #tpu.memory_space<vmem>>, %arg4: memref<32x32xf32, #tpu.memory_space<vmem>>, %arg5: memref<1x32xf32, #tpu.memory_space<vmem>>, %arg6: memref<2x32x32xf32, #tpu.memory_space<vmem>>, %arg7: memref<2x32x32xf32, #tpu.memory_space<vmem>>) attributes {dimension_semantics = [#tpu.dimension_semantics<parallel>], iteration_bounds = array<i64: 2>, scalar_prefetch = 0 : i64, scratch_operands = 1 : i64, tpu.core_type = #tpu.core_type<tc>, window_params = [{transform_indices = @transform_0, window_bounds = array<i64: 2, 32, 32>}, {pipeline_mode = #tpu.pipeline_mode<synchronous>, transform_indices = @transform_1, window_bounds = array<i64: 2, 32, 32>}, {pipeline_mode = #tpu.pipeline_mode<synchronous>, transform_indices = @transform_2, window_bounds = array<i64: 32, 96>}, {pipeline_mode = #tpu.pipeline_mode<synchronous>, transform_indices = @transform_3, window_bounds = array<i64: 32, 32>}, {pipeline_mode = #tpu.pipeline_mode<synchronous>, transform_indices = @transform_4, window_bounds = array<i64: 1, 32>}, {transform_indices = @transform_5, window_bounds = array<i64: 2, 32, 32>}]} {
    %c0 = arith.constant 0 : index
    %c0_0 = arith.constant 0 : index
    %c0_1 = arith.constant 0 : index
    %0 = vector.load %arg1[%c0, %c0_0, %c0_1] : memref<2x32x32xf32, #tpu.memory_space<vmem>>, vector<2x32x32xf32>
    %1 = vector.shape_cast %0 : vector<2x32x32xf32> to vector<64x32xf32>
    %c0_2 = arith.constant 0 : index
    %c0_3 = arith.constant 0 : index
    %2 = vector.load %arg3[%c0_2, %c0_3] : memref<32x96xf32, #tpu.memory_space<vmem>>, vector<32x96xf32>
    %cst = arith.constant dense<0.000000e+00> : vector<64x96xf32>
    %3 = tpu.matmul %1, %2, %cst {dimension_numbers = #tpu.dot_dimension_numbers<[1], [0], [0], [1], [0, 0, 1, 1], [], []>} : vector<64x32xf32>, vector<32x96xf32>, vector<64x96xf32> -> vector<64x96xf32>
    %4 = vector.shape_cast %3 : vector<64x96xf32> to vector<2x32x96xf32>
    %c0_4 = arith.constant 0 : index
    %c0_5 = arith.constant 0 : index
    %c0_6 = arith.constant 0 : index
    %5 = vector.load %arg2[%c0_4, %c0_5, %c0_6] : memref<2x32x32xf32, #tpu.memory_space<vmem>>, vector<2x32x32xf32>
    %6 = vector.extract_strided_slice %4 {offsets = [0, 0, 0], sizes = [2, 32, 8], strides = [1, 1, 1]} : vector<2x32x96xf32> to vector<2x32x8xf32>
    %7 = vector.extract_strided_slice %4 {offsets = [0, 0, 32], sizes = [2, 32, 8], strides = [1, 1, 1]} : vector<2x32x96xf32> to vector<2x32x8xf32>
    %8 = vector.extract_strided_slice %4 {offsets = [0, 0, 64], sizes = [2, 32, 8], strides = [1, 1, 1]} : vector<2x32x96xf32> to vector<2x32x8xf32>
    "tpu.trace_start"() <{level = 10 : i32, message = "bqd,bkd->bqk"}> : () -> ()
    %cst_7 = arith.constant dense<0.000000e+00> : vector<2x32x32xf32>
    %9 = tpu.matmul %6, %7, %cst_7 {dimension_numbers = #tpu.dot_dimension_numbers<[2], [2], [1], [1], [0, 0, 0, 1, 1, 1], [0], [0]>} : vector<2x32x8xf32>, vector<2x32x8xf32>, vector<2x32x32xf32> -> vector<2x32x32xf32>
    "tpu.trace_stop"() : () -> ()
    %10 = arith.addf %9, %5 : vector<2x32x32xf32>
    %cst_8 = arith.constant dense<0xFF800000> : vector<2x32xf32>
    %11 = vector.multi_reduction <maximumf>, %10, %cst_8 [2] : vector<2x32x32xf32> to vector<2x32xf32>
    %12 = vector.shape_cast %11 : vector<2x32xf32> to vector<2x32x1xf32>
    %13 = vector.broadcast %12 : vector<2x32x1xf32> to vector<2x32x32xf32>
    %14 = arith.subf %10, %13 : vector<2x32x32xf32>
    %15 = math.exp %14 : vector<2x32x32xf32>
    %cst_9 = arith.constant dense<0.000000e+00> : vector<2x32xf32>
    %16 = vector.multi_reduction <add>, %15, %cst_9 [2] : vector<2x32x32xf32> to vector<2x32xf32>
    %17 = vector.shape_cast %16 : vector<2x32xf32> to vector<2x32x1xf32>
    "tpu.trace_start"() <{level = 10 : i32, message = "bqk,bkd->bqd"}> : () -> ()
    %cst_10 = arith.constant dense<0.000000e+00> : vector<2x32x8xf32>
    %18 = tpu.matmul %15, %8, %cst_10 {dimension_numbers = #tpu.dot_dimension_numbers<[2], [1], [1], [2], [0, 0, 0, 1, 1, 2], [0], [0]>} : vector<2x32x32xf32>, vector<2x32x8xf32>, vector<2x32x8xf32> -> vector<2x32x8xf32>
    "tpu.trace_stop"() : () -> ()
    %19 = vector.broadcast %17 : vector<2x32x1xf32> to vector<2x32x8xf32>
    %20 = arith.divf %18, %19 : vector<2x32x8xf32>
    %c0_11 = arith.constant 0 : index
    %c0_12 = arith.constant 0 : index
    %c0_13 = arith.constant 0 : index
    %21 = vector.load %arg7[%c0_11, %c0_12, %c0_13] : memref<2x32x32xf32, #tpu.memory_space<vmem>>, vector<2x32x8xf32>
    tpu.vector_store %arg7[%c0_11, %c0_12, %c0_13], %20 {strides = array<i32>} : memref<2x32x32xf32, #tpu.memory_space<vmem>>, vector<2x32x8xf32>,
    %22 = vector.extract_strided_slice %4 {offsets = [0, 0, 8], sizes = [2, 32, 8], strides = [1, 1, 1]} : vector<2x32x96xf32> to vector<2x32x8xf32>
    %23 = vector.extract_strided_slice %4 {offsets = [0, 0, 40], sizes = [2, 32, 8], strides = [1, 1, 1]} : vector<2x32x96xf32> to vector<2x32x8xf32>
    %24 = vector.extract_strided_slice %4 {offsets = [0, 0, 72], sizes = [2, 32, 8], strides = [1, 1, 1]} : vector<2x32x96xf32> to vector<2x32x8xf32>
    "tpu.trace_start"() <{level = 10 : i32, message = "bqd,bkd->bqk"}> : () -> ()
    %cst_14 = arith.constant dense<0.000000e+00> : vector<2x32x32xf32>
    %25 = tpu.matmul %22, %23, %cst_14 {dimension_numbers = #tpu.dot_dimension_numbers<[2], [2], [1], [1], [0, 0, 0, 1, 1, 1], [0], [0]>} : vector<2x32x8xf32>, vector<2x32x8xf32>, vector<2x32x32xf32> -> vector<2x32x32xf32>
    "tpu.trace_stop"() : () -> ()
    %26 = arith.addf %25, %5 : vector<2x32x32xf32>
    %cst_15 = arith.constant dense<0xFF800000> : vector<2x32xf32>
    %27 = vector.multi_reduction <maximumf>, %26, %cst_15 [2] : vector<2x32x32xf32> to vector<2x32xf32>
    %28 = vector.shape_cast %27 : vector<2x32xf32> to vector<2x32x1xf32>
    %29 = vector.broadcast %28 : vector<2x32x1xf32> to vector<2x32x32xf32>
    %30 = arith.subf %26, %29 : vector<2x32x32xf32>
    %31 = math.exp %30 : vector<2x32x32xf32>
    %cst_16 = arith.constant dense<0.000000e+00> : vector<2x32xf32>
    %32 = vector.multi_reduction <add>, %31, %cst_16 [2] : vector<2x32x32xf32> to vector<2x32xf32>
    %33 = vector.shape_cast %32 : vector<2x32xf32> to vector<2x32x1xf32>
    "tpu.trace_start"() <{level = 10 : i32, message = "bqk,bkd->bqd"}> : () -> ()
    %cst_17 = arith.constant dense<0.000000e+00> : vector<2x32x8xf32>
    %34 = tpu.matmul %31, %24, %cst_17 {dimension_numbers = #tpu.dot_dimension_numbers<[2], [1], [1], [2], [0, 0, 0, 1, 1, 2], [0], [0]>} : vector<2x32x32xf32>, vector<2x32x8xf32>, vector<2x32x8xf32> -> vector<2x32x8xf32>
    "tpu.trace_stop"() : () -> ()
    %35 = vector.broadcast %33 : vector<2x32x1xf32> to vector<2x32x8xf32>
    %36 = arith.divf %34, %35 : vector<2x32x8xf32>
    %c0_18 = arith.constant 0 : index
    %c0_19 = arith.constant 0 : index
    %c8 = arith.constant 8 : index
    %37 = vector.load %arg7[%c0_18, %c0_19, %c8] : memref<2x32x32xf32, #tpu.memory_space<vmem>>, vector<2x32x8xf32>
    tpu.vector_store %arg7[%c0_18, %c0_19, %c8], %36 {strides = array<i32>} : memref<2x32x32xf32, #tpu.memory_space<vmem>>, vector<2x32x8xf32>,
    %38 = vector.extract_strided_slice %4 {offsets = [0, 0, 16], sizes = [2, 32, 8], strides = [1, 1, 1]} : vector<2x32x96xf32> to vector<2x32x8xf32>
    %39 = vector.extract_strided_slice %4 {offsets = [0, 0, 48], sizes = [2, 32, 8], strides = [1, 1, 1]} : vector<2x32x96xf32> to vector<2x32x8xf32>
    %40 = vector.extract_strided_slice %4 {offsets = [0, 0, 80], sizes = [2, 32, 8], strides = [1, 1, 1]} : vector<2x32x96xf32> to vector<2x32x8xf32>
    "tpu.trace_start"() <{level = 10 : i32, message = "bqd,bkd->bqk"}> : () -> ()
    %cst_20 = arith.constant dense<0.000000e+00> : vector<2x32x32xf32>
    %41 = tpu.matmul %38, %39, %cst_20 {dimension_numbers = #tpu.dot_dimension_numbers<[2], [2], [1], [1], [0, 0, 0, 1, 1, 1], [0], [0]>} : vector<2x32x8xf32>, vector<2x32x8xf32>, vector<2x32x32xf32> -> vector<2x32x32xf32>
    "tpu.trace_stop"() : () -> ()
    %42 = arith.addf %41, %5 : vector<2x32x32xf32>
    %cst_21 = arith.constant dense<0xFF800000> : vector<2x32xf32>
    %43 = vector.multi_reduction <maximumf>, %42, %cst_21 [2] : vector<2x32x32xf32> to vector<2x32xf32>
    %44 = vector.shape_cast %43 : vector<2x32xf32> to vector<2x32x1xf32>
    %45 = vector.broadcast %44 : vector<2x32x1xf32> to vector<2x32x32xf32>
    %46 = arith.subf %42, %45 : vector<2x32x32xf32>
    %47 = math.exp %46 : vector<2x32x32xf32>
    %cst_22 = arith.constant dense<0.000000e+00> : vector<2x32xf32>
    %48 = vector.multi_reduction <add>, %47, %cst_22 [2] : vector<2x32x32xf32> to vector<2x32xf32>
    %49 = vector.shape_cast %48 : vector<2x32xf32> to vector<2x32x1xf32>
    "tpu.trace_start"() <{level = 10 : i32, message = "bqk,bkd->bqd"}> : () -> ()
    %cst_23 = arith.constant dense<0.000000e+00> : vector<2x32x8xf32>
    %50 = tpu.matmul %47, %40, %cst_23 {dimension_numbers = #tpu.dot_dimension_numbers<[2], [1], [1], [2], [0, 0, 0, 1, 1, 2], [0], [0]>} : vector<2x32x32xf32>, vector<2x32x8xf32>, vector<2x32x8xf32> -> vector<2x32x8xf32>
    "tpu.trace_stop"() : () -> ()
    %51 = vector.broadcast %49 : vector<2x32x1xf32> to vector<2x32x8xf32>
    %52 = arith.divf %50, %51 : vector<2x32x8xf32>
    %c0_24 = arith.constant 0 : index
    %c0_25 = arith.constant 0 : index
    %c16 = arith.constant 16 : index
    %53 = vector.load %arg7[%c0_24, %c0_25, %c16] : memref<2x32x32xf32, #tpu.memory_space<vmem>>, vector<2x32x8xf32>
    tpu.vector_store %arg7[%c0_24, %c0_25, %c16], %52 {strides = array<i32>} : memref<2x32x32xf32, #tpu.memory_space<vmem>>, vector<2x32x8xf32>,
    %54 = vector.extract_strided_slice %4 {offsets = [0, 0, 24], sizes = [2, 32, 8], strides = [1, 1, 1]} : vector<2x32x96xf32> to vector<2x32x8xf32>
    %55 = vector.extract_strided_slice %4 {offsets = [0, 0, 56], sizes = [2, 32, 8], strides = [1, 1, 1]} : vector<2x32x96xf32> to vector<2x32x8xf32>
    %56 = vector.extract_strided_slice %4 {offsets = [0, 0, 88], sizes = [2, 32, 8], strides = [1, 1, 1]} : vector<2x32x96xf32> to vector<2x32x8xf32>
    "tpu.trace_start"() <{level = 10 : i32, message = "bqd,bkd->bqk"}> : () -> ()
    %cst_26 = arith.constant dense<0.000000e+00> : vector<2x32x32xf32>
    %57 = tpu.matmul %54, %55, %cst_26 {dimension_numbers = #tpu.dot_dimension_numbers<[2], [2], [1], [1], [0, 0, 0, 1, 1, 1], [0], [0]>} : vector<2x32x8xf32>, vector<2x32x8xf32>, vector<2x32x32xf32> -> vector<2x32x32xf32>
    "tpu.trace_stop"() : () -> ()
    %58 = arith.addf %57, %5 : vector<2x32x32xf32>
    %cst_27 = arith.constant dense<0xFF800000> : vector<2x32xf32>
    %59 = vector.multi_reduction <maximumf>, %58, %cst_27 [2] : vector<2x32x32xf32> to vector<2x32xf32>
    %60 = vector.shape_cast %59 : vector<2x32xf32> to vector<2x32x1xf32>
    %61 = vector.broadcast %60 : vector<2x32x1xf32> to vector<2x32x32xf32>
    %62 = arith.subf %58, %61 : vector<2x32x32xf32>
    %63 = math.exp %62 : vector<2x32x32xf32>
    %cst_28 = arith.constant dense<0.000000e+00> : vector<2x32xf32>
    %64 = vector.multi_reduction <add>, %63, %cst_28 [2] : vector<2x32x32xf32> to vector<2x32xf32>
    %65 = vector.shape_cast %64 : vector<2x32xf32> to vector<2x32x1xf32>
    "tpu.trace_start"() <{level = 10 : i32, message = "bqk,bkd->bqd"}> : () -> ()
    %cst_29 = arith.constant dense<0.000000e+00> : vector<2x32x8xf32>
    %66 = tpu.matmul %63, %56, %cst_29 {dimension_numbers = #tpu.dot_dimension_numbers<[2], [1], [1], [2], [0, 0, 0, 1, 1, 2], [0], [0]>} : vector<2x32x32xf32>, vector<2x32x8xf32>, vector<2x32x8xf32> -> vector<2x32x8xf32>
    "tpu.trace_stop"() : () -> ()
    %67 = vector.broadcast %65 : vector<2x32x1xf32> to vector<2x32x8xf32>
    %68 = arith.divf %66, %67 : vector<2x32x8xf32>
    %c0_30 = arith.constant 0 : index
    %c0_31 = arith.constant 0 : index
    %c24 = arith.constant 24 : index
    %69 = vector.load %arg7[%c0_30, %c0_31, %c24] : memref<2x32x32xf32, #tpu.memory_space<vmem>>, vector<2x32x8xf32>
    tpu.vector_store %arg7[%c0_30, %c0_31, %c24], %68 {strides = array<i32>} : memref<2x32x32xf32, #tpu.memory_space<vmem>>, vector<2x32x8xf32>,
    %c0_32 = arith.constant 0 : index
    %c0_33 = arith.constant 0 : index
    %c0_34 = arith.constant 0 : index
    %70 = vector.load %arg7[%c0_32, %c0_33, %c0_34] : memref<2x32x32xf32, #tpu.memory_space<vmem>>, vector<2x32x32xf32>
    %71 = vector.shape_cast %70 : vector<2x32x32xf32> to vector<64x32xf32>
    %c0_35 = arith.constant 0 : index
    %c0_36 = arith.constant 0 : index
    %72 = vector.load %arg4[%c0_35, %c0_36] : memref<32x32xf32, #tpu.memory_space<vmem>>, vector<32x32xf32>
    %cst_37 = arith.constant dense<0.000000e+00> : vector<64x32xf32>
    %73 = tpu.matmul %71, %72, %cst_37 {dimension_numbers = #tpu.dot_dimension_numbers<[1], [0], [0], [1], [0, 0, 1, 1], [], []>} : vector<64x32xf32>, vector<32x32xf32>, vector<64x32xf32> -> vector<64x32xf32>
    %c0_38 = arith.constant 0 : index
    %c0_39 = arith.constant 0 : index
    %74 = vector.load %arg5[%c0_38, %c0_39] : memref<1x32xf32, #tpu.memory_space<vmem>>, vector<1x32xf32>
    %75 = vector.broadcast %74 : vector<1x32xf32> to vector<64x32xf32>
    %76 = arith.addf %73, %75 : vector<64x32xf32>
    %77 = vector.shape_cast %76 : vector<64x32xf32> to vector<2x32x32xf32>
    %c0_40 = arith.constant 0 : index
    %c0_41 = arith.constant 0 : index
    %c0_42 = arith.constant 0 : index
    %78 = vector.load %arg6[%c0_40, %c0_41, %c0_42] : memref<2x32x32xf32, #tpu.memory_space<vmem>>, vector<2x32x32xf32>
    tpu.vector_store %arg6[%c0_40, %c0_41, %c0_42], %77 {strides = array<i32>} : memref<2x32x32xf32, #tpu.memory_space<vmem>>, vector<2x32x32xf32>,
    return
  }
  func.func @transform_0(%arg0: i32) -> (i32, i32, i32) {
    %c0_i32 = arith.constant 0 : i32
    %c0_i32_0 = arith.constant 0 : i32
    %c0_i32_1 = arith.constant 0 : i32
    return %arg0, %c0_i32, %c0_i32_0 : i32, i32, i32
  }
  func.func @transform_1(%arg0: i32) -> (i32, i32, i32) {
    %c0_i32 = arith.constant 0 : i32
    %c0_i32_0 = arith.constant 0 : i32
    %c0_i32_1 = arith.constant 0 : i32
    %c0_i32_2 = arith.constant 0 : i32
    return %c0_i32, %c0_i32_0, %c0_i32_1 : i32, i32, i32
  }
  func.func @transform_2(%arg0: i32) -> (i32, i32) {
    %c0_i32 = arith.constant 0 : i32
    %c0_i32_0 = arith.constant 0 : i32
    %c0_i32_1 = arith.constant 0 : i32
    return %c0_i32, %c0_i32_0 : i32, i32
  }
  func.func @transform_3(%arg0: i32) -> (i32, i32) {
    %c0_i32 = arith.constant 0 : i32
    %c0_i32_0 = arith.constant 0 : i32
    %c0_i32_1 = arith.constant 0 : i32
    return %c0_i32, %c0_i32_0 : i32, i32
  }
  func.func @transform_4(%arg0: i32) -> (i32, i32) {
    %c0_i32 = arith.constant 0 : i32
    %c0_i32_0 = arith.constant 0 : i32
    %c0_i32_1 = arith.constant 0 : i32
    return %c0_i32, %c0_i32_0 : i32, i32
  }
  func.func @transform_5(%arg0: i32) -> (i32, i32, i32) {
    %c0_i32 = arith.constant 0 : i32
    %c0_i32_0 = arith.constant 0 : i32
    %c0_i32_1 = arith.constant 0 : i32
    return %arg0, %c0_i32, %c0_i32_0 : i32, i32, i32
  }
}

</mosaic_0001>

<llo_original>
// kernel: tpu_custom_call.1
$region0: #{tpu_custom_call.1}
  #allocation0 [shape = 'u32[]', space=smem, size = 0x4, offset = 0x4, fixed_abs, tag = 'smem constant byte address 0x4 - core index']
  #allocation1 [shape = 'u32[72,128]{1,0:T(1,128)}', space=vmem, size = 0x9000, scoped, tag = 'internal scratch']
  #allocation2 [shape = 'f32[2,32,32]{2,1,0:T(8,128)}', space=vmem, size = 0x8000, scoped, tag = 'scratch operand']
  %s0 = inlined_call_operand.hbm [shape: f32[4,32,32], index: 0, kind: input, shape index: {}]
  %s1 = inlined_call_operand.hbm [shape: f32[2,32,32], index: 1, kind: input, shape index: {}]
  %s2 = inlined_call_operand.hbm [shape: f32[32,96], index: 2, kind: input, shape index: {}]
  %s3 = inlined_call_operand.hbm [shape: f32[32,32], index: 3, kind: input, shape index: {}]
  %s4 = inlined_call_operand.vmem [shape: f32[1,32], index: 4, kind: input, shape index: {}]
  %s5 = inlined_call_operand.hbm [shape: f32[4,32,32], index: 5, kind: output, shape index: {}]
  %s6 = sld [smem:[#allocation0]]
  $region69: #{tpu_custom_call.1} parent=0
    _
  %s8 = ssub.s32 1, %s6
  %s9 = scalar_select 0, %s8, %s6
  $region1: #{tpu_custom_call.1} parent=0
    #allocation3 [shape = 'u8[65536]{0}', space=vmem, size = 0x10000, scoped, tag = 'input window, operand 0']
    #allocation4 [shape = 's32[2]{0}', space=sflag, size = 0x8, scoped, tag = 'scoped memory for tpu_custom_call.1']
    #allocation5 [shape = 's32[2]{0}', space=sflag, size = 0x8, scoped, tag = 'scoped memory for tpu_custom_call.1']
    #allocation6 [shape = 'u8[32768]{0}', space=vmem, size = 0x8000, scoped, tag = 'input window, operand 1, single buffered']
    #allocation7 [shape = 's32[1]{0}', space=sflag, size = 0x4, scoped, tag = 'scoped memory for tpu_custom_call.1']
    #allocation8 [shape = 'u8[16384]{0}', space=vmem, size = 0x4000, scoped, tag = 'input window, operand 2, single buffered']
    #allocation9 [shape = 'u8[16384]{0}', space=vmem, size = 0x4000, scoped, tag = 'input window, operand 3, single buffered']
    #allocation10 [shape = 's32[1]{0}', space=sflag, size = 0x4, scoped, tag = 'scoped memory for tpu_custom_call.1']
    #allocation11 [shape = 'u8[65536]{0}', space=vmem, size = 0x10000, scoped, tag = 'output window, operand 0']
    %10 = vsyncpa [#allocation4], 0
    %s11 = scalar_lea.sflag [#allocation4], 1
    %12 = vsyncpa %s11, 0
    %13 = vsyncpa [#allocation7], 0
    %14 = vsyncpa [#allocation10], 0
    %15 = vsyncpa [#allocation5], 0
    %s16 = scalar_lea.sflag [#allocation5], 1
    %17 = vsyncpa %s16, 0
    loop: start=0, step=1, limit=4
    $region2: #{tpu_custom_call.1} parent=1 // loop_pre_header
      _
    $region3: #{tpu_custom_call.1} parent=1 // loop_header
      %s19 = sphi 0, %s23
      %p20 = scmp.ge.s32.totalorder %s19, 4
      %s29 = sphi 0, %s31
      %s32 = sphi 0, %s29
      %s33 = sphi 0, %s32
      %s49 = sphi 0, %s33
      %s53 = sphi 0, %s53
      %s55 = sphi 0, %s53
      %s56 = sphi 0, %s55
      %s70 = sphi 0, %s56
      %s74 = sphi 0, %s74
      %s76 = sphi 0, %s74
      %s77 = sphi 0, %s76
      %s91 = sphi 0, %s77
      %s95 = sphi 0, %s95
      %s97 = sphi 0, %s95
      %s98 = sphi 0, %s97
      %s112 = sphi 0, %s98
      %s116 = sphi 0, %s116
      %s118 = sphi 0, %s116
      %s119 = sphi 0, %s118
      %s133 = sphi 0, %s119
      %s139 = sphi 0, %s141
      %s142 = sphi 0, %s139
      %s143 = sphi 0, %s142
      %s159 = sphi 0, %s143
    $region4: #{tpu_custom_call.1} parent=1 // loop_header_branch
      %22 = sbr.rel (%p20) target = $region8
    $region5: #{tpu_custom_call.1} parent=1 // loop_body
      %s24 = ssub.s32 %s19, 1
      %s25 = ssub.s32 %s19, 2
      %s26 = sadd.s32 %s19, 1
      %s27 = ssub.s32 %s19, %s26
      %p28 = scmp.eq.s32.totalorder %s27, 0
      %s30 = sadd.s32 %s29, 1
      %s31 = scalar_select %p28, %s29, %s30
      %p34 = pneg %p28
      %p35 = scmp.eq.s32.totalorder %s19, 1
      %p36 = por %p34, %p35
      %p37 = scmp.ne.s32.totalorder %s29, %s32
      %p38 = scmp.eq.s32.totalorder %s19, 0
      %p39 = por %p37, %p38
      %p40 = scmp.ne.s32.totalorder %s29, %s32
      %p41 = scmp.eq.s32.totalorder %s24, 1
      %p42 = por %p40, %p41
      %p43 = scmp.ne.s32.totalorder %s32, %s33
      %p44 = scmp.eq.s32.totalorder %s24, 0
      %p45 = por %p43, %p44
      %p46 = scmp.ne.s32.totalorder %s32, %s33
      %p47 = scmp.eq.s32.totalorder %s25, 1
      %p48 = por %p46, %p47
      %p50 = scmp.ne.s32.totalorder %s33, %s49
      %p51 = scmp.eq.s32.totalorder %s25, 0
      %p52 = por %p50, %p51
      %s54 = sadd.s32 %s53, 1
      %p57 = scmp.eq.s32.totalorder %s19, 1
      %p58 = scmp.ne.s32.totalorder %s53, %s55
      %p59 = scmp.eq.s32.totalorder %s19, 0
      %p60 = por %p58, %p59
      %p61 = scmp.ne.s32.totalorder %s53, %s55
      %p62 = scmp.eq.s32.totalorder %s24, 1
      %p63 = por %p61, %p62
      %p64 = scmp.ne.s32.totalorder %s55, %s56
      %p65 = scmp.eq.s32.totalorder %s24, 0
      %p66 = por %p64, %p65
      %p67 = scmp.ne.s32.totalorder %s55, %s56
      %p68 = scmp.eq.s32.totalorder %s25, 1
      %p69 = por %p67, %p68
      %p71 = scmp.ne.s32.totalorder %s56, %s70
      %p72 = scmp.eq.s32.totalorder %s25, 0
      %p73 = por %p71, %p72
      %s75 = sadd.s32 %s74, 1
      %p78 = scmp.eq.s32.totalorder %s19, 1
      %p79 = scmp.ne.s32.totalorder %s74, %s76
      %p80 = scmp.eq.s32.totalorder %s19, 0
      %p81 = por %p79, %p80
      %p82 = scmp.ne.s32.totalorder %s74, %s76
      %p83 = scmp.eq.s32.totalorder %s24, 1
      %p84 = por %p82, %p83
      %p85 = scmp.ne.s32.totalorder %s76, %s77
      %p86 = scmp.eq.s32.totalorder %s24, 0
      %p87 = por %p85, %p86
      %p88 = scmp.ne.s32.totalorder %s76, %s77
      %p89 = scmp.eq.s32.totalorder %s25, 1
      %p90 = por %p88, %p89
      %p92 = scmp.ne.s32.totalorder %s77, %s91
      %p93 = scmp.eq.s32.totalorder %s25, 0
      %p94 = por %p92, %p93
      %s96 = sadd.s32 %s95, 1
      %p99 = scmp.eq.s32.totalorder %s19, 1
      %p100 = scmp.ne.s32.totalorder %s95, %s97
      %p101 = scmp.eq.s32.totalorder %s19, 0
      %p102 = por %p100, %p101
      %p103 = scmp.ne.s32.totalorder %s95, %s97
      %p104 = scmp.eq.s32.totalorder %s24, 1
      %p105 = por %p103, %p104
      %p106 = scmp.ne.s32.totalorder %s97, %s98
      %p107 = scmp.eq.s32.totalorder %s24, 0
      %p108 = por %p106, %p107
      %p109 = scmp.ne.s32.totalorder %s97, %s98
      %p110 = scmp.eq.s32.totalorder %s25, 1
      %p111 = por %p109, %p110
      %p113 = scmp.ne.s32.totalorder %s98, %s112
      %p114 = scmp.eq.s32.totalorder %s25, 0
      %p115 = por %p113, %p114
      %s117 = sadd.s32 %s116, 1
      %p120 = scmp.eq.s32.totalorder %s19, 1
      %p121 = scmp.ne.s32.totalorder %s116, %s118
      %p122 = scmp.eq.s32.totalorder %s19, 0
      %p123 = por %p121, %p122
      %p124 = scmp.ne.s32.totalorder %s116, %s118
      %p125 = scmp.eq.s32.totalorder %s24, 1
      %p126 = por %p124, %p125
      %p127 = scmp.ne.s32.totalorder %s118, %s119
      %p128 = scmp.eq.s32.totalorder %s24, 0
      %p129 = por %p127, %p128
      %p130 = scmp.ne.s32.totalorder %s118, %s119
      %p131 = scmp.eq.s32.totalorder %s25, 1
      %p132 = por %p130, %p131
      %p134 = scmp.ne.s32.totalorder %s119, %s133
      %p135 = scmp.eq.s32.totalorder %s25, 0
      %p136 = por %p134, %p135
      %s137 = ssub.s32 %s19, %s26
      %p138 = scmp.eq.s32.totalorder %s137, 0
      %s140 = sadd.s32 %s139, 1
      %s141 = scalar_select %p138, %s139, %s140
      %p144 = pneg %p138
      %p145 = scmp.eq.s32.totalorder %s19, 1
      %p146 = por %p144, %p145
      %p147 = scmp.ne.s32.totalorder %s139, %s142
      %p148 = scmp.eq.s32.totalorder %s19, 0
      %p149 = por %p147, %p148
      %p150 = scmp.ne.s32.totalorder %s139, %s142
      %p151 = scmp.eq.s32.totalorder %s24, 1
      %p152 = por %p150, %p151
      %p153 = scmp.ne.s32.totalorder %s142, %s143
      %p154 = scmp.eq.s32.totalorder %s24, 0
      %p155 = por %p153, %p154
      %p156 = scmp.ne.s32.totalorder %s142, %s143
      %p157 = scmp.eq.s32.totalorder %s25, 1
      %p158 = por %p156, %p157
      %p160 = scmp.ne.s32.totalorder %s143, %s159
      %p161 = scmp.eq.s32.totalorder %s25, 0
      %p162 = por %p160, %p161
      %p163 = scmp.le.s32.totalorder 1, %s19
      %p164 = scmp.lt.s32.totalorder %s19, 3
      %p165 = pnand %p163, %p164
      %p166 = pneg %p165
      // Predicated region
      $region9: #{tpu_custom_call.1} parent=5 // pred_check
        _
      $region10: #{tpu_custom_call.1} parent=5 // pred_check_branch
        %168 = sbr.rel (%p165) target = $region12
      $region11: #{tpu_custom_call.1} parent=5 // pred_region
        %s169 = ssub.s32 %s19, 1
        // Predicated region
        $region13: #{tpu_custom_call.1} parent=11 // pred_check
          %p170 = pneg %p66
        $region14: #{tpu_custom_call.1} parent=11 // pred_check_branch
          %172 = sbr.rel (%p170) target = $region16
        $region15: #{tpu_custom_call.1} parent=11 // pred_region
          %174 = vsyncadd [#allocation7], 0
          %s175 = sshll.u32 %s1, 4
          %s176 = int_to_ptr.hbm [resolvable:$true] %s175
          %s177 = sshll.u32 [#allocation6], 4
          %s178 = int_to_ptr.vmem [resolvable:$true] %s177
          %183 = dma.hbm_to_vmem [thread:$0]  %s176, 1024, %s178, [#allocation7], 128, 128, 8
        $region16: #{tpu_custom_call.1} parent=11 // pred_fallthru
          _
        // Predicated region
        $region17: #{tpu_custom_call.1} parent=11 // pred_check
          %p184 = pneg %p87
        $region18: #{tpu_custom_call.1} parent=11 // pred_check_branch
          %186 = sbr.rel (%p184) target = $region20
        $region19: #{tpu_custom_call.1} parent=11 // pred_region
          %188 = vsyncadd [#allocation7], 0
          %s189 = sshll.u32 %s2, 4
          %s190 = int_to_ptr.hbm [resolvable:$true] %s189
          %s191 = sshll.u32 [#allocation8], 4
          %s192 = int_to_ptr.vmem [resolvable:$true] %s191
          %197 = dma.hbm_to_vmem [thread:$0]  %s190, 512, %s192, [#allocation7], 128, 128, 8
        $region20: #{tpu_custom_call.1} parent=11 // pred_fallthru
          _
        // Predicated region
        $region21: #{tpu_custom_call.1} parent=11 // pred_check
          %p198 = pneg %p108
        $region22: #{tpu_custom_call.1} parent=11 // pred_check_branch
          %200 = sbr.rel (%p198) target = $region24
        $region23: #{tpu_custom_call.1} parent=11 // pred_region
          %202 = vsyncadd [#allocation10], 0
          %s203 = sshll.u32 %s3, 4
          %s204 = int_to_ptr.hbm [resolvable:$true] %s203
          %s205 = sshll.u32 [#allocation9], 4
          %s206 = int_to_ptr.vmem [resolvable:$true] %s205
          %211 = dma.hbm_to_vmem [thread:$0]  %s204, 512, %s206, [#allocation10], 128, 128, 8
        $region24: #{tpu_custom_call.1} parent=11 // pred_fallthru
          _
        // Predicated region
        $region25: #{tpu_custom_call.1} parent=11 // pred_check
          %p212 = pneg %p129
        $region26: #{tpu_custom_call.1} parent=11 // pred_check_branch
          %214 = sbr.rel (%p212) target = $region28
        $region27: #{tpu_custom_call.1} parent=11 // pred_region
          _
        $region28: #{tpu_custom_call.1} parent=11 // pred_fallthru
          _
      $region12: #{tpu_custom_call.1} parent=5 // pred_fallthru
        _
      %p215 = scmp.lt.s32.totalorder %s19, 2
      // Predicated region
      $region29: #{tpu_custom_call.1} parent=5 // pred_check
        %p216 = pneg %p215
      $region30: #{tpu_custom_call.1} parent=5 // pred_check_branch
        %218 = sbr.rel (%p216) target = $region32
      $region31: #{tpu_custom_call.1} parent=5 // pred_region
        // Predicated region
        $region33: #{tpu_custom_call.1} parent=31 // pred_check
          %p219 = pneg %p39
        $region34: #{tpu_custom_call.1} parent=31 // pred_check_branch
          %221 = sbr.rel (%p219) target = $region36
        $region35: #{tpu_custom_call.1} parent=31 // pred_region
          %s222 = sand.u32 %s29, 1
          %s223 = scalar_lea.sflag [#allocation4], %s222
          %s224 = sand.u32 %s29, 1
          %s225 = smul.addr %s224, 64
          %s226 = scalar_lea.vmem [#allocation3], %s225
          %s227 = smul.u32 2, %s19
          %229 = vsyncadd %s223, 0
          %s230 = smul.addr %s227, 4
          %s231 = smul.addr %s230, 8
          %s232 = scalar_lea.hbm %s0, %s231
          %s233 = sshll.u32 %s232, 4
          %s234 = int_to_ptr.hbm [resolvable:$true] %s233
          %s235 = sshll.u32 %s226, 4
          %s236 = int_to_ptr.vmem [resolvable:$true] %s235
          %241 = dma.hbm_to_vmem [thread:$0]  %s234, 1024, %s236, %s223, 128, 128, 8
        $region36: #{tpu_custom_call.1} parent=31 // pred_fallthru
          _
      $region32: #{tpu_custom_call.1} parent=5 // pred_fallthru
        _
      %p242 = scmp.le.s32.totalorder 1, %s19
      %p243 = scmp.lt.s32.totalorder %s19, 3
      %p244 = pnand %p242, %p243
      %p245 = pneg %p244
      // Predicated region
      $region37: #{tpu_custom_call.1} parent=5 // pred_check
        _
      $region38: #{tpu_custom_call.1} parent=5 // pred_check_branch
        %247 = sbr.rel (%p244) target = $region40
      $region39: #{tpu_custom_call.1} parent=5 // pred_region
        %s248 = ssub.s32 %s19, 1
        %s249 = sand.u32 %s32, 1
        %s250 = scalar_lea.sflag [#allocation4], %s249
        %s251 = sand.u32 %s32, 1
        %s252 = smul.addr %s251, 64
        %s253 = scalar_lea.vmem [#allocation3], %s252
        // Predicated region
        $region41: #{tpu_custom_call.1} parent=39 // pred_check
          %p254 = pneg %p45
        $region42: #{tpu_custom_call.1} parent=39 // pred_check_branch
          %256 = sbr.rel (%p254) target = $region44
        $region43: #{tpu_custom_call.1} parent=39 // pred_region
          %258 = dma.done %s250, 1024
        $region44: #{tpu_custom_call.1} parent=39 // pred_fallthru
          _
        // Predicated region
        $region45: #{tpu_custom_call.1} parent=39 // pred_check
          %p259 = pneg %p66
        $region46: #{tpu_custom_call.1} parent=39 // pred_check_branch
          %261 = sbr.rel (%p259) target = $region48
        $region47: #{tpu_custom_call.1} parent=39 // pred_region
          %263 = dma.done [#allocation7], 1024
        $region48: #{tpu_custom_call.1} parent=39 // pred_fallthru
          _
        // Predicated region
        $region49: #{tpu_custom_call.1} parent=39 // pred_check
          %p264 = pneg %p87
        $region50: #{tpu_custom_call.1} parent=39 // pred_check_branch
          %266 = sbr.rel (%p264) target = $region52
        $region51: #{tpu_custom_call.1} parent=39 // pred_region
          %268 = dma.done [#allocation7], 512
        $region52: #{tpu_custom_call.1} parent=39 // pred_fallthru
          _
        // Predicated region
        $region53: #{tpu_custom_call.1} parent=39 // pred_check
          %p269 = pneg %p108
        $region54: #{tpu_custom_call.1} parent=39 // pred_check_branch
          %271 = sbr.rel (%p269) target = $region56
        $region55: #{tpu_custom_call.1} parent=39 // pred_region
          %273 = dma.done [#allocation10], 512
        $region56: #{tpu_custom_call.1} parent=39 // pred_fallthru
          _
        %s274 = sand.u32 %s32, 1
        %s275 = scalar_lea.sflag [#allocation4], %s274
        %s276 = sand.u32 %s32, 1
        %s277 = smul.addr %s276, 64
        %s278 = scalar_lea.vmem [#allocation3], %s277
        %p279 = pneg %p45
        %p280 = pneg %p42
        %p281 = pneg %p66
        %p282 = pneg %p63
        %p283 = pneg %p87
        %p284 = pneg %p84
        %p285 = pneg %p108
        %p286 = pneg %p105
        %p287 = pneg %p129
        %p288 = pneg %p126
        %p289 = pneg %p155
        %p290 = pneg %p152
        %s291 = sand.u32 %s142, 1
        %s292 = scalar_lea.sflag [#allocation5], %s291
        %s293 = sand.u32 %s142, 1
        %s294 = smul.addr %s293, 64
        %s295 = scalar_lea.vmem [#allocation11], %s294
        %s296 = smul.u32 2, %s24
        %s297 = smul.u32 2, %s24
        %v298 = vld [vmem:[%s253] sm:$0xff]
        %v299 = vld [vmem:[%s253 + $0x8] sm:$0xff]
        %v300 = vld [vmem:[%s253 + $0x10] sm:$0xff]
        %v301 = vld [vmem:[%s253 + $0x18] sm:$0xff]
        %v302 = vld [vmem:[%s253 + $0x20] sm:$0xff]
        %v303 = vld [vmem:[%s253 + $0x28] sm:$0xff]
        %v304 = vld [vmem:[%s253 + $0x30] sm:$0xff]
        %v305 = vld [vmem:[%s253 + $0x38] sm:$0xff]
        %v306 = vld [vmem:[#allocation8] sm:$0xff]
        %v307 = vld [vmem:[#allocation8 + $0x8] sm:$0xff]
        %v308 = vld [vmem:[#allocation8 + $0x10] sm:$0xff]
        %v309 = vld [vmem:[#allocation8 + $0x18] sm:$0xff]
        %vm310 = vcmask 261120
        %v312 = vsel %vm310, %v298, 0
        %v315 = vsel %vm310, %v299, 0
        %v318 = vsel %vm310, %v300, 0
        %v321 = vsel %vm310, %v301, 0
        %v324 = vsel %vm310, %v302, 0
        %v327 = vsel %vm310, %v303, 0
        %v330 = vsel %vm310, %v304, 0
        %v333 = vsel %vm310, %v305, 0
        %335 = vmatpush.msra.mxu0 0.0
        %336 = vmatpush.msra.mxu0 0.0
        %337 = vmatpush.msra.mxu0 0.0
        %338 = vmatpush.msra.mxu0 0.0
        %339 = vmatpush.msra.mxu0 0.0
        %340 = vmatpush.msra.mxu0 0.0
        %341 = vmatpush.msra.mxu0 0.0
        %342 = vmatpush.msra.mxu0 0.0
        %343 = vmatpush.msra.mxu0 0.0
        %344 = vmatpush.msra.mxu0 0.0
        %345 = vmatpush.msra.mxu0 0.0
        %346 = vmatpush.msra.mxu0 0.0
        %347 = vmatpush.msra.mxu0 %v309
        %348 = vmatpush.msra.mxu0 %v308
        %349 = vmatpush.msra.mxu0 %v307
        %350 = vmatpush.msra.mxu0 %v306
        %351 = vmatmul.f32.gmra.mxu0 %v312
        %v352 = vpop.f32.mrf.mxu0
        %v353 = vadd.f32 0.0, %v352
        %354 = vmatmul.f32.gmra.mxu0 %v315
        %v355 = vpop.f32.mrf.mxu0
        %v356 = vadd.f32 0.0, %v355
        %357 = vmatmul.f32.gmra.mxu0 %v318
        %v358 = vpop.f32.mrf.mxu0
        %v359 = vadd.f32 0.0, %v358
        %360 = vmatmul.f32.gmra.mxu0 %v321
        %v361 = vpop.f32.mrf.mxu0
        %v362 = vadd.f32 0.0, %v361
        %363 = vmatmul.f32.gmra.mxu0 %v324
        %v364 = vpop.f32.mrf.mxu0
        %v365 = vadd.f32 0.0, %v364
        %366 = vmatmul.f32.gmra.mxu0 %v327
        %v367 = vpop.f32.mrf.mxu0
        %v368 = vadd.f32 0.0, %v367
        %369 = vmatmul.f32.gmra.mxu0 %v330
        %v370 = vpop.f32.mrf.mxu0
        %v371 = vadd.f32 0.0, %v370
        %372 = vmatmul.f32.gmra.mxu0 %v333
        %v373 = vpop.f32.mrf.mxu0
        %v374 = vadd.f32 0.0, %v373
        %375 = vdwg.mxu0
        %v376 = vld [vmem:[#allocation6] sm:$0xff]
        %v377 = vld [vmem:[#allocation6 + $0x8] sm:$0xff]
        %v378 = vld [vmem:[#allocation6 + $0x10] sm:$0xff]
        %v379 = vld [vmem:[#allocation6 + $0x18] sm:$0xff]
        %v380 = vld [vmem:[#allocation6 + $0x20] sm:$0xff]
        %v381 = vld [vmem:[#allocation6 + $0x28] sm:$0xff]
        %v382 = vld [vmem:[#allocation6 + $0x30] sm:$0xff]
        %v383 = vld [vmem:[#allocation6 + $0x38] sm:$0xff]
        %388 = vrot.lane.b32.xlu0 %v353, 96
        %v389 = vpop.permute.xlu0 %388
        %390 = vrot.lane.b32.xlu0 %v356, 96
        %v391 = vpop.permute.xlu0 %390
        %392 = vrot.lane.b32.xlu0 %v359, 96
        %v393 = vpop.permute.xlu0 %392
        %394 = vrot.lane.b32.xlu0 %v362, 96
        %v395 = vpop.permute.xlu0 %394
        %vm396 = vcmask 64512
        %v397 = vsel %vm396, %v353, 0
        %v399 = vsel %vm396, %v356, 0
        %v401 = vsel %vm396, %v359, 0
        %v403 = vsel %vm396, %v362, 0
        %v405 = vsel %vm396, %v389, 0
        %v407 = vsel %vm396, %v391, 0
        %v409 = vsel %vm396, %v393, 0
        %v411 = vsel %vm396, %v395, 0
        %413 = vmatpush.xpose.msra.mxu0 0.0
        %414 = vmatpush.xpose.msra.mxu0 0.0
        %415 = vmatpush.xpose.msra.mxu0 0.0
        %416 = vmatpush.xpose.msra.mxu0 0.0
        %417 = vmatpush.xpose.msra.mxu0 0.0
        %418 = vmatpush.xpose.msra.mxu0 0.0
        %419 = vmatpush.xpose.msra.mxu0 0.0
        %420 = vmatpush.xpose.msra.mxu0 0.0
        %421 = vmatpush.xpose.msra.mxu0 0.0
        %422 = vmatpush.xpose.msra.mxu0 0.0
        %423 = vmatpush.xpose.msra.mxu0 0.0
        %424 = vmatpush.xpose.msra.mxu0 0.0
        %425 = vmatpush.xpose.msra.mxu0 %v411
        %426 = vmatpush.xpose.msra.mxu0 %v409
        %427 = vmatpush.xpose.msra.mxu0 %v407
        %428 = vmatpush.xpose.msra.mxu0 %v405
        %429 = vmatmul.f32.gmra.mxu0 %v397
        %v430 = vpop.f32.mrf.mxu0
        %v431 = vadd.f32 %v376, %v430
        %432 = vmatmul.f32.gmra.mxu0 %v399
        %v433 = vpop.f32.mrf.mxu0
        %v434 = vadd.f32 %v377, %v433
        %435 = vmatmul.f32.gmra.mxu0 %v401
        %v436 = vpop.f32.mrf.mxu0
        %v437 = vadd.f32 %v378, %v436
        %438 = vmatmul.f32.gmra.mxu0 %v403
        %v439 = vpop.f32.mrf.mxu0
        %v440 = vadd.f32 %v379, %v439
        %441 = vdwg.mxu0
        %446 = vrot.lane.b32.xlu0 %v365, 96
        %v447 = vpop.permute.xlu0 %446
        %448 = vrot.lane.b32.xlu0 %v368, 96
        %v449 = vpop.permute.xlu0 %448
        %450 = vrot.lane.b32.xlu0 %v371, 96
        %v451 = vpop.permute.xlu0 %450
        %452 = vrot.lane.b32.xlu0 %v374, 96
        %v453 = vpop.permute.xlu0 %452
        %v454 = vsel %vm396, %v365, 0
        %v456 = vsel %vm396, %v368, 0
        %v458 = vsel %vm396, %v371, 0
        %v460 = vsel %vm396, %v374, 0
        %v462 = vsel %vm396, %v447, 0
        %v464 = vsel %vm396, %v449, 0
        %v466 = vsel %vm396, %v451, 0
        %v468 = vsel %vm396, %v453, 0
        %470 = vmatpush.xpose.msra.mxu0 0.0
        %471 = vmatpush.xpose.msra.mxu0 0.0
        %472 = vmatpush.xpose.msra.mxu0 0.0
        %473 = vmatpush.xpose.msra.mxu0 0.0
        %474 = vmatpush.xpose.msra.mxu0 0.0
        %475 = vmatpush.xpose.msra.mxu0 0.0
        %476 = vmatpush.xpose.msra.mxu0 0.0
        %477 = vmatpush.xpose.msra.mxu0 0.0
        %478 = vmatpush.xpose.msra.mxu0 0.0
        %479 = vmatpush.xpose.msra.mxu0 0.0
        %480 = vmatpush.xpose.msra.mxu0 0.0
        %481 = vmatpush.xpose.msra.mxu0 0.0
        %482 = vmatpush.xpose.msra.mxu0 %v468
        %483 = vmatpush.xpose.msra.mxu0 %v466
        %484 = vmatpush.xpose.msra.mxu0 %v464
        %485 = vmatpush.xpose.msra.mxu0 %v462
        %486 = vmatmul.f32.gmra.mxu0 %v454
        %v487 = vpop.f32.mrf.mxu0
        %v488 = vadd.f32 %v380, %v487
        %489 = vmatmul.f32.gmra.mxu0 %v456
        %v490 = vpop.f32.mrf.mxu0
        %v491 = vadd.f32 %v381, %v490
        %492 = vmatmul.f32.gmra.mxu0 %v458
        %v493 = vpop.f32.mrf.mxu0
        %v494 = vadd.f32 %v382, %v493
        %495 = vmatmul.f32.gmra.mxu0 %v460
        %v496 = vpop.f32.mrf.mxu0
        %v497 = vadd.f32 %v383, %v496
        %498 = vdwg.mxu0
        %v499 = vsel %vm310, %v431, -inf
        %500 = vmax.xlane.f32.xlu0 %v499
        %v501 = vpop.xlane.xlu0 %500
        %v502 = vsel %vm310, %v434, -inf
        %503 = vmax.xlane.f32.xlu0 %v502
        %v504 = vpop.xlane.xlu0 %503
        %v505 = vsel %vm310, %v437, -inf
        %506 = vmax.xlane.f32.xlu0 %v505
        %v507 = vpop.xlane.xlu0 %506
        %v508 = vsel %vm310, %v440, -inf
        %509 = vmax.xlane.f32.xlu0 %v508
        %v510 = vpop.xlane.xlu0 %509
        %v511 = vsel %vm310, %v488, -inf
        %512 = vmax.xlane.f32.xlu0 %v511
        %v513 = vpop.xlane.xlu0 %512
        %v514 = vsel %vm310, %v491, -inf
        %515 = vmax.xlane.f32.xlu0 %v514
        %v516 = vpop.xlane.xlu0 %515
        %v517 = vsel %vm310, %v494, -inf
        %518 = vmax.xlane.f32.xlu0 %v517
        %v519 = vpop.xlane.xlu0 %518
        %v520 = vsel %vm310, %v497, -inf
        %521 = vmax.xlane.f32.xlu0 %v520
        %v522 = vpop.xlane.xlu0 %521
        %v523 = vsub.f32 %v431, %v501
        %v524 = vsub.f32 %v434, %v504
        %v525 = vsub.f32 %v437, %v507
        %v526 = vsub.f32 %v440, %v510
        %v527 = vsub.f32 %v488, %v513
        %v528 = vsub.f32 %v491, %v516
        %v529 = vsub.f32 %v494, %v519
        %v530 = vsub.f32 %v497, %v522
        %v531 = vmul.f32 %v523, 1.442695
        %v532 = vpow.pop %v531
        %v533 = vmul.f32 %v524, 1.442695
        %v534 = vpow.pop %v533
        %v535 = vmul.f32 %v525, 1.442695
        %v536 = vpow.pop %v535
        %v537 = vmul.f32 %v526, 1.442695
        %v538 = vpow.pop %v537
        %v539 = vmul.f32 %v527, 1.442695
        %v540 = vpow.pop %v539
        %v541 = vmul.f32 %v528, 1.442695
        %v542 = vpow.pop %v541
        %v543 = vmul.f32 %v529, 1.442695
        %v544 = vpow.pop %v543
        %v545 = vmul.f32 %v530, 1.442695
        %v546 = vpow.pop %v545
        %v547 = vsel %vm310, %v532, 0.0
        %548 = vadd.xlane.f32.xlu0 %v547
        %v549 = vpop.xlane.xlu0 %548
        %v550 = vsel %vm310, %v534, 0.0
        %551 = vadd.xlane.f32.xlu0 %v550
        %v552 = vpop.xlane.xlu0 %551
        %v553 = vsel %vm310, %v536, 0.0
        %554 = vadd.xlane.f32.xlu0 %v553
        %v555 = vpop.xlane.xlu0 %554
        %v556 = vsel %vm310, %v538, 0.0
        %557 = vadd.xlane.f32.xlu0 %v556
        %v558 = vpop.xlane.xlu0 %557
        %v559 = vsel %vm310, %v540, 0.0
        %560 = vadd.xlane.f32.xlu0 %v559
        %v561 = vpop.xlane.xlu0 %560
        %v562 = vsel %vm310, %v542, 0.0
        %563 = vadd.xlane.f32.xlu0 %v562
        %v564 = vpop.xlane.xlu0 %563
        %v565 = vsel %vm310, %v544, 0.0
        %566 = vadd.xlane.f32.xlu0 %v565
        %v567 = vpop.xlane.xlu0 %566
        %v568 = vsel %vm310, %v546, 0.0
        %569 = vadd.xlane.f32.xlu0 %v568
        %v570 = vpop.xlane.xlu0 %569
        %571 = vrot.lane.b32.xlu0 %v353, 64
        %v572 = vpop.permute.xlu0 %571
        %573 = vrot.lane.b32.xlu0 %v356, 64
        %v574 = vpop.permute.xlu0 %573
        %575 = vrot.lane.b32.xlu0 %v359, 64
        %v576 = vpop.permute.xlu0 %575
        %577 = vrot.lane.b32.xlu0 %v362, 64
        %v578 = vpop.permute.xlu0 %577
        %v584 = vsel %vm310, %v532, 0
        %v587 = vsel %vm310, %v534, 0
        %v590 = vsel %vm310, %v536, 0
        %v593 = vsel %vm310, %v538, 0
        %595 = vmatpush.msra.mxu0 0.0
        %596 = vmatpush.msra.mxu0 0.0
        %597 = vmatpush.msra.mxu0 0.0
        %598 = vmatpush.msra.mxu0 0.0
        %599 = vmatpush.msra.mxu0 0.0
        %600 = vmatpush.msra.mxu0 0.0
        %601 = vmatpush.msra.mxu0 0.0
        %602 = vmatpush.msra.mxu0 0.0
        %603 = vmatpush.msra.mxu0 0.0
        %604 = vmatpush.msra.mxu0 0.0
        %605 = vmatpush.msra.mxu0 0.0
        %606 = vmatpush.msra.mxu0 0.0
        %607 = vmatpush.msra.mxu0 %v578
        %608 = vmatpush.msra.mxu0 %v576
        %609 = vmatpush.msra.mxu0 %v574
        %610 = vmatpush.msra.mxu0 %v572
        %611 = vmatmul.f32.gmra.mxu0 %v584
        %v612 = vpop.f32.mrf.mxu0
        %v613 = vadd.f32 0.0, %v612
        %614 = vmatmul.f32.gmra.mxu0 %v587
        %v615 = vpop.f32.mrf.mxu0
        %v616 = vadd.f32 0.0, %v615
        %617 = vmatmul.f32.gmra.mxu0 %v590
        %v618 = vpop.f32.mrf.mxu0
        %v619 = vadd.f32 0.0, %v618
        %620 = vmatmul.f32.gmra.mxu0 %v593
        %v621 = vpop.f32.mrf.mxu0
        %v622 = vadd.f32 0.0, %v621
        %623 = vdwg.mxu0
        %624 = vrot.lane.b32.xlu0 %v365, 64
        %v625 = vpop.permute.xlu0 %624
        %626 = vrot.lane.b32.xlu0 %v368, 64
        %v627 = vpop.permute.xlu0 %626
        %628 = vrot.lane.b32.xlu0 %v371, 64
        %v629 = vpop.permute.xlu0 %628
        %630 = vrot.lane.b32.xlu0 %v374, 64
        %v631 = vpop.permute.xlu0 %630
        %v637 = vsel %vm310, %v540, 0
        %v640 = vsel %vm310, %v542, 0
        %v643 = vsel %vm310, %v544, 0
        %v646 = vsel %vm310, %v546, 0
        %648 = vmatpush.msra.mxu0 0.0
        %649 = vmatpush.msra.mxu0 0.0
        %650 = vmatpush.msra.mxu0 0.0
        %651 = vmatpush.msra.mxu0 0.0
        %652 = vmatpush.msra.mxu0 0.0
        %653 = vmatpush.msra.mxu0 0.0
        %654 = vmatpush.msra.mxu0 0.0
        %655 = vmatpush.msra.mxu0 0.0
        %656 = vmatpush.msra.mxu0 0.0
        %657 = vmatpush.msra.mxu0 0.0
        %658 = vmatpush.msra.mxu0 0.0
        %659 = vmatpush.msra.mxu0 0.0
        %660 = vmatpush.msra.mxu0 %v631
        %661 = vmatpush.msra.mxu0 %v629
        %662 = vmatpush.msra.mxu0 %v627
        %663 = vmatpush.msra.mxu0 %v625
        %664 = vmatmul.f32.gmra.mxu0 %v637
        %v665 = vpop.f32.mrf.mxu0
        %v666 = vadd.f32 0.0, %v665
        %667 = vmatmul.f32.gmra.mxu0 %v640
        %v668 = vpop.f32.mrf.mxu0
        %v669 = vadd.f32 0.0, %v668
        %670 = vmatmul.f32.gmra.mxu0 %v643
        %v671 = vpop.f32.mrf.mxu0
        %v672 = vadd.f32 0.0, %v671
        %673 = vmatmul.f32.gmra.mxu0 %v646
        %v674 = vpop.f32.mrf.mxu0
        %v675 = vadd.f32 0.0, %v674
        %676 = vdwg.mxu0
        %v677 = vrcp.pop %v549
        %v678 = vmul.f32 %v549, %v677
        %v679 = vsub.f32 1.0, %v678
        %v680 = vmul.f32 %v677, %v679
        %v681 = vadd.f32 %v677, %v680
        %vm682 = vweird.f32 %v549
        %vm683 = vweird.f32 %v677
        %vm684 = vmor %vm682, %vm683
        %v685 = vsel %vm684, %v677, %v681
        %v686 = vand.u32 2147483647, %v549
        %vm687 = vcmp.eq.f32.partialorder %v686, 8.507059e+37
        %v688 = vand.u32 %v549, 2147483648
        %v689 = vor.u32 1.1754944e-38, %v688
        %v690 = vsel %vm687, %v689, %v685
        %v691 = vmul.f32 %v613, %v690
        %v692 = vrcp.pop %v552
        %v693 = vmul.f32 %v552, %v692
        %v694 = vsub.f32 1.0, %v693
        %v695 = vmul.f32 %v692, %v694
        %v696 = vadd.f32 %v692, %v695
        %vm697 = vweird.f32 %v552
        %vm698 = vweird.f32 %v692
        %vm699 = vmor %vm697, %vm698
        %v700 = vsel %vm699, %v692, %v696
        %v701 = vand.u32 2147483647, %v552
        %vm702 = vcmp.eq.f32.partialorder %v701, 8.507059e+37
        %v703 = vand.u32 %v552, 2147483648
        %v704 = vor.u32 1.1754944e-38, %v703
        %v705 = vsel %vm702, %v704, %v700
        %v706 = vmul.f32 %v616, %v705
        %v707 = vrcp.pop %v555
        %v708 = vmul.f32 %v555, %v707
        %v709 = vsub.f32 1.0, %v708
        %v710 = vmul.f32 %v707, %v709
        %v711 = vadd.f32 %v707, %v710
        %vm712 = vweird.f32 %v555
        %vm713 = vweird.f32 %v707
        %vm714 = vmor %vm712, %vm713
        %v715 = vsel %vm714, %v707, %v711
        %v716 = vand.u32 2147483647, %v555
        %vm717 = vcmp.eq.f32.partialorder %v716, 8.507059e+37
        %v718 = vand.u32 %v555, 2147483648
        %v719 = vor.u32 1.1754944e-38, %v718
        %v720 = vsel %vm717, %v719, %v715
        %v721 = vmul.f32 %v619, %v720
        %v722 = vrcp.pop %v558
        %v723 = vmul.f32 %v558, %v722
        %v724 = vsub.f32 1.0, %v723
        %v725 = vmul.f32 %v722, %v724
        %v726 = vadd.f32 %v722, %v725
        %vm727 = vweird.f32 %v558
        %vm728 = vweird.f32 %v722
        %vm729 = vmor %vm727, %vm728
        %v730 = vsel %vm729, %v722, %v726
        %v731 = vand.u32 2147483647, %v558
        %vm732 = vcmp.eq.f32.partialorder %v731, 8.507059e+37
        %v733 = vand.u32 %v558, 2147483648
        %v734 = vor.u32 1.1754944e-38, %v733
        %v735 = vsel %vm732, %v734, %v730
        %v736 = vmul.f32 %v622, %v735
        %v737 = vrcp.pop %v561
        %v738 = vmul.f32 %v561, %v737
        %v739 = vsub.f32 1.0, %v738
        %v740 = vmul.f32 %v737, %v739
        %v741 = vadd.f32 %v737, %v740
        %vm742 = vweird.f32 %v561
        %vm743 = vweird.f32 %v737
        %vm744 = vmor %vm742, %vm743
        %v745 = vsel %vm744, %v737, %v741
        %v746 = vand.u32 2147483647, %v561
        %vm747 = vcmp.eq.f32.partialorder %v746, 8.507059e+37
        %v748 = vand.u32 %v561, 2147483648
        %v749 = vor.u32 1.1754944e-38, %v748
        %v750 = vsel %vm747, %v749, %v745
        %v751 = vmul.f32 %v666, %v750
        %v752 = vrcp.pop %v564
        %v753 = vmul.f32 %v564, %v752
        %v754 = vsub.f32 1.0, %v753
        %v755 = vmul.f32 %v752, %v754
        %v756 = vadd.f32 %v752, %v755
        %vm757 = vweird.f32 %v564
        %vm758 = vweird.f32 %v752
        %vm759 = vmor %vm757, %vm758
        %v760 = vsel %vm759, %v752, %v756
        %v761 = vand.u32 2147483647, %v564
        %vm762 = vcmp.eq.f32.partialorder %v761, 8.507059e+37
        %v763 = vand.u32 %v564, 2147483648
        %v764 = vor.u32 1.1754944e-38, %v763
        %v765 = vsel %vm762, %v764, %v760
        %v766 = vmul.f32 %v669, %v765
        %v767 = vrcp.pop %v567
        %v768 = vmul.f32 %v567, %v767
        %v769 = vsub.f32 1.0, %v768
        %v770 = vmul.f32 %v767, %v769
        %v771 = vadd.f32 %v767, %v770
        %vm772 = vweird.f32 %v567
        %vm773 = vweird.f32 %v767
        %vm774 = vmor %vm772, %vm773
        %v775 = vsel %vm774, %v767, %v771
        %v776 = vand.u32 2147483647, %v567
        %vm777 = vcmp.eq.f32.partialorder %v776, 8.507059e+37
        %v778 = vand.u32 %v567, 2147483648
        %v779 = vor.u32 1.1754944e-38, %v778
        %v780 = vsel %vm777, %v779, %v775
        %v781 = vmul.f32 %v672, %v780
        %v782 = vrcp.pop %v570
        %v783 = vmul.f32 %v570, %v782
        %v784 = vsub.f32 1.0, %v783
        %v785 = vmul.f32 %v782, %v784
        %v786 = vadd.f32 %v782, %v785
        %vm787 = vweird.f32 %v570
        %vm788 = vweird.f32 %v782
        %vm789 = vmor %vm787, %vm788
        %v790 = vsel %vm789, %v782, %v786
        %v791 = vand.u32 2147483647, %v570
        %vm792 = vcmp.eq.f32.partialorder %v791, 8.507059e+37
        %v793 = vand.u32 %v570, 2147483648
        %v794 = vor.u32 1.1754944e-38, %v793
        %v795 = vsel %vm792, %v794, %v790
        %v796 = vmul.f32 %v675, %v795
        %797 = vst.msk [vmem:[#allocation2] sm:$0xff] %vm396, %v691
        %798 = vst.msk [vmem:[#allocation2 + $0x8] sm:$0xff] %vm396, %v706
        %799 = vst.msk [vmem:[#allocation2 + $0x10] sm:$0xff] %vm396, %v721
        %800 = vst.msk [vmem:[#allocation2 + $0x18] sm:$0xff] %vm396, %v736
        %801 = vst.msk [vmem:[#allocation2 + $0x20] sm:$0xff] %vm396, %v751
        %802 = vst.msk [vmem:[#allocation2 + $0x28] sm:$0xff] %vm396, %v766
        %803 = vst.msk [vmem:[#allocation2 + $0x30] sm:$0xff] %vm396, %v781
        %804 = vst.msk [vmem:[#allocation2 + $0x38] sm:$0xff] %vm396, %v796
        %805 = vrot.lane.b32.xlu0 %v353, 120
        %v806 = vpop.permute.xlu0 %805
        %807 = vrot.lane.b32.xlu0 %v356, 120
        %v808 = vpop.permute.xlu0 %807
        %809 = vrot.lane.b32.xlu0 %v359, 120
        %v810 = vpop.permute.xlu0 %809
        %811 = vrot.lane.b32.xlu0 %v362, 120
        %v812 = vpop.permute.xlu0 %811
        %813 = vrot.lane.b32.xlu0 %v353, 88
        %v814 = vpop.permute.xlu0 %813
        %815 = vrot.lane.b32.xlu0 %v356, 88
        %v816 = vpop.permute.xlu0 %815
        %817 = vrot.lane.b32.xlu0 %v359, 88
        %v818 = vpop.permute.xlu0 %817
        %819 = vrot.lane.b32.xlu0 %v362, 88
        %v820 = vpop.permute.xlu0 %819
        %v821 = vsel %vm396, %v806, 0
        %v823 = vsel %vm396, %v808, 0
        %v825 = vsel %vm396, %v810, 0
        %v827 = vsel %vm396, %v812, 0
        %v829 = vsel %vm396, %v814, 0
        %v831 = vsel %vm396, %v816, 0
        %v833 = vsel %vm396, %v818, 0
        %v835 = vsel %vm396, %v820, 0
        %837 = vmatpush.xpose.msra.mxu0 0.0
        %838 = vmatpush.xpose.msra.mxu0 0.0
        %839 = vmatpush.xpose.msra.mxu0 0.0
        %840 = vmatpush.xpose.msra.mxu0 0.0
        %841 = vmatpush.xpose.msra.mxu0 0.0
        %842 = vmatpush.xpose.msra.mxu0 0.0
        %843 = vmatpush.xpose.msra.mxu0 0.0
        %844 = vmatpush.xpose.msra.mxu0 0.0
        %845 = vmatpush.xpose.msra.mxu0 0.0
        %846 = vmatpush.xpose.msra.mxu0 0.0
        %847 = vmatpush.xpose.msra.mxu0 0.0
        %848 = vmatpush.xpose.msra.mxu0 0.0
        %849 = vmatpush.xpose.msra.mxu0 %v835
        %850 = vmatpush.xpose.msra.mxu0 %v833
        %851 = vmatpush.xpose.msra.mxu0 %v831
        %852 = vmatpush.xpose.msra.mxu0 %v829
        %853 = vmatmul.f32.gmra.mxu0 %v821
        %v854 = vpop.f32.mrf.mxu0
        %v855 = vadd.f32 %v376, %v854
        %856 = vmatmul.f32.gmra.mxu0 %v823
        %v857 = vpop.f32.mrf.mxu0
        %v858 = vadd.f32 %v377, %v857
        %859 = vmatmul.f32.gmra.mxu0 %v825
        %v860 = vpop.f32.mrf.mxu0
        %v861 = vadd.f32 %v378, %v860
        %862 = vmatmul.f32.gmra.mxu0 %v827
        %v863 = vpop.f32.mrf.mxu0
        %v864 = vadd.f32 %v379, %v863
        %865 = vdwg.mxu0
        %866 = vrot.lane.b32.xlu0 %v365, 120
        %v867 = vpop.permute.xlu0 %866
        %868 = vrot.lane.b32.xlu0 %v368, 120
        %v869 = vpop.permute.xlu0 %868
        %870 = vrot.lane.b32.xlu0 %v371, 120
        %v871 = vpop.permute.xlu0 %870
        %872 = vrot.lane.b32.xlu0 %v374, 120
        %v873 = vpop.permute.xlu0 %872
        %874 = vrot.lane.b32.xlu0 %v365, 88
        %v875 = vpop.permute.xlu0 %874
        %876 = vrot.lane.b32.xlu0 %v368, 88
        %v877 = vpop.permute.xlu0 %876
        %878 = vrot.lane.b32.xlu0 %v371, 88
        %v879 = vpop.permute.xlu0 %878
        %880 = vrot.lane.b32.xlu0 %v374, 88
        %v881 = vpop.permute.xlu0 %880
        %v882 = vsel %vm396, %v867, 0
        %v884 = vsel %vm396, %v869, 0
        %v886 = vsel %vm396, %v871, 0
        %v888 = vsel %vm396, %v873, 0
        %v890 = vsel %vm396, %v875, 0
        %v892 = vsel %vm396, %v877, 0
        %v894 = vsel %vm396, %v879, 0
        %v896 = vsel %vm396, %v881, 0
        %898 = vmatpush.xpose.msra.mxu0 0.0
        %899 = vmatpush.xpose.msra.mxu0 0.0
        %900 = vmatpush.xpose.msra.mxu0 0.0
        %901 = vmatpush.xpose.msra.mxu0 0.0
        %902 = vmatpush.xpose.msra.mxu0 0.0
        %903 = vmatpush.xpose.msra.mxu0 0.0
        %904 = vmatpush.xpose.msra.mxu0 0.0
        %905 = vmatpush.xpose.msra.mxu0 0.0
        %906 = vmatpush.xpose.msra.mxu0 0.0
        %907 = vmatpush.xpose.msra.mxu0 0.0
        %908 = vmatpush.xpose.msra.mxu0 0.0
        %909 = vmatpush.xpose.msra.mxu0 0.0
        %910 = vmatpush.xpose.msra.mxu0 %v896
        %911 = vmatpush.xpose.msra.mxu0 %v894
        %912 = vmatpush.xpose.msra.mxu0 %v892
        %913 = vmatpush.xpose.msra.mxu0 %v890
        %914 = vmatmul.f32.gmra.mxu0 %v882
        %v915 = vpop.f32.mrf.mxu0
        %v916 = vadd.f32 %v380, %v915
        %917 = vmatmul.f32.gmra.mxu0 %v884
        %v918 = vpop.f32.mrf.mxu0
        %v919 = vadd.f32 %v381, %v918
        %920 = vmatmul.f32.gmra.mxu0 %v886
        %v921 = vpop.f32.mrf.mxu0
        %v922 = vadd.f32 %v382, %v921
        %923 = vmatmul.f32.gmra.mxu0 %v888
        %v924 = vpop.f32.mrf.mxu0
        %v925 = vadd.f32 %v383, %v924
        %926 = vdwg.mxu0
        %v927 = vsel %vm310, %v855, -inf
        %928 = vmax.xlane.f32.xlu0 %v927
        %v929 = vpop.xlane.xlu0 %928
        %v930 = vsel %vm310, %v858, -inf
        %931 = vmax.xlane.f32.xlu0 %v930
        %v932 = vpop.xlane.xlu0 %931
        %v933 = vsel %vm310, %v861, -inf
        %934 = vmax.xlane.f32.xlu0 %v933
        %v935 = vpop.xlane.xlu0 %934
        %v936 = vsel %vm310, %v864, -inf
        %937 = vmax.xlane.f32.xlu0 %v936
        %v938 = vpop.xlane.xlu0 %937
        %v939 = vsel %vm310, %v916, -inf
        %940 = vmax.xlane.f32.xlu0 %v939
        %v941 = vpop.xlane.xlu0 %940
        %v942 = vsel %vm310, %v919, -inf
        %943 = vmax.xlane.f32.xlu0 %v942
        %v944 = vpop.xlane.xlu0 %943
        %v945 = vsel %vm310, %v922, -inf
        %946 = vmax.xlane.f32.xlu0 %v945
        %v947 = vpop.xlane.xlu0 %946
        %v948 = vsel %vm310, %v925, -inf
        %949 = vmax.xlane.f32.xlu0 %v948
        %v950 = vpop.xlane.xlu0 %949
        %v951 = vsub.f32 %v855, %v929
        %v952 = vsub.f32 %v858, %v932
        %v953 = vsub.f32 %v861, %v935
        %v954 = vsub.f32 %v864, %v938
        %v955 = vsub.f32 %v916, %v941
        %v956 = vsub.f32 %v919, %v944
        %v957 = vsub.f32 %v922, %v947
        %v958 = vsub.f32 %v925, %v950
        %v959 = vmul.f32 %v951, 1.442695
        %v960 = vpow.pop %v959
        %v961 = vmul.f32 %v952, 1.442695
        %v962 = vpow.pop %v961
        %v963 = vmul.f32 %v953, 1.442695
        %v964 = vpow.pop %v963
        %v965 = vmul.f32 %v954, 1.442695
        %v966 = vpow.pop %v965
        %v967 = vmul.f32 %v955, 1.442695
        %v968 = vpow.pop %v967
        %v969 = vmul.f32 %v956, 1.442695
        %v970 = vpow.pop %v969
        %v971 = vmul.f32 %v957, 1.442695
        %v972 = vpow.pop %v971
        %v973 = vmul.f32 %v958, 1.442695
        %v974 = vpow.pop %v973
        %v975 = vsel %vm310, %v960, 0.0
        %976 = vadd.xlane.f32.xlu0 %v975
        %v977 = vpop.xlane.xlu0 %976
        %v978 = vsel %vm310, %v962, 0.0
        %979 = vadd.xlane.f32.xlu0 %v978
        %v980 = vpop.xlane.xlu0 %979
        %v981 = vsel %vm310, %v964, 0.0
        %982 = vadd.xlane.f32.xlu0 %v981
        %v983 = vpop.xlane.xlu0 %982
        %v984 = vsel %vm310, %v966, 0.0
        %985 = vadd.xlane.f32.xlu0 %v984
        %v986 = vpop.xlane.xlu0 %985
        %v987 = vsel %vm310, %v968, 0.0
        %988 = vadd.xlane.f32.xlu0 %v987
        %v989 = vpop.xlane.xlu0 %988
        %v990 = vsel %vm310, %v970, 0.0
        %991 = vadd.xlane.f32.xlu0 %v990
        %v992 = vpop.xlane.xlu0 %991
        %v993 = vsel %vm310, %v972, 0.0
        %994 = vadd.xlane.f32.xlu0 %v993
        %v995 = vpop.xlane.xlu0 %994
        %v996 = vsel %vm310, %v974, 0.0
        %997 = vadd.xlane.f32.xlu0 %v996
        %v998 = vpop.xlane.xlu0 %997
        %999 = vrot.lane.b32.xlu0 %v353, 56
        %v1000 = vpop.permute.xlu0 %999
        %1001 = vrot.lane.b32.xlu0 %v356, 56
        %v1002 = vpop.permute.xlu0 %1001
        %1003 = vrot.lane.b32.xlu0 %v359, 56
        %v1004 = vpop.permute.xlu0 %1003
        %1005 = vrot.lane.b32.xlu0 %v362, 56
        %v1006 = vpop.permute.xlu0 %1005
        %v1012 = vsel %vm310, %v960, 0
        %v1015 = vsel %vm310, %v962, 0
        %v1018 = vsel %vm310, %v964, 0
        %v1021 = vsel %vm310, %v966, 0
        %1023 = vmatpush.msra.mxu0 0.0
        %1024 = vmatpush.msra.mxu0 0.0
        %1025 = vmatpush.msra.mxu0 0.0
        %1026 = vmatpush.msra.mxu0 0.0
        %1027 = vmatpush.msra.mxu0 0.0
        %1028 = vmatpush.msra.mxu0 0.0
        %1029 = vmatpush.msra.mxu0 0.0
        %1030 = vmatpush.msra.mxu0 0.0
        %1031 = vmatpush.msra.mxu0 0.0
        %1032 = vmatpush.msra.mxu0 0.0
        %1033 = vmatpush.msra.mxu0 0.0
        %1034 = vmatpush.msra.mxu0 0.0
        %1035 = vmatpush.msra.mxu0 %v1006
        %1036 = vmatpush.msra.mxu0 %v1004
        %1037 = vmatpush.msra.mxu0 %v1002
        %1038 = vmatpush.msra.mxu0 %v1000
        %1039 = vmatmul.f32.gmra.mxu0 %v1012
        %v1040 = vpop.f32.mrf.mxu0
        %v1041 = vadd.f32 0.0, %v1040
        %1042 = vmatmul.f32.gmra.mxu0 %v1015
        %v1043 = vpop.f32.mrf.mxu0
        %v1044 = vadd.f32 0.0, %v1043
        %1045 = vmatmul.f32.gmra.mxu0 %v1018
        %v1046 = vpop.f32.mrf.mxu0
        %v1047 = vadd.f32 0.0, %v1046
        %1048 = vmatmul.f32.gmra.mxu0 %v1021
        %v1049 = vpop.f32.mrf.mxu0
        %v1050 = vadd.f32 0.0, %v1049
        %1051 = vdwg.mxu0
        %1052 = vrot.lane.b32.xlu0 %v365, 56
        %v1053 = vpop.permute.xlu0 %1052
        %1054 = vrot.lane.b32.xlu0 %v368, 56
        %v1055 = vpop.permute.xlu0 %1054
        %1056 = vrot.lane.b32.xlu0 %v371, 56
        %v1057 = vpop.permute.xlu0 %1056
        %1058 = vrot.lane.b32.xlu0 %v374, 56
        %v1059 = vpop.permute.xlu0 %1058
        %v1065 = vsel %vm310, %v968, 0
        %v1068 = vsel %vm310, %v970, 0
        %v1071 = vsel %vm310, %v972, 0
        %v1074 = vsel %vm310, %v974, 0
        %1076 = vmatpush.msra.mxu0 0.0
        %1077 = vmatpush.msra.mxu0 0.0
        %1078 = vmatpush.msra.mxu0 0.0
        %1079 = vmatpush.msra.mxu0 0.0
        %1080 = vmatpush.msra.mxu0 0.0
        %1081 = vmatpush.msra.mxu0 0.0
        %1082 = vmatpush.msra.mxu0 0.0
        %1083 = vmatpush.msra.mxu0 0.0
        %1084 = vmatpush.msra.mxu0 0.0
        %1085 = vmatpush.msra.mxu0 0.0
        %1086 = vmatpush.msra.mxu0 0.0
        %1087 = vmatpush.msra.mxu0 0.0
        %1088 = vmatpush.msra.mxu0 %v1059
        %1089 = vmatpush.msra.mxu0 %v1057
        %1090 = vmatpush.msra.mxu0 %v1055
        %1091 = vmatpush.msra.mxu0 %v1053
        %1092 = vmatmul.f32.gmra.mxu0 %v1065
        %v1093 = vpop.f32.mrf.mxu0
        %v1094 = vadd.f32 0.0, %v1093
        %1095 = vmatmul.f32.gmra.mxu0 %v1068
        %v1096 = vpop.f32.mrf.mxu0
        %v1097 = vadd.f32 0.0, %v1096
        %1098 = vmatmul.f32.gmra.mxu0 %v1071
        %v1099 = vpop.f32.mrf.mxu0
        %v1100 = vadd.f32 0.0, %v1099
        %1101 = vmatmul.f32.gmra.mxu0 %v1074
        %v1102 = vpop.f32.mrf.mxu0
        %v1103 = vadd.f32 0.0, %v1102
        %1104 = vdwg.mxu0
        %v1105 = vrcp.pop %v977
        %v1106 = vmul.f32 %v977, %v1105
        %v1107 = vsub.f32 1.0, %v1106
        %v1108 = vmul.f32 %v1105, %v1107
        %v1109 = vadd.f32 %v1105, %v1108
        %vm1110 = vweird.f32 %v977
        %vm1111 = vweird.f32 %v1105
        %vm1112 = vmor %vm1110, %vm1111
        %v1113 = vsel %vm1112, %v1105, %v1109
        %v1114 = vand.u32 2147483647, %v977
        %vm1115 = vcmp.eq.f32.partialorder %v1114, 8.507059e+37
        %v1116 = vand.u32 %v977, 2147483648
        %v1117 = vor.u32 1.1754944e-38, %v1116
        %v1118 = vsel %vm1115, %v1117, %v1113
        %v1119 = vmul.f32 %v1041, %v1118
        %v1120 = vrcp.pop %v980
        %v1121 = vmul.f32 %v980, %v1120
        %v1122 = vsub.f32 1.0, %v1121
        %v1123 = vmul.f32 %v1120, %v1122
        %v1124 = vadd.f32 %v1120, %v1123
        %vm1125 = vweird.f32 %v980
        %vm1126 = vweird.f32 %v1120
        %vm1127 = vmor %vm1125, %vm1126
        %v1128 = vsel %vm1127, %v1120, %v1124
        %v1129 = vand.u32 2147483647, %v980
        %vm1130 = vcmp.eq.f32.partialorder %v1129, 8.507059e+37
        %v1131 = vand.u32 %v980, 2147483648
        %v1132 = vor.u32 1.1754944e-38, %v1131
        %v1133 = vsel %vm1130, %v1132, %v1128
        %v1134 = vmul.f32 %v1044, %v1133
        %v1135 = vrcp.pop %v983
        %v1136 = vmul.f32 %v983, %v1135
        %v1137 = vsub.f32 1.0, %v1136
        %v1138 = vmul.f32 %v1135, %v1137
        %v1139 = vadd.f32 %v1135, %v1138
        %vm1140 = vweird.f32 %v983
        %vm1141 = vweird.f32 %v1135
        %vm1142 = vmor %vm1140, %vm1141
        %v1143 = vsel %vm1142, %v1135, %v1139
        %v1144 = vand.u32 2147483647, %v983
        %vm1145 = vcmp.eq.f32.partialorder %v1144, 8.507059e+37
        %v1146 = vand.u32 %v983, 2147483648
        %v1147 = vor.u32 1.1754944e-38, %v1146
        %v1148 = vsel %vm1145, %v1147, %v1143
        %v1149 = vmul.f32 %v1047, %v1148
        %v1150 = vrcp.pop %v986
        %v1151 = vmul.f32 %v986, %v1150
        %v1152 = vsub.f32 1.0, %v1151
        %v1153 = vmul.f32 %v1150, %v1152
        %v1154 = vadd.f32 %v1150, %v1153
        %vm1155 = vweird.f32 %v986
        %vm1156 = vweird.f32 %v1150
        %vm1157 = vmor %vm1155, %vm1156
        %v1158 = vsel %vm1157, %v1150, %v1154
        %v1159 = vand.u32 2147483647, %v986
        %vm1160 = vcmp.eq.f32.partialorder %v1159, 8.507059e+37
        %v1161 = vand.u32 %v986, 2147483648
        %v1162 = vor.u32 1.1754944e-38, %v1161
        %v1163 = vsel %vm1160, %v1162, %v1158
        %v1164 = vmul.f32 %v1050, %v1163
        %v1165 = vrcp.pop %v989
        %v1166 = vmul.f32 %v989, %v1165
        %v1167 = vsub.f32 1.0, %v1166
        %v1168 = vmul.f32 %v1165, %v1167
        %v1169 = vadd.f32 %v1165, %v1168
        %vm1170 = vweird.f32 %v989
        %vm1171 = vweird.f32 %v1165
        %vm1172 = vmor %vm1170, %vm1171
        %v1173 = vsel %vm1172, %v1165, %v1169
        %v1174 = vand.u32 2147483647, %v989
        %vm1175 = vcmp.eq.f32.partialorder %v1174, 8.507059e+37
        %v1176 = vand.u32 %v989, 2147483648
        %v1177 = vor.u32 1.1754944e-38, %v1176
        %v1178 = vsel %vm1175, %v1177, %v1173
        %v1179 = vmul.f32 %v1094, %v1178
        %v1180 = vrcp.pop %v992
        %v1181 = vmul.f32 %v992, %v1180
        %v1182 = vsub.f32 1.0, %v1181
        %v1183 = vmul.f32 %v1180, %v1182
        %v1184 = vadd.f32 %v1180, %v1183
        %vm1185 = vweird.f32 %v992
        %vm1186 = vweird.f32 %v1180
        %vm1187 = vmor %vm1185, %vm1186
        %v1188 = vsel %vm1187, %v1180, %v1184
        %v1189 = vand.u32 2147483647, %v992
        %vm1190 = vcmp.eq.f32.partialorder %v1189, 8.507059e+37
        %v1191 = vand.u32 %v992, 2147483648
        %v1192 = vor.u32 1.1754944e-38, %v1191
        %v1193 = vsel %vm1190, %v1192, %v1188
        %v1194 = vmul.f32 %v1097, %v1193
        %v1195 = vrcp.pop %v995
        %v1196 = vmul.f32 %v995, %v1195
        %v1197 = vsub.f32 1.0, %v1196
        %v1198 = vmul.f32 %v1195, %v1197
        %v1199 = vadd.f32 %v1195, %v1198
        %vm1200 = vweird.f32 %v995
        %vm1201 = vweird.f32 %v1195
        %vm1202 = vmor %vm1200, %vm1201
        %v1203 = vsel %vm1202, %v1195, %v1199
        %v1204 = vand.u32 2147483647, %v995
        %vm1205 = vcmp.eq.f32.partialorder %v1204, 8.507059e+37
        %v1206 = vand.u32 %v995, 2147483648
        %v1207 = vor.u32 1.1754944e-38, %v1206
        %v1208 = vsel %vm1205, %v1207, %v1203
        %v1209 = vmul.f32 %v1100, %v1208
        %v1210 = vrcp.pop %v998
        %v1211 = vmul.f32 %v998, %v1210
        %v1212 = vsub.f32 1.0, %v1211
        %v1213 = vmul.f32 %v1210, %v1212
        %v1214 = vadd.f32 %v1210, %v1213
        %vm1215 = vweird.f32 %v998
        %vm1216 = vweird.f32 %v1210
        %vm1217 = vmor %vm1215, %vm1216
        %v1218 = vsel %vm1217, %v1210, %v1214
        %v1219 = vand.u32 2147483647, %v998
        %vm1220 = vcmp.eq.f32.partialorder %v1219, 8.507059e+37
        %v1221 = vand.u32 %v998, 2147483648
        %v1222 = vor.u32 1.1754944e-38, %v1221
        %v1223 = vsel %vm1220, %v1222, %v1218
        %v1224 = vmul.f32 %v1103, %v1223
        %1233 = vrot.lane.b32.xlu0 %v1119, 8
        %v1234 = vpop.permute.xlu0 %1233
        %1235 = vrot.lane.b32.xlu0 %v1134, 8
        %v1236 = vpop.permute.xlu0 %1235
        %1237 = vrot.lane.b32.xlu0 %v1149, 8
        %v1238 = vpop.permute.xlu0 %1237
        %1239 = vrot.lane.b32.xlu0 %v1164, 8
        %v1240 = vpop.permute.xlu0 %1239
        %1241 = vrot.lane.b32.xlu0 %v1179, 8
        %v1242 = vpop.permute.xlu0 %1241
        %1243 = vrot.lane.b32.xlu0 %v1194, 8
        %v1244 = vpop.permute.xlu0 %1243
        %1245 = vrot.lane.b32.xlu0 %v1209, 8
        %v1246 = vpop.permute.xlu0 %1245
        %1247 = vrot.lane.b32.xlu0 %v1224, 8
        %v1248 = vpop.permute.xlu0 %1247
        %vm1257 = vcmask 130112
        %1258 = vst.msk [vmem:[#allocation2] sm:$0xff] %vm1257, %v1234
        %1259 = vst.msk [vmem:[#allocation2 + $0x8] sm:$0xff] %vm1257, %v1236
        %1260 = vst.msk [vmem:[#allocation2 + $0x10] sm:$0xff] %vm1257, %v1238
        %1261 = vst.msk [vmem:[#allocation2 + $0x18] sm:$0xff] %vm1257, %v1240
        %1262 = vst.msk [vmem:[#allocation2 + $0x20] sm:$0xff] %vm1257, %v1242
        %1263 = vst.msk [vmem:[#allocation2 + $0x28] sm:$0xff] %vm1257, %v1244
        %1264 = vst.msk [vmem:[#allocation2 + $0x30] sm:$0xff] %vm1257, %v1246
        %1265 = vst.msk [vmem:[#allocation2 + $0x38] sm:$0xff] %vm1257, %v1248
        %1266 = vrot.lane.b32.xlu0 %v353, 112
        %v1267 = vpop.permute.xlu0 %1266
        %1268 = vrot.lane.b32.xlu0 %v356, 112
        %v1269 = vpop.permute.xlu0 %1268
        %1270 = vrot.lane.b32.xlu0 %v359, 112
        %v1271 = vpop.permute.xlu0 %1270
        %1272 = vrot.lane.b32.xlu0 %v362, 112
        %v1273 = vpop.permute.xlu0 %1272
        %1274 = vrot.lane.b32.xlu0 %v353, 80
        %v1275 = vpop.permute.xlu0 %1274
        %1276 = vrot.lane.b32.xlu0 %v356, 80
        %v1277 = vpop.permute.xlu0 %1276
        %1278 = vrot.lane.b32.xlu0 %v359, 80
        %v1279 = vpop.permute.xlu0 %1278
        %1280 = vrot.lane.b32.xlu0 %v362, 80
        %v1281 = vpop.permute.xlu0 %1280
        %v1282 = vsel %vm396, %v1267, 0
        %v1284 = vsel %vm396, %v1269, 0
        %v1286 = vsel %vm396, %v1271, 0
        %v1288 = vsel %vm396, %v1273, 0
        %v1290 = vsel %vm396, %v1275, 0
        %v1292 = vsel %vm396, %v1277, 0
        %v1294 = vsel %vm396, %v1279, 0
        %v1296 = vsel %vm396, %v1281, 0
        %1298 = vmatpush.xpose.msra.mxu0 0.0
        %1299 = vmatpush.xpose.msra.mxu0 0.0
        %1300 = vmatpush.xpose.msra.mxu0 0.0
        %1301 = vmatpush.xpose.msra.mxu0 0.0
        %1302 = vmatpush.xpose.msra.mxu0 0.0
        %1303 = vmatpush.xpose.msra.mxu0 0.0
        %1304 = vmatpush.xpose.msra.mxu0 0.0
        %1305 = vmatpush.xpose.msra.mxu0 0.0
        %1306 = vmatpush.xpose.msra.mxu0 0.0
        %1307 = vmatpush.xpose.msra.mxu0 0.0
        %1308 = vmatpush.xpose.msra.mxu0 0.0
        %1309 = vmatpush.xpose.msra.mxu0 0.0
        %1310 = vmatpush.xpose.msra.mxu0 %v1296
        %1311 = vmatpush.xpose.msra.mxu0 %v1294
        %1312 = vmatpush.xpose.msra.mxu0 %v1292
        %1313 = vmatpush.xpose.msra.mxu0 %v1290
        %1314 = vmatmul.f32.gmra.mxu0 %v1282
        %v1315 = vpop.f32.mrf.mxu0
        %v1316 = vadd.f32 %v376, %v1315
        %1317 = vmatmul.f32.gmra.mxu0 %v1284
        %v1318 = vpop.f32.mrf.mxu0
        %v1319 = vadd.f32 %v377, %v1318
        %1320 = vmatmul.f32.gmra.mxu0 %v1286
        %v1321 = vpop.f32.mrf.mxu0
        %v1322 = vadd.f32 %v378, %v1321
        %1323 = vmatmul.f32.gmra.mxu0 %v1288
        %v1324 = vpop.f32.mrf.mxu0
        %v1325 = vadd.f32 %v379, %v1324
        %1326 = vdwg.mxu0
        %1327 = vrot.lane.b32.xlu0 %v365, 112
        %v1328 = vpop.permute.xlu0 %1327
        %1329 = vrot.lane.b32.xlu0 %v368, 112
        %v1330 = vpop.permute.xlu0 %1329
        %1331 = vrot.lane.b32.xlu0 %v371, 112
        %v1332 = vpop.permute.xlu0 %1331
        %1333 = vrot.lane.b32.xlu0 %v374, 112
        %v1334 = vpop.permute.xlu0 %1333
        %1335 = vrot.lane.b32.xlu0 %v365, 80
        %v1336 = vpop.permute.xlu0 %1335
        %1337 = vrot.lane.b32.xlu0 %v368, 80
        %v1338 = vpop.permute.xlu0 %1337
        %1339 = vrot.lane.b32.xlu0 %v371, 80
        %v1340 = vpop.permute.xlu0 %1339
        %1341 = vrot.lane.b32.xlu0 %v374, 80
        %v1342 = vpop.permute.xlu0 %1341
        %v1343 = vsel %vm396, %v1328, 0
        %v1345 = vsel %vm396, %v1330, 0
        %v1347 = vsel %vm396, %v1332, 0
        %v1349 = vsel %vm396, %v1334, 0
        %v1351 = vsel %vm396, %v1336, 0
        %v1353 = vsel %vm396, %v1338, 0
        %v1355 = vsel %vm396, %v1340, 0
        %v1357 = vsel %vm396, %v1342, 0
        %1359 = vmatpush.xpose.msra.mxu0 0.0
        %1360 = vmatpush.xpose.msra.mxu0 0.0
        %1361 = vmatpush.xpose.msra.mxu0 0.0
        %1362 = vmatpush.xpose.msra.mxu0 0.0
        %1363 = vmatpush.xpose.msra.mxu0 0.0
        %1364 = vmatpush.xpose.msra.mxu0 0.0
        %1365 = vmatpush.xpose.msra.mxu0 0.0
        %1366 = vmatpush.xpose.msra.mxu0 0.0
        %1367 = vmatpush.xpose.msra.mxu0 0.0
        %1368 = vmatpush.xpose.msra.mxu0 0.0
        %1369 = vmatpush.xpose.msra.mxu0 0.0
        %1370 = vmatpush.xpose.msra.mxu0 0.0
        %1371 = vmatpush.xpose.msra.mxu0 %v1357
        %1372 = vmatpush.xpose.msra.mxu0 %v1355
        %1373 = vmatpush.xpose.msra.mxu0 %v1353
        %1374 = vmatpush.xpose.msra.mxu0 %v1351
        %1375 = vmatmul.f32.gmra.mxu0 %v1343
        %v1376 = vpop.f32.mrf.mxu0
        %v1377 = vadd.f32 %v380, %v1376
        %1378 = vmatmul.f32.gmra.mxu0 %v1345
        %v1379 = vpop.f32.mrf.mxu0
        %v1380 = vadd.f32 %v381, %v1379
        %1381 = vmatmul.f32.gmra.mxu0 %v1347
        %v1382 = vpop.f32.mrf.mxu0
        %v1383 = vadd.f32 %v382, %v1382
        %1384 = vmatmul.f32.gmra.mxu0 %v1349
        %v1385 = vpop.f32.mrf.mxu0
        %v1386 = vadd.f32 %v383, %v1385
        %1387 = vdwg.mxu0
        %v1388 = vsel %vm310, %v1316, -inf
        %1389 = vmax.xlane.f32.xlu0 %v1388
        %v1390 = vpop.xlane.xlu0 %1389
        %v1391 = vsel %vm310, %v1319, -inf
        %1392 = vmax.xlane.f32.xlu0 %v1391
        %v1393 = vpop.xlane.xlu0 %1392
        %v1394 = vsel %vm310, %v1322, -inf
        %1395 = vmax.xlane.f32.xlu0 %v1394
        %v1396 = vpop.xlane.xlu0 %1395
        %v1397 = vsel %vm310, %v1325, -inf
        %1398 = vmax.xlane.f32.xlu0 %v1397
        %v1399 = vpop.xlane.xlu0 %1398
        %v1400 = vsel %vm310, %v1377, -inf
        %1401 = vmax.xlane.f32.xlu0 %v1400
        %v1402 = vpop.xlane.xlu0 %1401
        %v1403 = vsel %vm310, %v1380, -inf
        %1404 = vmax.xlane.f32.xlu0 %v1403
        %v1405 = vpop.xlane.xlu0 %1404
        %v1406 = vsel %vm310, %v1383, -inf
        %1407 = vmax.xlane.f32.xlu0 %v1406
        %v1408 = vpop.xlane.xlu0 %1407
        %v1409 = vsel %vm310, %v1386, -inf
        %1410 = vmax.xlane.f32.xlu0 %v1409
        %v1411 = vpop.xlane.xlu0 %1410
        %v1412 = vsub.f32 %v1316, %v1390
        %v1413 = vsub.f32 %v1319, %v1393
        %v1414 = vsub.f32 %v1322, %v1396
        %v1415 = vsub.f32 %v1325, %v1399
        %v1416 = vsub.f32 %v1377, %v1402
        %v1417 = vsub.f32 %v1380, %v1405
        %v1418 = vsub.f32 %v1383, %v1408
        %v1419 = vsub.f32 %v1386, %v1411
        %v1420 = vmul.f32 %v1412, 1.442695
        %v1421 = vpow.pop %v1420
        %v1422 = vmul.f32 %v1413, 1.442695
        %v1423 = vpow.pop %v1422
        %v1424 = vmul.f32 %v1414, 1.442695
        %v1425 = vpow.pop %v1424
        %v1426 = vmul.f32 %v1415, 1.442695
        %v1427 = vpow.pop %v1426
        %v1428 = vmul.f32 %v1416, 1.442695
        %v1429 = vpow.pop %v1428
        %v1430 = vmul.f32 %v1417, 1.442695
        %v1431 = vpow.pop %v1430
        %v1432 = vmul.f32 %v1418, 1.442695
        %v1433 = vpow.pop %v1432
        %v1434 = vmul.f32 %v1419, 1.442695
        %v1435 = vpow.pop %v1434
        %v1436 = vsel %vm310, %v1421, 0.0
        %1437 = vadd.xlane.f32.xlu0 %v1436
        %v1438 = vpop.xlane.xlu0 %1437
        %v1439 = vsel %vm310, %v1423, 0.0
        %1440 = vadd.xlane.f32.xlu0 %v1439
        %v1441 = vpop.xlane.xlu0 %1440
        %v1442 = vsel %vm310, %v1425, 0.0
        %1443 = vadd.xlane.f32.xlu0 %v1442
        %v1444 = vpop.xlane.xlu0 %1443
        %v1445 = vsel %vm310, %v1427, 0.0
        %1446 = vadd.xlane.f32.xlu0 %v1445
        %v1447 = vpop.xlane.xlu0 %1446
        %v1448 = vsel %vm310, %v1429, 0.0
        %1449 = vadd.xlane.f32.xlu0 %v1448
        %v1450 = vpop.xlane.xlu0 %1449
        %v1451 = vsel %vm310, %v1431, 0.0
        %1452 = vadd.xlane.f32.xlu0 %v1451
        %v1453 = vpop.xlane.xlu0 %1452
        %v1454 = vsel %vm310, %v1433, 0.0
        %1455 = vadd.xlane.f32.xlu0 %v1454
        %v1456 = vpop.xlane.xlu0 %1455
        %v1457 = vsel %vm310, %v1435, 0.0
        %1458 = vadd.xlane.f32.xlu0 %v1457
        %v1459 = vpop.xlane.xlu0 %1458
        %1460 = vrot.lane.b32.xlu0 %v353, 48
        %v1461 = vpop.permute.xlu0 %1460
        %1462 = vrot.lane.b32.xlu0 %v356, 48
        %v1463 = vpop.permute.xlu0 %1462
        %1464 = vrot.lane.b32.xlu0 %v359, 48
        %v1465 = vpop.permute.xlu0 %1464
        %1466 = vrot.lane.b32.xlu0 %v362, 48
        %v1467 = vpop.permute.xlu0 %1466
        %v1473 = vsel %vm310, %v1421, 0
        %v1476 = vsel %vm310, %v1423, 0
        %v1479 = vsel %vm310, %v1425, 0
        %v1482 = vsel %vm310, %v1427, 0
        %1484 = vmatpush.msra.mxu0 0.0
        %1485 = vmatpush.msra.mxu0 0.0
        %1486 = vmatpush.msra.mxu0 0.0
        %1487 = vmatpush.msra.mxu0 0.0
        %1488 = vmatpush.msra.mxu0 0.0
        %1489 = vmatpush.msra.mxu0 0.0
        %1490 = vmatpush.msra.mxu0 0.0
        %1491 = vmatpush.msra.mxu0 0.0
        %1492 = vmatpush.msra.mxu0 0.0
        %1493 = vmatpush.msra.mxu0 0.0
        %1494 = vmatpush.msra.mxu0 0.0
        %1495 = vmatpush.msra.mxu0 0.0
        %1496 = vmatpush.msra.mxu0 %v1467
        %1497 = vmatpush.msra.mxu0 %v1465
        %1498 = vmatpush.msra.mxu0 %v1463
        %1499 = vmatpush.msra.mxu0 %v1461
        %1500 = vmatmul.f32.gmra.mxu0 %v1473
        %v1501 = vpop.f32.mrf.mxu0
        %v1502 = vadd.f32 0.0, %v1501
        %1503 = vmatmul.f32.gmra.mxu0 %v1476
        %v1504 = vpop.f32.mrf.mxu0
        %v1505 = vadd.f32 0.0, %v1504
        %1506 = vmatmul.f32.gmra.mxu0 %v1479
        %v1507 = vpop.f32.mrf.mxu0
        %v1508 = vadd.f32 0.0, %v1507
        %1509 = vmatmul.f32.gmra.mxu0 %v1482
        %v1510 = vpop.f32.mrf.mxu0
        %v1511 = vadd.f32 0.0, %v1510
        %1512 = vdwg.mxu0
        %1513 = vrot.lane.b32.xlu0 %v365, 48
        %v1514 = vpop.permute.xlu0 %1513
        %1515 = vrot.lane.b32.xlu0 %v368, 48
        %v1516 = vpop.permute.xlu0 %1515
        %1517 = vrot.lane.b32.xlu0 %v371, 48
        %v1518 = vpop.permute.xlu0 %1517
        %1519 = vrot.lane.b32.xlu0 %v374, 48
        %v1520 = vpop.permute.xlu0 %1519
        %v1526 = vsel %vm310, %v1429, 0
        %v1529 = vsel %vm310, %v1431, 0
        %v1532 = vsel %vm310, %v1433, 0
        %v1535 = vsel %vm310, %v1435, 0
        %1537 = vmatpush.msra.mxu0 0.0
        %1538 = vmatpush.msra.mxu0 0.0
        %1539 = vmatpush.msra.mxu0 0.0
        %1540 = vmatpush.msra.mxu0 0.0
        %1541 = vmatpush.msra.mxu0 0.0
        %1542 = vmatpush.msra.mxu0 0.0
        %1543 = vmatpush.msra.mxu0 0.0
        %1544 = vmatpush.msra.mxu0 0.0
        %1545 = vmatpush.msra.mxu0 0.0
        %1546 = vmatpush.msra.mxu0 0.0
        %1547 = vmatpush.msra.mxu0 0.0
        %1548 = vmatpush.msra.mxu0 0.0
        %1549 = vmatpush.msra.mxu0 %v1520
        %1550 = vmatpush.msra.mxu0 %v1518
        %1551 = vmatpush.msra.mxu0 %v1516
        %1552 = vmatpush.msra.mxu0 %v1514
        %1553 = vmatmul.f32.gmra.mxu0 %v1526
        %v1554 = vpop.f32.mrf.mxu0
        %v1555 = vadd.f32 0.0, %v1554
        %1556 = vmatmul.f32.gmra.mxu0 %v1529
        %v1557 = vpop.f32.mrf.mxu0
        %v1558 = vadd.f32 0.0, %v1557
        %1559 = vmatmul.f32.gmra.mxu0 %v1532
        %v1560 = vpop.f32.mrf.mxu0
        %v1561 = vadd.f32 0.0, %v1560
        %1562 = vmatmul.f32.gmra.mxu0 %v1535
        %v1563 = vpop.f32.mrf.mxu0
        %v1564 = vadd.f32 0.0, %v1563
        %1565 = vdwg.mxu0
        %v1566 = vrcp.pop %v1438
        %v1567 = vmul.f32 %v1438, %v1566
        %v1568 = vsub.f32 1.0, %v1567
        %v1569 = vmul.f32 %v1566, %v1568
        %v1570 = vadd.f32 %v1566, %v1569
        %vm1571 = vweird.f32 %v1438
        %vm1572 = vweird.f32 %v1566
        %vm1573 = vmor %vm1571, %vm1572
        %v1574 = vsel %vm1573, %v1566, %v1570
        %v1575 = vand.u32 2147483647, %v1438
        %vm1576 = vcmp.eq.f32.partialorder %v1575, 8.507059e+37
        %v1577 = vand.u32 %v1438, 2147483648
        %v1578 = vor.u32 1.1754944e-38, %v1577
        %v1579 = vsel %vm1576, %v1578, %v1574
        %v1580 = vmul.f32 %v1502, %v1579
        %v1581 = vrcp.pop %v1441
        %v1582 = vmul.f32 %v1441, %v1581
        %v1583 = vsub.f32 1.0, %v1582
        %v1584 = vmul.f32 %v1581, %v1583
        %v1585 = vadd.f32 %v1581, %v1584
        %vm1586 = vweird.f32 %v1441
        %vm1587 = vweird.f32 %v1581
        %vm1588 = vmor %vm1586, %vm1587
        %v1589 = vsel %vm1588, %v1581, %v1585
        %v1590 = vand.u32 2147483647, %v1441
        %vm1591 = vcmp.eq.f32.partialorder %v1590, 8.507059e+37
        %v1592 = vand.u32 %v1441, 2147483648
        %v1593 = vor.u32 1.1754944e-38, %v1592
        %v1594 = vsel %vm1591, %v1593, %v1589
        %v1595 = vmul.f32 %v1505, %v1594
        %v1596 = vrcp.pop %v1444
        %v1597 = vmul.f32 %v1444, %v1596
        %v1598 = vsub.f32 1.0, %v1597
        %v1599 = vmul.f32 %v1596, %v1598
        %v1600 = vadd.f32 %v1596, %v1599
        %vm1601 = vweird.f32 %v1444
        %vm1602 = vweird.f32 %v1596
        %vm1603 = vmor %vm1601, %vm1602
        %v1604 = vsel %vm1603, %v1596, %v1600
        %v1605 = vand.u32 2147483647, %v1444
        %vm1606 = vcmp.eq.f32.partialorder %v1605, 8.507059e+37
        %v1607 = vand.u32 %v1444, 2147483648
        %v1608 = vor.u32 1.1754944e-38, %v1607
        %v1609 = vsel %vm1606, %v1608, %v1604
        %v1610 = vmul.f32 %v1508, %v1609
        %v1611 = vrcp.pop %v1447
        %v1612 = vmul.f32 %v1447, %v1611
        %v1613 = vsub.f32 1.0, %v1612
        %v1614 = vmul.f32 %v1611, %v1613
        %v1615 = vadd.f32 %v1611, %v1614
        %vm1616 = vweird.f32 %v1447
        %vm1617 = vweird.f32 %v1611
        %vm1618 = vmor %vm1616, %vm1617
        %v1619 = vsel %vm1618, %v1611, %v1615
        %v1620 = vand.u32 2147483647, %v1447
        %vm1621 = vcmp.eq.f32.partialorder %v1620, 8.507059e+37
        %v1622 = vand.u32 %v1447, 2147483648
        %v1623 = vor.u32 1.1754944e-38, %v1622
        %v1624 = vsel %vm1621, %v1623, %v1619
        %v1625 = vmul.f32 %v1511, %v1624
        %v1626 = vrcp.pop %v1450
        %v1627 = vmul.f32 %v1450, %v1626
        %v1628 = vsub.f32 1.0, %v1627
        %v1629 = vmul.f32 %v1626, %v1628
        %v1630 = vadd.f32 %v1626, %v1629
        %vm1631 = vweird.f32 %v1450
        %vm1632 = vweird.f32 %v1626
        %vm1633 = vmor %vm1631, %vm1632
        %v1634 = vsel %vm1633, %v1626, %v1630
        %v1635 = vand.u32 2147483647, %v1450
        %vm1636 = vcmp.eq.f32.partialorder %v1635, 8.507059e+37
        %v1637 = vand.u32 %v1450, 2147483648
        %v1638 = vor.u32 1.1754944e-38, %v1637
        %v1639 = vsel %vm1636, %v1638, %v1634
        %v1640 = vmul.f32 %v1555, %v1639
        %v1641 = vrcp.pop %v1453
        %v1642 = vmul.f32 %v1453, %v1641
        %v1643 = vsub.f32 1.0, %v1642
        %v1644 = vmul.f32 %v1641, %v1643
        %v1645 = vadd.f32 %v1641, %v1644
        %vm1646 = vweird.f32 %v1453
        %vm1647 = vweird.f32 %v1641
        %vm1648 = vmor %vm1646, %vm1647
        %v1649 = vsel %vm1648, %v1641, %v1645
        %v1650 = vand.u32 2147483647, %v1453
        %vm1651 = vcmp.eq.f32.partialorder %v1650, 8.507059e+37
        %v1652 = vand.u32 %v1453, 2147483648
        %v1653 = vor.u32 1.1754944e-38, %v1652
        %v1654 = vsel %vm1651, %v1653, %v1649
        %v1655 = vmul.f32 %v1558, %v1654
        %v1656 = vrcp.pop %v1456
        %v1657 = vmul.f32 %v1456, %v1656
        %v1658 = vsub.f32 1.0, %v1657
        %v1659 = vmul.f32 %v1656, %v1658
        %v1660 = vadd.f32 %v1656, %v1659
        %vm1661 = vweird.f32 %v1456
        %vm1662 = vweird.f32 %v1656
        %vm1663 = vmor %vm1661, %vm1662
        %v1664 = vsel %vm1663, %v1656, %v1660
        %v1665 = vand.u32 2147483647, %v1456
        %vm1666 = vcmp.eq.f32.partialorder %v1665, 8.507059e+37
        %v1667 = vand.u32 %v1456, 2147483648
        %v1668 = vor.u32 1.1754944e-38, %v1667
        %v1669 = vsel %vm1666, %v1668, %v1664
        %v1670 = vmul.f32 %v1561, %v1669
        %v1671 = vrcp.pop %v1459
        %v1672 = vmul.f32 %v1459, %v1671
        %v1673 = vsub.f32 1.0, %v1672
        %v1674 = vmul.f32 %v1671, %v1673
        %v1675 = vadd.f32 %v1671, %v1674
        %vm1676 = vweird.f32 %v1459
        %vm1677 = vweird.f32 %v1671
        %vm1678 = vmor %vm1676, %vm1677
        %v1679 = vsel %vm1678, %v1671, %v1675
        %v1680 = vand.u32 2147483647, %v1459
        %vm1681 = vcmp.eq.f32.partialorder %v1680, 8.507059e+37
        %v1682 = vand.u32 %v1459, 2147483648
        %v1683 = vor.u32 1.1754944e-38, %v1682
        %v1684 = vsel %vm1681, %v1683, %v1679
        %v1685 = vmul.f32 %v1564, %v1684
        %1694 = vrot.lane.b32.xlu0 %v1580, 16
        %v1695 = vpop.permute.xlu0 %1694
        %1696 = vrot.lane.b32.xlu0 %v1595, 16
        %v1697 = vpop.permute.xlu0 %1696
        %1698 = vrot.lane.b32.xlu0 %v1610, 16
        %v1699 = vpop.permute.xlu0 %1698
        %1700 = vrot.lane.b32.xlu0 %v1625, 16
        %v1701 = vpop.permute.xlu0 %1700
        %1702 = vrot.lane.b32.xlu0 %v1640, 16
        %v1703 = vpop.permute.xlu0 %1702
        %1704 = vrot.lane.b32.xlu0 %v1655, 16
        %v1705 = vpop.permute.xlu0 %1704
        %1706 = vrot.lane.b32.xlu0 %v1670, 16
        %v1707 = vpop.permute.xlu0 %1706
        %1708 = vrot.lane.b32.xlu0 %v1685, 16
        %v1709 = vpop.permute.xlu0 %1708
        %vm1718 = vcmask 195712
        %1719 = vst.msk [vmem:[#allocation2] sm:$0xff] %vm1718, %v1695
        %1720 = vst.msk [vmem:[#allocation2 + $0x8] sm:$0xff] %vm1718, %v1697
        %1721 = vst.msk [vmem:[#allocation2 + $0x10] sm:$0xff] %vm1718, %v1699
        %1722 = vst.msk [vmem:[#allocation2 + $0x18] sm:$0xff] %vm1718, %v1701
        %1723 = vst.msk [vmem:[#allocation2 + $0x20] sm:$0xff] %vm1718, %v1703
        %1724 = vst.msk [vmem:[#allocation2 + $0x28] sm:$0xff] %vm1718, %v1705
        %1725 = vst.msk [vmem:[#allocation2 + $0x30] sm:$0xff] %vm1718, %v1707
        %1726 = vst.msk [vmem:[#allocation2 + $0x38] sm:$0xff] %vm1718, %v1709
        %1727 = vrot.lane.b32.xlu0 %v353, 104
        %v1728 = vpop.permute.xlu0 %1727
        %1729 = vrot.lane.b32.xlu0 %v356, 104
        %v1730 = vpop.permute.xlu0 %1729
        %1731 = vrot.lane.b32.xlu0 %v359, 104
        %v1732 = vpop.permute.xlu0 %1731
        %1733 = vrot.lane.b32.xlu0 %v362, 104
        %v1734 = vpop.permute.xlu0 %1733
        %1735 = vrot.lane.b32.xlu0 %v353, 72
        %v1736 = vpop.permute.xlu0 %1735
        %1737 = vrot.lane.b32.xlu0 %v356, 72
        %v1738 = vpop.permute.xlu0 %1737
        %1739 = vrot.lane.b32.xlu0 %v359, 72
        %v1740 = vpop.permute.xlu0 %1739
        %1741 = vrot.lane.b32.xlu0 %v362, 72
        %v1742 = vpop.permute.xlu0 %1741
        %v1743 = vsel %vm396, %v1728, 0
        %v1745 = vsel %vm396, %v1730, 0
        %v1747 = vsel %vm396, %v1732, 0
        %v1749 = vsel %vm396, %v1734, 0
        %v1751 = vsel %vm396, %v1736, 0
        %v1753 = vsel %vm396, %v1738, 0
        %v1755 = vsel %vm396, %v1740, 0
        %v1757 = vsel %vm396, %v1742, 0
        %1759 = vmatpush.xpose.msra.mxu0 0.0
        %1760 = vmatpush.xpose.msra.mxu0 0.0
        %1761 = vmatpush.xpose.msra.mxu0 0.0
        %1762 = vmatpush.xpose.msra.mxu0 0.0
        %1763 = vmatpush.xpose.msra.mxu0 0.0
        %1764 = vmatpush.xpose.msra.mxu0 0.0
        %1765 = vmatpush.xpose.msra.mxu0 0.0
        %1766 = vmatpush.xpose.msra.mxu0 0.0
        %1767 = vmatpush.xpose.msra.mxu0 0.0
        %1768 = vmatpush.xpose.msra.mxu0 0.0
        %1769 = vmatpush.xpose.msra.mxu0 0.0
        %1770 = vmatpush.xpose.msra.mxu0 0.0
        %1771 = vmatpush.xpose.msra.mxu0 %v1757
        %1772 = vmatpush.xpose.msra.mxu0 %v1755
        %1773 = vmatpush.xpose.msra.mxu0 %v1753
        %1774 = vmatpush.xpose.msra.mxu0 %v1751
        %1775 = vmatmul.f32.gmra.mxu0 %v1743
        %v1776 = vpop.f32.mrf.mxu0
        %v1777 = vadd.f32 %v376, %v1776
        %1778 = vmatmul.f32.gmra.mxu0 %v1745
        %v1779 = vpop.f32.mrf.mxu0
        %v1780 = vadd.f32 %v377, %v1779
        %1781 = vmatmul.f32.gmra.mxu0 %v1747
        %v1782 = vpop.f32.mrf.mxu0
        %v1783 = vadd.f32 %v378, %v1782
        %1784 = vmatmul.f32.gmra.mxu0 %v1749
        %v1785 = vpop.f32.mrf.mxu0
        %v1786 = vadd.f32 %v379, %v1785
        %1787 = vdwg.mxu0
        %1788 = vrot.lane.b32.xlu0 %v365, 104
        %v1789 = vpop.permute.xlu0 %1788
        %1790 = vrot.lane.b32.xlu0 %v368, 104
        %v1791 = vpop.permute.xlu0 %1790
        %1792 = vrot.lane.b32.xlu0 %v371, 104
        %v1793 = vpop.permute.xlu0 %1792
        %1794 = vrot.lane.b32.xlu0 %v374, 104
        %v1795 = vpop.permute.xlu0 %1794
        %1796 = vrot.lane.b32.xlu0 %v365, 72
        %v1797 = vpop.permute.xlu0 %1796
        %1798 = vrot.lane.b32.xlu0 %v368, 72
        %v1799 = vpop.permute.xlu0 %1798
        %1800 = vrot.lane.b32.xlu0 %v371, 72
        %v1801 = vpop.permute.xlu0 %1800
        %1802 = vrot.lane.b32.xlu0 %v374, 72
        %v1803 = vpop.permute.xlu0 %1802
        %v1804 = vsel %vm396, %v1789, 0
        %v1806 = vsel %vm396, %v1791, 0
        %v1808 = vsel %vm396, %v1793, 0
        %v1810 = vsel %vm396, %v1795, 0
        %v1812 = vsel %vm396, %v1797, 0
        %v1814 = vsel %vm396, %v1799, 0
        %v1816 = vsel %vm396, %v1801, 0
        %v1818 = vsel %vm396, %v1803, 0
        %1820 = vmatpush.xpose.msra.mxu0 0.0
        %1821 = vmatpush.xpose.msra.mxu0 0.0
        %1822 = vmatpush.xpose.msra.mxu0 0.0
        %1823 = vmatpush.xpose.msra.mxu0 0.0
        %1824 = vmatpush.xpose.msra.mxu0 0.0
        %1825 = vmatpush.xpose.msra.mxu0 0.0
        %1826 = vmatpush.xpose.msra.mxu0 0.0
        %1827 = vmatpush.xpose.msra.mxu0 0.0
        %1828 = vmatpush.xpose.msra.mxu0 0.0
        %1829 = vmatpush.xpose.msra.mxu0 0.0
        %1830 = vmatpush.xpose.msra.mxu0 0.0
        %1831 = vmatpush.xpose.msra.mxu0 0.0
        %1832 = vmatpush.xpose.msra.mxu0 %v1818
        %1833 = vmatpush.xpose.msra.mxu0 %v1816
        %1834 = vmatpush.xpose.msra.mxu0 %v1814
        %1835 = vmatpush.xpose.msra.mxu0 %v1812
        %1836 = vmatmul.f32.gmra.mxu0 %v1804
        %v1837 = vpop.f32.mrf.mxu0
        %v1838 = vadd.f32 %v380, %v1837
        %1839 = vmatmul.f32.gmra.mxu0 %v1806
        %v1840 = vpop.f32.mrf.mxu0
        %v1841 = vadd.f32 %v381, %v1840
        %1842 = vmatmul.f32.gmra.mxu0 %v1808
        %v1843 = vpop.f32.mrf.mxu0
        %v1844 = vadd.f32 %v382, %v1843
        %1845 = vmatmul.f32.gmra.mxu0 %v1810
        %v1846 = vpop.f32.mrf.mxu0
        %v1847 = vadd.f32 %v383, %v1846
        %1848 = vdwg.mxu0
        %v1849 = vsel %vm310, %v1777, -inf
        %1850 = vmax.xlane.f32.xlu0 %v1849
        %v1851 = vpop.xlane.xlu0 %1850
        %v1852 = vsel %vm310, %v1780, -inf
        %1853 = vmax.xlane.f32.xlu0 %v1852
        %v1854 = vpop.xlane.xlu0 %1853
        %v1855 = vsel %vm310, %v1783, -inf
        %1856 = vmax.xlane.f32.xlu0 %v1855
        %v1857 = vpop.xlane.xlu0 %1856
        %v1858 = vsel %vm310, %v1786, -inf
        %1859 = vmax.xlane.f32.xlu0 %v1858
        %v1860 = vpop.xlane.xlu0 %1859
        %v1861 = vsel %vm310, %v1838, -inf
        %1862 = vmax.xlane.f32.xlu0 %v1861
        %v1863 = vpop.xlane.xlu0 %1862
        %v1864 = vsel %vm310, %v1841, -inf
        %1865 = vmax.xlane.f32.xlu0 %v1864
        %v1866 = vpop.xlane.xlu0 %1865
        %v1867 = vsel %vm310, %v1844, -inf
        %1868 = vmax.xlane.f32.xlu0 %v1867
        %v1869 = vpop.xlane.xlu0 %1868
        %v1870 = vsel %vm310, %v1847, -inf
        %1871 = vmax.xlane.f32.xlu0 %v1870
        %v1872 = vpop.xlane.xlu0 %1871
        %v1873 = vsub.f32 %v1777, %v1851
        %v1874 = vsub.f32 %v1780, %v1854
        %v1875 = vsub.f32 %v1783, %v1857
        %v1876 = vsub.f32 %v1786, %v1860
        %v1877 = vsub.f32 %v1838, %v1863
        %v1878 = vsub.f32 %v1841, %v1866
        %v1879 = vsub.f32 %v1844, %v1869
        %v1880 = vsub.f32 %v1847, %v1872
        %v1881 = vmul.f32 %v1873, 1.442695
        %v1882 = vpow.pop %v1881
        %v1883 = vmul.f32 %v1874, 1.442695
        %v1884 = vpow.pop %v1883
        %v1885 = vmul.f32 %v1875, 1.442695
        %v1886 = vpow.pop %v1885
        %v1887 = vmul.f32 %v1876, 1.442695
        %v1888 = vpow.pop %v1887
        %v1889 = vmul.f32 %v1877, 1.442695
        %v1890 = vpow.pop %v1889
        %v1891 = vmul.f32 %v1878, 1.442695
        %v1892 = vpow.pop %v1891
        %v1893 = vmul.f32 %v1879, 1.442695
        %v1894 = vpow.pop %v1893
        %v1895 = vmul.f32 %v1880, 1.442695
        %v1896 = vpow.pop %v1895
        %v1897 = vsel %vm310, %v1882, 0.0
        %1898 = vadd.xlane.f32.xlu0 %v1897
        %v1899 = vpop.xlane.xlu0 %1898
        %v1900 = vsel %vm310, %v1884, 0.0
        %1901 = vadd.xlane.f32.xlu0 %v1900
        %v1902 = vpop.xlane.xlu0 %1901
        %v1903 = vsel %vm310, %v1886, 0.0
        %1904 = vadd.xlane.f32.xlu0 %v1903
        %v1905 = vpop.xlane.xlu0 %1904
        %v1906 = vsel %vm310, %v1888, 0.0
        %1907 = vadd.xlane.f32.xlu0 %v1906
        %v1908 = vpop.xlane.xlu0 %1907
        %v1909 = vsel %vm310, %v1890, 0.0
        %1910 = vadd.xlane.f32.xlu0 %v1909
        %v1911 = vpop.xlane.xlu0 %1910
        %v1912 = vsel %vm310, %v1892, 0.0
        %1913 = vadd.xlane.f32.xlu0 %v1912
        %v1914 = vpop.xlane.xlu0 %1913
        %v1915 = vsel %vm310, %v1894, 0.0
        %1916 = vadd.xlane.f32.xlu0 %v1915
        %v1917 = vpop.xlane.xlu0 %1916
        %v1918 = vsel %vm310, %v1896, 0.0
        %1919 = vadd.xlane.f32.xlu0 %v1918
        %v1920 = vpop.xlane.xlu0 %1919
        %1921 = vrot.lane.b32.xlu0 %v353, 40
        %v1922 = vpop.permute.xlu0 %1921
        %1923 = vrot.lane.b32.xlu0 %v356, 40
        %v1924 = vpop.permute.xlu0 %1923
        %1925 = vrot.lane.b32.xlu0 %v359, 40
        %v1926 = vpop.permute.xlu0 %1925
        %1927 = vrot.lane.b32.xlu0 %v362, 40
        %v1928 = vpop.permute.xlu0 %1927
        %v1934 = vsel %vm310, %v1882, 0
        %v1937 = vsel %vm310, %v1884, 0
        %v1940 = vsel %vm310, %v1886, 0
        %v1943 = vsel %vm310, %v1888, 0
        %1945 = vmatpush.msra.mxu0 0.0
        %1946 = vmatpush.msra.mxu0 0.0
        %1947 = vmatpush.msra.mxu0 0.0
        %1948 = vmatpush.msra.mxu0 0.0
        %1949 = vmatpush.msra.mxu0 0.0
        %1950 = vmatpush.msra.mxu0 0.0
        %1951 = vmatpush.msra.mxu0 0.0
        %1952 = vmatpush.msra.mxu0 0.0
        %1953 = vmatpush.msra.mxu0 0.0
        %1954 = vmatpush.msra.mxu0 0.0
        %1955 = vmatpush.msra.mxu0 0.0
        %1956 = vmatpush.msra.mxu0 0.0
        %1957 = vmatpush.msra.mxu0 %v1928
        %1958 = vmatpush.msra.mxu0 %v1926
        %1959 = vmatpush.msra.mxu0 %v1924
        %1960 = vmatpush.msra.mxu0 %v1922
        %1961 = vmatmul.f32.gmra.mxu0 %v1934
        %v1962 = vpop.f32.mrf.mxu0
        %v1963 = vadd.f32 0.0, %v1962
        %1964 = vmatmul.f32.gmra.mxu0 %v1937
        %v1965 = vpop.f32.mrf.mxu0
        %v1966 = vadd.f32 0.0, %v1965
        %1967 = vmatmul.f32.gmra.mxu0 %v1940
        %v1968 = vpop.f32.mrf.mxu0
        %v1969 = vadd.f32 0.0, %v1968
        %1970 = vmatmul.f32.gmra.mxu0 %v1943
        %v1971 = vpop.f32.mrf.mxu0
        %v1972 = vadd.f32 0.0, %v1971
        %1973 = vdwg.mxu0
        %1974 = vrot.lane.b32.xlu0 %v365, 40
        %v1975 = vpop.permute.xlu0 %1974
        %1976 = vrot.lane.b32.xlu0 %v368, 40
        %v1977 = vpop.permute.xlu0 %1976
        %1978 = vrot.lane.b32.xlu0 %v371, 40
        %v1979 = vpop.permute.xlu0 %1978
        %1980 = vrot.lane.b32.xlu0 %v374, 40
        %v1981 = vpop.permute.xlu0 %1980
        %v1987 = vsel %vm310, %v1890, 0
        %v1990 = vsel %vm310, %v1892, 0
        %v1993 = vsel %vm310, %v1894, 0
        %v1996 = vsel %vm310, %v1896, 0
        %1998 = vmatpush.msra.mxu0 0.0
        %1999 = vmatpush.msra.mxu0 0.0
        %2000 = vmatpush.msra.mxu0 0.0
        %2001 = vmatpush.msra.mxu0 0.0
        %2002 = vmatpush.msra.mxu0 0.0
        %2003 = vmatpush.msra.mxu0 0.0
        %2004 = vmatpush.msra.mxu0 0.0
        %2005 = vmatpush.msra.mxu0 0.0
        %2006 = vmatpush.msra.mxu0 0.0
        %2007 = vmatpush.msra.mxu0 0.0
        %2008 = vmatpush.msra.mxu0 0.0
        %2009 = vmatpush.msra.mxu0 0.0
        %2010 = vmatpush.msra.mxu0 %v1981
        %2011 = vmatpush.msra.mxu0 %v1979
        %2012 = vmatpush.msra.mxu0 %v1977
        %2013 = vmatpush.msra.mxu0 %v1975
        %2014 = vmatmul.f32.gmra.mxu0 %v1987
        %v2015 = vpop.f32.mrf.mxu0
        %v2016 = vadd.f32 0.0, %v2015
        %2017 = vmatmul.f32.gmra.mxu0 %v1990
        %v2018 = vpop.f32.mrf.mxu0
        %v2019 = vadd.f32 0.0, %v2018
        %2020 = vmatmul.f32.gmra.mxu0 %v1993
        %v2021 = vpop.f32.mrf.mxu0
        %v2022 = vadd.f32 0.0, %v2021
        %2023 = vmatmul.f32.gmra.mxu0 %v1996
        %v2024 = vpop.f32.mrf.mxu0
        %v2025 = vadd.f32 0.0, %v2024
        %2026 = vdwg.mxu0
        %v2027 = vrcp.pop %v1899
        %v2028 = vmul.f32 %v1899, %v2027
        %v2029 = vsub.f32 1.0, %v2028
        %v2030 = vmul.f32 %v2027, %v2029
        %v2031 = vadd.f32 %v2027, %v2030
        %vm2032 = vweird.f32 %v1899
        %vm2033 = vweird.f32 %v2027
        %vm2034 = vmor %vm2032, %vm2033
        %v2035 = vsel %vm2034, %v2027, %v2031
        %v2036 = vand.u32 2147483647, %v1899
        %vm2037 = vcmp.eq.f32.partialorder %v2036, 8.507059e+37
        %v2038 = vand.u32 %v1899, 2147483648
        %v2039 = vor.u32 1.1754944e-38, %v2038
        %v2040 = vsel %vm2037, %v2039, %v2035
        %v2041 = vmul.f32 %v1963, %v2040
        %v2042 = vrcp.pop %v1902
        %v2043 = vmul.f32 %v1902, %v2042
        %v2044 = vsub.f32 1.0, %v2043
        %v2045 = vmul.f32 %v2042, %v2044
        %v2046 = vadd.f32 %v2042, %v2045
        %vm2047 = vweird.f32 %v1902
        %vm2048 = vweird.f32 %v2042
        %vm2049 = vmor %vm2047, %vm2048
        %v2050 = vsel %vm2049, %v2042, %v2046
        %v2051 = vand.u32 2147483647, %v1902
        %vm2052 = vcmp.eq.f32.partialorder %v2051, 8.507059e+37
        %v2053 = vand.u32 %v1902, 2147483648
        %v2054 = vor.u32 1.1754944e-38, %v2053
        %v2055 = vsel %vm2052, %v2054, %v2050
        %v2056 = vmul.f32 %v1966, %v2055
        %v2057 = vrcp.pop %v1905
        %v2058 = vmul.f32 %v1905, %v2057
        %v2059 = vsub.f32 1.0, %v2058
        %v2060 = vmul.f32 %v2057, %v2059
        %v2061 = vadd.f32 %v2057, %v2060
        %vm2062 = vweird.f32 %v1905
        %vm2063 = vweird.f32 %v2057
        %vm2064 = vmor %vm2062, %vm2063
        %v2065 = vsel %vm2064, %v2057, %v2061
        %v2066 = vand.u32 2147483647, %v1905
        %vm2067 = vcmp.eq.f32.partialorder %v2066, 8.507059e+37
        %v2068 = vand.u32 %v1905, 2147483648
        %v2069 = vor.u32 1.1754944e-38, %v2068
        %v2070 = vsel %vm2067, %v2069, %v2065
        %v2071 = vmul.f32 %v1969, %v2070
        %v2072 = vrcp.pop %v1908
        %v2073 = vmul.f32 %v1908, %v2072
        %v2074 = vsub.f32 1.0, %v2073
        %v2075 = vmul.f32 %v2072, %v2074
        %v2076 = vadd.f32 %v2072, %v2075
        %vm2077 = vweird.f32 %v1908
        %vm2078 = vweird.f32 %v2072
        %vm2079 = vmor %vm2077, %vm2078
        %v2080 = vsel %vm2079, %v2072, %v2076
        %v2081 = vand.u32 2147483647, %v1908
        %vm2082 = vcmp.eq.f32.partialorder %v2081, 8.507059e+37
        %v2083 = vand.u32 %v1908, 2147483648
        %v2084 = vor.u32 1.1754944e-38, %v2083
        %v2085 = vsel %vm2082, %v2084, %v2080
        %v2086 = vmul.f32 %v1972, %v2085
        %v2087 = vrcp.pop %v1911
        %v2088 = vmul.f32 %v1911, %v2087
        %v2089 = vsub.f32 1.0, %v2088
        %v2090 = vmul.f32 %v2087, %v2089
        %v2091 = vadd.f32 %v2087, %v2090
        %vm2092 = vweird.f32 %v1911
        %vm2093 = vweird.f32 %v2087
        %vm2094 = vmor %vm2092, %vm2093
        %v2095 = vsel %vm2094, %v2087, %v2091
        %v2096 = vand.u32 2147483647, %v1911
        %vm2097 = vcmp.eq.f32.partialorder %v2096, 8.507059e+37
        %v2098 = vand.u32 %v1911, 2147483648
        %v2099 = vor.u32 1.1754944e-38, %v2098
        %v2100 = vsel %vm2097, %v2099, %v2095
        %v2101 = vmul.f32 %v2016, %v2100
        %v2102 = vrcp.pop %v1914
        %v2103 = vmul.f32 %v1914, %v2102
        %v2104 = vsub.f32 1.0, %v2103
        %v2105 = vmul.f32 %v2102, %v2104
        %v2106 = vadd.f32 %v2102, %v2105
        %vm2107 = vweird.f32 %v1914
        %vm2108 = vweird.f32 %v2102
        %vm2109 = vmor %vm2107, %vm2108
        %v2110 = vsel %vm2109, %v2102, %v2106
        %v2111 = vand.u32 2147483647, %v1914
        %vm2112 = vcmp.eq.f32.partialorder %v2111, 8.507059e+37
        %v2113 = vand.u32 %v1914, 2147483648
        %v2114 = vor.u32 1.1754944e-38, %v2113
        %v2115 = vsel %vm2112, %v2114, %v2110
        %v2116 = vmul.f32 %v2019, %v2115
        %v2117 = vrcp.pop %v1917
        %v2118 = vmul.f32 %v1917, %v2117
        %v2119 = vsub.f32 1.0, %v2118
        %v2120 = vmul.f32 %v2117, %v2119
        %v2121 = vadd.f32 %v2117, %v2120
        %vm2122 = vweird.f32 %v1917
        %vm2123 = vweird.f32 %v2117
        %vm2124 = vmor %vm2122, %vm2123
        %v2125 = vsel %vm2124, %v2117, %v2121
        %v2126 = vand.u32 2147483647, %v1917
        %vm2127 = vcmp.eq.f32.partialorder %v2126, 8.507059e+37
        %v2128 = vand.u32 %v1917, 2147483648
        %v2129 = vor.u32 1.1754944e-38, %v2128
        %v2130 = vsel %vm2127, %v2129, %v2125
        %v2131 = vmul.f32 %v2022, %v2130
        %v2132 = vrcp.pop %v1920
        %v2133 = vmul.f32 %v1920, %v2132
        %v2134 = vsub.f32 1.0, %v2133
        %v2135 = vmul.f32 %v2132, %v2134
        %v2136 = vadd.f32 %v2132, %v2135
        %vm2137 = vweird.f32 %v1920
        %vm2138 = vweird.f32 %v2132
        %vm2139 = vmor %vm2137, %vm2138
        %v2140 = vsel %vm2139, %v2132, %v2136
        %v2141 = vand.u32 2147483647, %v1920
        %vm2142 = vcmp.eq.f32.partialorder %v2141, 8.507059e+37
        %v2143 = vand.u32 %v1920, 2147483648
        %v2144 = vor.u32 1.1754944e-38, %v2143
        %v2145 = vsel %vm2142, %v2144, %v2140
        %v2146 = vmul.f32 %v2025, %v2145
        %2155 = vrot.lane.b32.xlu0 %v2041, 24
        %v2156 = vpop.permute.xlu0 %2155
        %2157 = vrot.lane.b32.xlu0 %v2056, 24
        %v2158 = vpop.permute.xlu0 %2157
        %2159 = vrot.lane.b32.xlu0 %v2071, 24
        %v2160 = vpop.permute.xlu0 %2159
        %2161 = vrot.lane.b32.xlu0 %v2086, 24
        %v2162 = vpop.permute.xlu0 %2161
        %2163 = vrot.lane.b32.xlu0 %v2101, 24
        %v2164 = vpop.permute.xlu0 %2163
        %2165 = vrot.lane.b32.xlu0 %v2116, 24
        %v2166 = vpop.permute.xlu0 %2165
        %2167 = vrot.lane.b32.xlu0 %v2131, 24
        %v2168 = vpop.permute.xlu0 %2167
        %2169 = vrot.lane.b32.xlu0 %v2146, 24
        %v2170 = vpop.permute.xlu0 %2169
        %vm2179 = vcmask 261312
        %2180 = vst.msk [vmem:[#allocation2] sm:$0xff] %vm2179, %v2156
        %2181 = vst.msk [vmem:[#allocation2 + $0x8] sm:$0xff] %vm2179, %v2158
        %2182 = vst.msk [vmem:[#allocation2 + $0x10] sm:$0xff] %vm2179, %v2160
        %2183 = vst.msk [vmem:[#allocation2 + $0x18] sm:$0xff] %vm2179, %v2162
        %2184 = vst.msk [vmem:[#allocation2 + $0x20] sm:$0xff] %vm2179, %v2164
        %2185 = vst.msk [vmem:[#allocation2 + $0x28] sm:$0xff] %vm2179, %v2166
        %2186 = vst.msk [vmem:[#allocation2 + $0x30] sm:$0xff] %vm2179, %v2168
        %2187 = vst.msk [vmem:[#allocation2 + $0x38] sm:$0xff] %vm2179, %v2170
        %v2188 = vld [vmem:[#allocation2] sm:$0xff]
        %v2189 = vld [vmem:[#allocation2 + $0x8] sm:$0xff]
        %v2190 = vld [vmem:[#allocation2 + $0x10] sm:$0xff]
        %v2191 = vld [vmem:[#allocation2 + $0x18] sm:$0xff]
        %v2192 = vld [vmem:[#allocation2 + $0x20] sm:$0xff]
        %v2193 = vld [vmem:[#allocation2 + $0x28] sm:$0xff]
        %v2194 = vld [vmem:[#allocation2 + $0x30] sm:$0xff]
        %v2195 = vld [vmem:[#allocation2 + $0x38] sm:$0xff]
        %v2196 = vld [vmem:[#allocation9] sm:$0xff]
        %v2197 = vld [vmem:[#allocation9 + $0x8] sm:$0xff]
        %v2198 = vld [vmem:[#allocation9 + $0x10] sm:$0xff]
        %v2199 = vld [vmem:[#allocation9 + $0x18] sm:$0xff]
        %v2200 = vld [vmem:[%s4] sm:$0x1]
        %v2202 = vperm.slane %v2200, 0
        %v2205 = vsel %vm310, %v2188, 0
        %v2208 = vsel %vm310, %v2189, 0
        %v2211 = vsel %vm310, %v2190, 0
        %v2214 = vsel %vm310, %v2191, 0
        %v2217 = vsel %vm310, %v2192, 0
        %v2220 = vsel %vm310, %v2193, 0
        %v2223 = vsel %vm310, %v2194, 0
        %v2226 = vsel %vm310, %v2195, 0
        %2228 = vmatpush.msra.mxu0 0.0
        %2229 = vmatpush.msra.mxu0 0.0
        %2230 = vmatpush.msra.mxu0 0.0
        %2231 = vmatpush.msra.mxu0 0.0
        %2232 = vmatpush.msra.mxu0 0.0
        %2233 = vmatpush.msra.mxu0 0.0
        %2234 = vmatpush.msra.mxu0 0.0
        %2235 = vmatpush.msra.mxu0 0.0
        %2236 = vmatpush.msra.mxu0 0.0
        %2237 = vmatpush.msra.mxu0 0.0
        %2238 = vmatpush.msra.mxu0 0.0
        %2239 = vmatpush.msra.mxu0 0.0
        %2240 = vmatpush.msra.mxu0 %v2199
        %2241 = vmatpush.msra.mxu0 %v2198
        %2242 = vmatpush.msra.mxu0 %v2197
        %2243 = vmatpush.msra.mxu0 %v2196
        %2244 = vmatmul.f32.gmra.mxu0 %v2205
        %v2245 = vpop.f32.mrf.mxu0
        %v2246 = vadd.f32 %v2202, %v2245
        %2247 = vmatmul.f32.gmra.mxu0 %v2208
        %v2248 = vpop.f32.mrf.mxu0
        %v2249 = vadd.f32 %v2202, %v2248
        %2250 = vmatmul.f32.gmra.mxu0 %v2211
        %v2251 = vpop.f32.mrf.mxu0
        %v2252 = vadd.f32 %v2202, %v2251
        %2253 = vmatmul.f32.gmra.mxu0 %v2214
        %v2254 = vpop.f32.mrf.mxu0
        %v2255 = vadd.f32 %v2202, %v2254
        %2256 = vmatmul.f32.gmra.mxu0 %v2217
        %v2257 = vpop.f32.mrf.mxu0
        %v2258 = vadd.f32 %v2202, %v2257
        %2259 = vmatmul.f32.gmra.mxu0 %v2220
        %v2260 = vpop.f32.mrf.mxu0
        %v2261 = vadd.f32 %v2202, %v2260
        %2262 = vmatmul.f32.gmra.mxu0 %v2223
        %v2263 = vpop.f32.mrf.mxu0
        %v2264 = vadd.f32 %v2202, %v2263
        %2265 = vmatmul.f32.gmra.mxu0 %v2226
        %v2266 = vpop.f32.mrf.mxu0
        %v2267 = vadd.f32 %v2202, %v2266
        %2268 = vdwg.mxu0
        %2269 = vst.msk [vmem:[%s295] sm:$0xff] %vm310, %v2246
        %2270 = vst.msk [vmem:[%s295 + $0x8] sm:$0xff] %vm310, %v2249
        %2271 = vst.msk [vmem:[%s295 + $0x10] sm:$0xff] %vm310, %v2252
        %2272 = vst.msk [vmem:[%s295 + $0x18] sm:$0xff] %vm310, %v2255
        %2273 = vst.msk [vmem:[%s295 + $0x20] sm:$0xff] %vm310, %v2258
        %2274 = vst.msk [vmem:[%s295 + $0x28] sm:$0xff] %vm310, %v2261
        %2275 = vst.msk [vmem:[%s295 + $0x30] sm:$0xff] %vm310, %v2264
        %2276 = vst.msk [vmem:[%s295 + $0x38] sm:$0xff] %vm310, %v2267
        %s2277 = sand.u32 %s142, 1
        %s2278 = scalar_lea.sflag [#allocation5], %s2277
        %s2279 = sand.u32 %s142, 1
        %s2280 = smul.addr %s2279, 64
        %s2281 = scalar_lea.vmem [#allocation11], %s2280
        // Predicated region
        $region57: #{tpu_custom_call.1} parent=39 // pred_check
          %p2282 = pneg %p152
        $region58: #{tpu_custom_call.1} parent=39 // pred_check_branch
          %2284 = sbr.rel (%p2282) target = $region60
        $region59: #{tpu_custom_call.1} parent=39 // pred_region
          %s2285 = smul.u32 2, %s24
          %2287 = vsyncadd %s2278, 0
          %s2288 = smul.addr %s2285, 4
          %s2289 = smul.addr %s2288, 8
          %s2290 = scalar_lea.hbm %s5, %s2289
          %s2291 = sshll.u32 %s2281, 4
          %s2292 = int_to_ptr.vmem [resolvable:$true] %s2291
          %s2293 = sshll.u32 %s2290, 4
          %s2294 = int_to_ptr.hbm [resolvable:$true] %s2293
          %2299 = dma.vmem_to_hbm [thread:$0]  %s2292, 1024, %s2294, %s2278, 128, 128, 8
        $region60: #{tpu_custom_call.1} parent=39 // pred_fallthru
          _
      $region40: #{tpu_custom_call.1} parent=5 // pred_fallthru
        _
      %p2300 = scmp.le.s32.totalorder 2, %s19
      // Predicated region
      $region61: #{tpu_custom_call.1} parent=5 // pred_check
        %p2301 = pneg %p2300
      $region62: #{tpu_custom_call.1} parent=5 // pred_check_branch
        %2303 = sbr.rel (%p2301) target = $region64
      $region63: #{tpu_custom_call.1} parent=5 // pred_region
        %s2304 = ssub.s32 %s19, 2
        // Predicated region
        $region65: #{tpu_custom_call.1} parent=63 // pred_check
          %p2305 = pneg %p158
        $region66: #{tpu_custom_call.1} parent=63 // pred_check_branch
          %2307 = sbr.rel (%p2305) target = $region68
        $region67: #{tpu_custom_call.1} parent=63 // pred_region
          %s2308 = sand.u32 %s143, 1
          %s2309 = scalar_lea.sflag [#allocation5], %s2308
          %s2310 = sand.u32 %s143, 1
          %s2311 = smul.addr %s2310, 64
          %s2312 = scalar_lea.vmem [#allocation11], %s2311
          %2314 = dma.done %s2309, 1024
        $region68: #{tpu_custom_call.1} parent=63 // pred_fallthru
          _
      $region64: #{tpu_custom_call.1} parent=5 // pred_fallthru
        _
    $region6: #{tpu_custom_call.1} parent=1 // loop_footer
      %s23 = sadd.s32 1, %s19
    $region7: #{tpu_custom_call.1} parent=1 // loop_footer_branch
      %18 = sbr.rel target = $region3
    $region8: #{tpu_custom_call.1} parent=1 // loop_exit
      _
    %2315 = vsyncpa [#allocation4], 1
    %s2316 = scalar_lea.sflag [#allocation4], 1
    %2317 = vsyncpa %s2316, 1
    %2318 = vsyncpa [#allocation7], 1
    %2319 = vsyncpa [#allocation10], 1
    %2320 = vsyncpa [#allocation5], 1
    %s2321 = scalar_lea.sflag [#allocation5], 1
    %2322 = vsyncpa %s2321, 1

// kernel: tpu_custom_call.1
$region0: #{tpu_custom_call.1}
  #allocation0 [shape = 'u32[]', space=smem, size = 0x4, offset = 0x4, fixed_abs, tag = 'smem constant byte address 0x4 - core index']
  #allocation1 [shape = 'u32[72,128]{1,0:T(1,128)}', space=vmem, size = 0x9000, scoped, tag = 'internal scratch']
  #allocation2 [shape = 'f32[2,32,32]{2,1,0:T(8,128)}', space=vmem, size = 0x8000, scoped, tag = 'scratch operand']
  %s0 = inlined_call_operand.hbm [shape: f32[4,32,32], index: 0, kind: input, shape index: {}]
  %s1 = inlined_call_operand.hbm [shape: f32[2,32,32], index: 1, kind: input, shape index: {}]
  %s2 = inlined_call_operand.hbm [shape: f32[32,96], index: 2, kind: input, shape index: {}]
  %s3 = inlined_call_operand.hbm [shape: f32[32,32], index: 3, kind: input, shape index: {}]
  %s4 = inlined_call_operand.vmem [shape: f32[1,32], index: 4, kind: input, shape index: {}]
  %s5 = inlined_call_operand.hbm [shape: f32[4,32,32], index: 5, kind: output, shape index: {}]
  %s6 = sld [smem:[#allocation0]]
  $region69: #{tpu_custom_call.1} parent=0
    _
  %s8 = ssub.s32 1, %s6
  %s9 = scalar_select 0, %s8, %s6
  $region1: #{tpu_custom_call.1} parent=0
    #allocation3 [shape = 'u8[65536]{0}', space=vmem, size = 0x10000, scoped, tag = 'input window, operand 0']
    #allocation4 [shape = 's32[2]{0}', space=sflag, size = 0x8, scoped, tag = 'scoped memory for tpu_custom_call.1']
    #allocation5 [shape = 's32[2]{0}', space=sflag, size = 0x8, scoped, tag = 'scoped memory for tpu_custom_call.1']
    #allocation6 [shape = 'u8[32768]{0}', space=vmem, size = 0x8000, scoped, tag = 'input window, operand 1, single buffered']
    #allocation7 [shape = 's32[1]{0}', space=sflag, size = 0x4, scoped, tag = 'scoped memory for tpu_custom_call.1']
    #allocation8 [shape = 'u8[16384]{0}', space=vmem, size = 0x4000, scoped, tag = 'input window, operand 2, single buffered']
    #allocation9 [shape = 'u8[16384]{0}', space=vmem, size = 0x4000, scoped, tag = 'input window, operand 3, single buffered']
    #allocation10 [shape = 's32[1]{0}', space=sflag, size = 0x4, scoped, tag = 'scoped memory for tpu_custom_call.1']
    #allocation11 [shape = 'u8[65536]{0}', space=vmem, size = 0x10000, scoped, tag = 'output window, operand 0']
    %10 = vsyncpa [#allocation4], 0
    %s11 = scalar_lea.sflag [#allocation4], 1
    %12 = vsyncpa %s11, 0
    %13 = vsyncpa [#allocation7], 0
    %14 = vsyncpa [#allocation10], 0
    %15 = vsyncpa [#allocation5], 0
    %s16 = scalar_lea.sflag [#allocation5], 1
    %17 = vsyncpa %s16, 0
    loop: start=0, step=1, limit=4
    $region2: #{tpu_custom_call.1} parent=1 // loop_pre_header
      _
    $region3: #{tpu_custom_call.1} parent=1 // loop_header
      %s19 = sphi 0, %s23
      %p20 = scmp.ge.s32.totalorder %s19, 4
      %s29 = sphi 0, %s31
      %s32 = sphi 0, %s29
      %s33 = sphi 0, %s32
      %s49 = sphi 0, %s33
      %s53 = sphi 0, %s53
      %s55 = sphi 0, %s53
      %s56 = sphi 0, %s55
      %s70 = sphi 0, %s56
      %s74 = sphi 0, %s74
      %s76 = sphi 0, %s74
      %s77 = sphi 0, %s76
      %s91 = sphi 0, %s77
      %s95 = sphi 0, %s95
      %s97 = sphi 0, %s95
      %s98 = sphi 0, %s97
      %s112 = sphi 0, %s98
      %s116 = sphi 0, %s116
      %s118 = sphi 0, %s116
      %s119 = sphi 0, %s118
      %s133 = sphi 0, %s119
      %s139 = sphi 0, %s141
      %s142 = sphi 0, %s139
      %s143 = sphi 0, %s142
      %s159 = sphi 0, %s143
    $region4: #{tpu_custom_call.1} parent=1 // loop_header_branch
      %22 = sbr.rel (%p20) target = $region8
    $region5: #{tpu_custom_call.1} parent=1 // loop_body
      %s24 = ssub.s32 %s19, 1
      %s25 = ssub.s32 %s19, 2
      %s26 = sadd.s32 %s19, 1
      %s27 = ssub.s32 %s19, %s26
      %p28 = scmp.eq.s32.totalorder %s27, 0
      %s30 = sadd.s32 %s29, 1
      %s31 = scalar_select %p28, %s29, %s30
      %p34 = pneg %p28
      %p35 = scmp.eq.s32.totalorder %s19, 1
      %p36 = por %p34, %p35
      %p37 = scmp.ne.s32.totalorder %s29, %s32
      %p38 = scmp.eq.s32.totalorder %s19, 0
      %p39 = por %p37, %p38
      %p40 = scmp.ne.s32.totalorder %s29, %s32
      %p41 = scmp.eq.s32.totalorder %s24, 1
      %p42 = por %p40, %p41
      %p43 = scmp.ne.s32.totalorder %s32, %s33
      %p44 = scmp.eq.s32.totalorder %s24, 0
      %p45 = por %p43, %p44
      %p46 = scmp.ne.s32.totalorder %s32, %s33
      %p47 = scmp.eq.s32.totalorder %s25, 1
      %p48 = por %p46, %p47
      %p50 = scmp.ne.s32.totalorder %s33, %s49
      %p51 = scmp.eq.s32.totalorder %s25, 0
      %p52 = por %p50, %p51
      %s54 = sadd.s32 %s53, 1
      %p57 = scmp.eq.s32.totalorder %s19, 1
      %p58 = scmp.ne.s32.totalorder %s53, %s55
      %p59 = scmp.eq.s32.totalorder %s19, 0
      %p60 = por %p58, %p59
      %p61 = scmp.ne.s32.totalorder %s53, %s55
      %p62 = scmp.eq.s32.totalorder %s24, 1
      %p63 = por %p61, %p62
      %p64 = scmp.ne.s32.totalorder %s55, %s56
      %p65 = scmp.eq.s32.totalorder %s24, 0
      %p66 = por %p64, %p65
      %p67 = scmp.ne.s32.totalorder %s55, %s56
      %p68 = scmp.eq.s32.totalorder %s25, 1
      %p69 = por %p67, %p68
      %p71 = scmp.ne.s32.totalorder %s56, %s70
      %p72 = scmp.eq.s32.totalorder %s25, 0
      %p73 = por %p71, %p72
      %s75 = sadd.s32 %s74, 1
      %p78 = scmp.eq.s32.totalorder %s19, 1
      %p79 = scmp.ne.s32.totalorder %s74, %s76
      %p80 = scmp.eq.s32.totalorder %s19, 0
      %p81 = por %p79, %p80
      %p82 = scmp.ne.s32.totalorder %s74, %s76
      %p83 = scmp.eq.s32.totalorder %s24, 1
      %p84 = por %p82, %p83
      %p85 = scmp.ne.s32.totalorder %s76, %s77
      %p86 = scmp.eq.s32.totalorder %s24, 0
      %p87 = por %p85, %p86
      %p88 = scmp.ne.s32.totalorder %s76, %s77
      %p89 = scmp.eq.s32.totalorder %s25, 1
      %p90 = por %p88, %p89
      %p92 = scmp.ne.s32.totalorder %s77, %s91
      %p93 = scmp.eq.s32.totalorder %s25, 0
      %p94 = por %p92, %p93
      %s96 = sadd.s32 %s95, 1
      %p99 = scmp.eq.s32.totalorder %s19, 1
      %p100 = scmp.ne.s32.totalorder %s95, %s97
      %p101 = scmp.eq.s32.totalorder %s19, 0
      %p102 = por %p100, %p101
      %p103 = scmp.ne.s32.totalorder %s95, %s97
      %p104 = scmp.eq.s32.totalorder %s24, 1
      %p105 = por %p103, %p104
      %p106 = scmp.ne.s32.totalorder %s97, %s98
      %p107 = scmp.eq.s32.totalorder %s24, 0
      %p108 = por %p106, %p107
      %p109 = scmp.ne.s32.totalorder %s97, %s98
      %p110 = scmp.eq.s32.totalorder %s25, 1
      %p111 = por %p109, %p110
      %p113 = scmp.ne.s32.totalorder %s98, %s112
      %p114 = scmp.eq.s32.totalorder %s25, 0
      %p115 = por %p113, %p114
      %s117 = sadd.s32 %s116, 1
      %p120 = scmp.eq.s32.totalorder %s19, 1
      %p121 = scmp.ne.s32.totalorder %s116, %s118
      %p122 = scmp.eq.s32.totalorder %s19, 0
      %p123 = por %p121, %p122
      %p124 = scmp.ne.s32.totalorder %s116, %s118
      %p125 = scmp.eq.s32.totalorder %s24, 1
      %p126 = por %p124, %p125
      %p127 = scmp.ne.s32.totalorder %s118, %s119
      %p128 = scmp.eq.s32.totalorder %s24, 0
      %p129 = por %p127, %p128
      %p130 = scmp.ne.s32.totalorder %s118, %s119
      %p131 = scmp.eq.s32.totalorder %s25, 1
      %p132 = por %p130, %p131
      %p134 = scmp.ne.s32.totalorder %s119, %s133
      %p135 = scmp.eq.s32.totalorder %s25, 0
      %p136 = por %p134, %p135
      %s137 = ssub.s32 %s19, %s26
      %p138 = scmp.eq.s32.totalorder %s137, 0
      %s140 = sadd.s32 %s139, 1
      %s141 = scalar_select %p138, %s139, %s140
      %p144 = pneg %p138
      %p145 = scmp.eq.s32.totalorder %s19, 1
      %p146 = por %p144, %p145
      %p147 = scmp.ne.s32.totalorder %s139, %s142
      %p148 = scmp.eq.s32.totalorder %s19, 0
      %p149 = por %p147, %p148
      %p150 = scmp.ne.s32.totalorder %s139, %s142
      %p151 = scmp.eq.s32.totalorder %s24, 1
      %p152 = por %p150, %p151
      %p153 = scmp.ne.s32.totalorder %s142, %s143
      %p154 = scmp.eq.s32.totalorder %s24, 0
      %p155 = por %p153, %p154
      %p156 = scmp.ne.s32.totalorder %s142, %s143
      %p157 = scmp.eq.s32.totalorder %s25, 1
      %p158 = por %p156, %p157
      %p160 = scmp.ne.s32.totalorder %s143, %s159
      %p161 = scmp.eq.s32.totalorder %s25, 0
      %p162 = por %p160, %p161
      %p163 = scmp.le.s32.totalorder 1, %s19
      %p164 = scmp.lt.s32.totalorder %s19, 3
      %p165 = pnand %p163, %p164
      %p166 = pneg %p165
      // Predicated region
      $region9: #{tpu_custom_call.1} parent=5 // pred_check
        _
      $region10: #{tpu_custom_call.1} parent=5 // pred_check_branch
        %168 = sbr.rel (%p165) target = $region12
      $region11: #{tpu_custom_call.1} parent=5 // pred_region
        %s169 = ssub.s32 %s19, 1
        // Predicated region
        $region13: #{tpu_custom_call.1} parent=11 // pred_check
          %p170 = pneg %p66
        $region14: #{tpu_custom_call.1} parent=11 // pred_check_branch
          %172 = sbr.rel (%p170) target = $region16
        $region15: #{tpu_custom_call.1} parent=11 // pred_region
          %174 = vsyncadd [#allocation7], 0
          %s175 = sshll.u32 %s1, 4
          %s176 = int_to_ptr.hbm [resolvable:$true] %s175
          %s177 = sshll.u32 [#allocation6], 4
          %s178 = int_to_ptr.vmem [resolvable:$true] %s177
          %183 = dma.hbm_to_vmem [thread:$0]  %s176, 1024, %s178, [#allocation7], 128, 128, 8
        $region16: #{tpu_custom_call.1} parent=11 // pred_fallthru
          _
        // Predicated region
        $region17: #{tpu_custom_call.1} parent=11 // pred_check
          %p184 = pneg %p87
        $region18: #{tpu_custom_call.1} parent=11 // pred_check_branch
          %186 = sbr.rel (%p184) target = $region20
        $region19: #{tpu_custom_call.1} parent=11 // pred_region
          %188 = vsyncadd [#allocation7], 0
          %s189 = sshll.u32 %s2, 4
          %s190 = int_to_ptr.hbm [resolvable:$true] %s189
          %s191 = sshll.u32 [#allocation8], 4
          %s192 = int_to_ptr.vmem [resolvable:$true] %s191
          %197 = dma.hbm_to_vmem [thread:$0]  %s190, 512, %s192, [#allocation7], 128, 128, 8
        $region20: #{tpu_custom_call.1} parent=11 // pred_fallthru
          _
        // Predicated region
        $region21: #{tpu_custom_call.1} parent=11 // pred_check
          %p198 = pneg %p108
        $region22: #{tpu_custom_call.1} parent=11 // pred_check_branch
          %200 = sbr.rel (%p198) target = $region24
        $region23: #{tpu_custom_call.1} parent=11 // pred_region
          %202 = vsyncadd [#allocation10], 0
          %s203 = sshll.u32 %s3, 4
          %s204 = int_to_ptr.hbm [resolvable:$true] %s203
          %s205 = sshll.u32 [#allocation9], 4
          %s206 = int_to_ptr.vmem [resolvable:$true] %s205
          %211 = dma.hbm_to_vmem [thread:$0]  %s204, 512, %s206, [#allocation10], 128, 128, 8
        $region24: #{tpu_custom_call.1} parent=11 // pred_fallthru
          _
        // Predicated region
        $region25: #{tpu_custom_call.1} parent=11 // pred_check
          %p212 = pneg %p129
        $region26: #{tpu_custom_call.1} parent=11 // pred_check_branch
          %214 = sbr.rel (%p212) target = $region28
        $region27: #{tpu_custom_call.1} parent=11 // pred_region
          _
        $region28: #{tpu_custom_call.1} parent=11 // pred_fallthru
          _
      $region12: #{tpu_custom_call.1} parent=5 // pred_fallthru
        _
      %p215 = scmp.lt.s32.totalorder %s19, 2
      // Predicated region
      $region29: #{tpu_custom_call.1} parent=5 // pred_check
        %p216 = pneg %p215
      $region30: #{tpu_custom_call.1} parent=5 // pred_check_branch
        %218 = sbr.rel (%p216) target = $region32
      $region31: #{tpu_custom_call.1} parent=5 // pred_region
        // Predicated region
        $region33: #{tpu_custom_call.1} parent=31 // pred_check
          %p219 = pneg %p39
        $region34: #{tpu_custom_call.1} parent=31 // pred_check_branch
          %221 = sbr.rel (%p219) target = $region36
        $region35: #{tpu_custom_call.1} parent=31 // pred_region
          %s222 = sand.u32 %s29, 1
          %s223 = scalar_lea.sflag [#allocation4], %s222
          %s224 = sand.u32 %s29, 1
          %s225 = smul.addr %s224, 64
          %s226 = scalar_lea.vmem [#allocation3], %s225
          %s227 = smul.u32 2, %s19
          %229 = vsyncadd %s223, 0
          %s230 = smul.addr %s227, 4
          %s231 = smul.addr %s230, 8
          %s232 = scalar_lea.hbm %s0, %s231
          %s233 = sshll.u32 %s232, 4
          %s234 = int_to_ptr.hbm [resolvable:$true] %s233
          %s235 = sshll.u32 %s226, 4
          %s236 = int_to_ptr.vmem [resolvable:$true] %s235
          %241 = dma.hbm_to_vmem [thread:$0]  %s234, 1024, %s236, %s223, 128, 128, 8
        $region36: #{tpu_custom_call.1} parent=31 // pred_fallthru
          _
      $region32: #{tpu_custom_call.1} parent=5 // pred_fallthru
        _
      %p242 = scmp.le.s32.totalorder 1, %s19
      %p243 = scmp.lt.s32.totalorder %s19, 3
      %p244 = pnand %p242, %p243
      %p245 = pneg %p244
      // Predicated region
      $region37: #{tpu_custom_call.1} parent=5 // pred_check
        _
      $region38: #{tpu_custom_call.1} parent=5 // pred_check_branch
        %247 = sbr.rel (%p244) target = $region40
      $region39: #{tpu_custom_call.1} parent=5 // pred_region
        %s248 = ssub.s32 %s19, 1
        %s249 = sand.u32 %s32, 1
        %s250 = scalar_lea.sflag [#allocation4], %s249
        %s251 = sand.u32 %s32, 1
        %s252 = smul.addr %s251, 64
        %s253 = scalar_lea.vmem [#allocation3], %s252
        // Predicated region
        $region41: #{tpu_custom_call.1} parent=39 // pred_check
          %p254 = pneg %p45
        $region42: #{tpu_custom_call.1} parent=39 // pred_check_branch
          %256 = sbr.rel (%p254) target = $region44
        $region43: #{tpu_custom_call.1} parent=39 // pred_region
          %258 = dma.done %s250, 1024
        $region44: #{tpu_custom_call.1} parent=39 // pred_fallthru
          _
        // Predicated region
        $region45: #{tpu_custom_call.1} parent=39 // pred_check
          %p259 = pneg %p66
        $region46: #{tpu_custom_call.1} parent=39 // pred_check_branch
          %261 = sbr.rel (%p259) target = $region48
        $region47: #{tpu_custom_call.1} parent=39 // pred_region
          %263 = dma.done [#allocation7], 1024
        $region48: #{tpu_custom_call.1} parent=39 // pred_fallthru
          _
        // Predicated region
        $region49: #{tpu_custom_call.1} parent=39 // pred_check
          %p264 = pneg %p87
        $region50: #{tpu_custom_call.1} parent=39 // pred_check_branch
          %266 = sbr.rel (%p264) target = $region52
        $region51: #{tpu_custom_call.1} parent=39 // pred_region
          %268 = dma.done [#allocation7], 512
        $region52: #{tpu_custom_call.1} parent=39 // pred_fallthru
          _
        // Predicated region
        $region53: #{tpu_custom_call.1} parent=39 // pred_check
          %p269 = pneg %p108
        $region54: #{tpu_custom_call.1} parent=39 // pred_check_branch
          %271 = sbr.rel (%p269) target = $region56
        $region55: #{tpu_custom_call.1} parent=39 // pred_region
          %273 = dma.done [#allocation10], 512
        $region56: #{tpu_custom_call.1} parent=39 // pred_fallthru
          _
        %s274 = sand.u32 %s32, 1
        %s275 = scalar_lea.sflag [#allocation4], %s274
        %s276 = sand.u32 %s32, 1
        %s277 = smul.addr %s276, 64
        %s278 = scalar_lea.vmem [#allocation3], %s277
        %p279 = pneg %p45
        %p280 = pneg %p42
        %p281 = pneg %p66
        %p282 = pneg %p63
        %p283 = pneg %p87
        %p284 = pneg %p84
        %p285 = pneg %p108
        %p286 = pneg %p105
        %p287 = pneg %p129
        %p288 = pneg %p126
        %p289 = pneg %p155
        %p290 = pneg %p152
        %s291 = sand.u32 %s142, 1
        %s292 = scalar_lea.sflag [#allocation5], %s291
        %s293 = sand.u32 %s142, 1
        %s294 = smul.addr %s293, 64
        %s295 = scalar_lea.vmem [#allocation11], %s294
        %s296 = smul.u32 2, %s24
        %s297 = smul.u32 2, %s24
        %v298 = vld [vmem:[%s253] sm:$0xff]
        %v299 = vld [vmem:[%s253 + $0x8] sm:$0xff]
        %v300 = vld [vmem:[%s253 + $0x10] sm:$0xff]
        %v301 = vld [vmem:[%s253 + $0x18] sm:$0xff]
        %v302 = vld [vmem:[%s253 + $0x20] sm:$0xff]
        %v303 = vld [vmem:[%s253 + $0x28] sm:$0xff]
        %v304 = vld [vmem:[%s253 + $0x30] sm:$0xff]
        %v305 = vld [vmem:[%s253 + $0x38] sm:$0xff]
        %v306 = vld [vmem:[#allocation8] sm:$0xff]
        %v307 = vld [vmem:[#allocation8 + $0x8] sm:$0xff]
        %v308 = vld [vmem:[#allocation8 + $0x10] sm:$0xff]
        %v309 = vld [vmem:[#allocation8 + $0x18] sm:$0xff]
        %vm310 = vcmask 261120
        %v312 = vsel %vm310, %v298, 0
        %v315 = vsel %vm310, %v299, 0
        %v318 = vsel %vm310, %v300, 0
        %v321 = vsel %vm310, %v301, 0
        %v324 = vsel %vm310, %v302, 0
        %v327 = vsel %vm310, %v303, 0
        %v330 = vsel %vm310, %v304, 0
        %v333 = vsel %vm310, %v305, 0
        %335 = vmatpush.msra.mxu0 0.0
        %336 = vmatpush.msra.mxu0 0.0
        %337 = vmatpush.msra.mxu0 0.0
        %338 = vmatpush.msra.mxu0 0.0
        %339 = vmatpush.msra.mxu0 0.0
        %340 = vmatpush.msra.mxu0 0.0
        %341 = vmatpush.msra.mxu0 0.0
        %342 = vmatpush.msra.mxu0 0.0
        %343 = vmatpush.msra.mxu0 0.0
        %344 = vmatpush.msra.mxu0 0.0
        %345 = vmatpush.msra.mxu0 0.0
        %346 = vmatpush.msra.mxu0 0.0
        %347 = vmatpush.msra.mxu0 %v309
        %348 = vmatpush.msra.mxu0 %v308
        %349 = vmatpush.msra.mxu0 %v307
        %350 = vmatpush.msra.mxu0 %v306
        %351 = vmatmul.f32.gmra.mxu0 %v312
        %v352 = vpop.f32.mrf.mxu0
        %v353 = vadd.f32 0.0, %v352
        %354 = vmatmul.f32.gmra.mxu0 %v315
        %v355 = vpop.f32.mrf.mxu0
        %v356 = vadd.f32 0.0, %v355
        %357 = vmatmul.f32.gmra.mxu0 %v318
        %v358 = vpop.f32.mrf.mxu0
        %v359 = vadd.f32 0.0, %v358
        %360 = vmatmul.f32.gmra.mxu0 %v321
        %v361 = vpop.f32.mrf.mxu0
        %v362 = vadd.f32 0.0, %v361
        %363 = vmatmul.f32.gmra.mxu0 %v324
        %v364 = vpop.f32.mrf.mxu0
        %v365 = vadd.f32 0.0, %v364
        %366 = vmatmul.f32.gmra.mxu0 %v327
        %v367 = vpop.f32.mrf.mxu0
        %v368 = vadd.f32 0.0, %v367
        %369 = vmatmul.f32.gmra.mxu0 %v330
        %v370 = vpop.f32.mrf.mxu0
        %v371 = vadd.f32 0.0, %v370
        %372 = vmatmul.f32.gmra.mxu0 %v333
        %v373 = vpop.f32.mrf.mxu0
        %v374 = vadd.f32 0.0, %v373
        %375 = vdwg.mxu0
        %v376 = vld [vmem:[#allocation6] sm:$0xff]
        %v377 = vld [vmem:[#allocation6 + $0x8] sm:$0xff]
        %v378 = vld [vmem:[#allocation6 + $0x10] sm:$0xff]
        %v379 = vld [vmem:[#allocation6 + $0x18] sm:$0xff]
        %v380 = vld [vmem:[#allocation6 + $0x20] sm:$0xff]
        %v381 = vld [vmem:[#allocation6 + $0x28] sm:$0xff]
        %v382 = vld [vmem:[#allocation6 + $0x30] sm:$0xff]
        %v383 = vld [vmem:[#allocation6 + $0x38] sm:$0xff]
        %388 = vrot.lane.b32.xlu0 %v353, 96
        %v389 = vpop.permute.xlu0 %388
        %390 = vrot.lane.b32.xlu0 %v356, 96
        %v391 = vpop.permute.xlu0 %390
        %392 = vrot.lane.b32.xlu0 %v359, 96
        %v393 = vpop.permute.xlu0 %392
        %394 = vrot.lane.b32.xlu0 %v362, 96
        %v395 = vpop.permute.xlu0 %394
        %vm396 = vcmask 64512
        %v397 = vsel %vm396, %v353, 0
        %v399 = vsel %vm396, %v356, 0
        %v401 = vsel %vm396, %v359, 0
        %v403 = vsel %vm396, %v362, 0
        %v405 = vsel %vm396, %v389, 0
        %v407 = vsel %vm396, %v391, 0
        %v409 = vsel %vm396, %v393, 0
        %v411 = vsel %vm396, %v395, 0
        %413 = vmatpush.xpose.msra.mxu0 0.0
        %414 = vmatpush.xpose.msra.mxu0 0.0
        %415 = vmatpush.xpose.msra.mxu0 0.0
        %416 = vmatpush.xpose.msra.mxu0 0.0
        %417 = vmatpush.xpose.msra.mxu0 0.0
        %418 = vmatpush.xpose.msra.mxu0 0.0
        %419 = vmatpush.xpose.msra.mxu0 0.0
        %420 = vmatpush.xpose.msra.mxu0 0.0
        %421 = vmatpush.xpose.msra.mxu0 0.0
        %422 = vmatpush.xpose.msra.mxu0 0.0
        %423 = vmatpush.xpose.msra.mxu0 0.0
        %424 = vmatpush.xpose.msra.mxu0 0.0
        %425 = vmatpush.xpose.msra.mxu0 %v411
        %426 = vmatpush.xpose.msra.mxu0 %v409
        %427 = vmatpush.xpose.msra.mxu0 %v407
        %428 = vmatpush.xpose.msra.mxu0 %v405
        %429 = vmatmul.f32.gmra.mxu0 %v397
        %v430 = vpop.f32.mrf.mxu0
        %v431 = vadd.f32 %v376, %v430
        %432 = vmatmul.f32.gmra.mxu0 %v399
        %v433 = vpop.f32.mrf.mxu0
        %v434 = vadd.f32 %v377, %v433
        %435 = vmatmul.f32.gmra.mxu0 %v401
        %v436 = vpop.f32.mrf.mxu0
        %v437 = vadd.f32 %v378, %v436
        %438 = vmatmul.f32.gmra.mxu0 %v403
        %v439 = vpop.f32.mrf.mxu0
        %v440 = vadd.f32 %v379, %v439
        %441 = vdwg.mxu0
        %446 = vrot.lane.b32.xlu0 %v365, 96
        %v447 = vpop.permute.xlu0 %446
        %448 = vrot.lane.b32.xlu0 %v368, 96
        %v449 = vpop.permute.xlu0 %448
        %450 = vrot.lane.b32.xlu0 %v371, 96
        %v451 = vpop.permute.xlu0 %450
        %452 = vrot.lane.b32.xlu0 %v374, 96
        %v453 = vpop.permute.xlu0 %452
        %v454 = vsel %vm396, %v365, 0
        %v456 = vsel %vm396, %v368, 0
        %v458 = vsel %vm396, %v371, 0
        %v460 = vsel %vm396, %v374, 0
        %v462 = vsel %vm396, %v447, 0
        %v464 = vsel %vm396, %v449, 0
        %v466 = vsel %vm396, %v451, 0
        %v468 = vsel %vm396, %v453, 0
        %470 = vmatpush.xpose.msra.mxu0 0.0
        %471 = vmatpush.xpose.msra.mxu0 0.0
        %472 = vmatpush.xpose.msra.mxu0 0.0
        %473 = vmatpush.xpose.msra.mxu0 0.0
        %474 = vmatpush.xpose.msra.mxu0 0.0
        %475 = vmatpush.xpose.msra.mxu0 0.0
        %476 = vmatpush.xpose.msra.mxu0 0.0
        %477 = vmatpush.xpose.msra.mxu0 0.0
        %478 = vmatpush.xpose.msra.mxu0 0.0
        %479 = vmatpush.xpose.msra.mxu0 0.0
        %480 = vmatpush.xpose.msra.mxu0 0.0
        %481 = vmatpush.xpose.msra.mxu0 0.0
        %482 = vmatpush.xpose.msra.mxu0 %v468
        %483 = vmatpush.xpose.msra.mxu0 %v466
        %484 = vmatpush.xpose.msra.mxu0 %v464
        %485 = vmatpush.xpose.msra.mxu0 %v462
        %486 = vmatmul.f32.gmra.mxu0 %v454
        %v487 = vpop.f32.mrf.mxu0
        %v488 = vadd.f32 %v380, %v487
        %489 = vmatmul.f32.gmra.mxu0 %v456
        %v490 = vpop.f32.mrf.mxu0
        %v491 = vadd.f32 %v381, %v490
        %492 = vmatmul.f32.gmra.mxu0 %v458
        %v493 = vpop.f32.mrf.mxu0
        %v494 = vadd.f32 %v382, %v493
        %495 = vmatmul.f32.gmra.mxu0 %v460
        %v496 = vpop.f32.mrf.mxu0
        %v497 = vadd.f32 %v383, %v496
        %498 = vdwg.mxu0
        %v499 = vsel %vm310, %v431, -inf
        %500 = vmax.xlane.f32.xlu0 %v499
        %v501 = vpop.xlane.xlu0 %500
        %v502 = vsel %vm310, %v434, -inf
        %503 = vmax.xlane.f32.xlu0 %v502
        %v504 = vpop.xlane.xlu0 %503
        %v505 = vsel %vm310, %v437, -inf
        %506 = vmax.xlane.f32.xlu0 %v505
        %v507 = vpop.xlane.xlu0 %506
        %v508 = vsel %vm310, %v440, -inf
        %509 = vmax.xlane.f32.xlu0 %v508
        %v510 = vpop.xlane.xlu0 %509
        %v511 = vsel %vm310, %v488, -inf
        %512 = vmax.xlane.f32.xlu0 %v511
        %v513 = vpop.xlane.xlu0 %512
        %v514 = vsel %vm310, %v491, -inf
        %515 = vmax.xlane.f32.xlu0 %v514
        %v516 = vpop.xlane.xlu0 %515
        %v517 = vsel %vm310, %v494, -inf
        %518 = vmax.xlane.f32.xlu0 %v517
        %v519 = vpop.xlane.xlu0 %518
        %v520 = vsel %vm310, %v497, -inf
        %521 = vmax.xlane.f32.xlu0 %v520
        %v522 = vpop.xlane.xlu0 %521
        %v523 = vsub.f32 %v431, %v501
        %v524 = vsub.f32 %v434, %v504
        %v525 = vsub.f32 %v437, %v507
        %v526 = vsub.f32 %v440, %v510
        %v527 = vsub.f32 %v488, %v513
        %v528 = vsub.f32 %v491, %v516
        %v529 = vsub.f32 %v494, %v519
        %v530 = vsub.f32 %v497, %v522
        %v531 = vmul.f32 %v523, 1.442695
        %v532 = vpow.pop %v531
        %v533 = vmul.f32 %v524, 1.442695
        %v534 = vpow.pop %v533
        %v535 = vmul.f32 %v525, 1.442695
        %v536 = vpow.pop %v535
        %v537 = vmul.f32 %v526, 1.442695
        %v538 = vpow.pop %v537
        %v539 = vmul.f32 %v527, 1.442695
        %v540 = vpow.pop %v539
        %v541 = vmul.f32 %v528, 1.442695
        %v542 = vpow.pop %v541
        %v543 = vmul.f32 %v529, 1.442695
        %v544 = vpow.pop %v543
        %v545 = vmul.f32 %v530, 1.442695
        %v546 = vpow.pop %v545
        %v547 = vsel %vm310, %v532, 0.0
        %548 = vadd.xlane.f32.xlu0 %v547
        %v549 = vpop.xlane.xlu0 %548
        %v550 = vsel %vm310, %v534, 0.0
        %551 = vadd.xlane.f32.xlu0 %v550
        %v552 = vpop.xlane.xlu0 %551
        %v553 = vsel %vm310, %v536, 0.0
        %554 = vadd.xlane.f32.xlu0 %v553
        %v555 = vpop.xlane.xlu0 %554
        %v556 = vsel %vm310, %v538, 0.0
        %557 = vadd.xlane.f32.xlu0 %v556
        %v558 = vpop.xlane.xlu0 %557
        %v559 = vsel %vm310, %v540, 0.0
        %560 = vadd.xlane.f32.xlu0 %v559
        %v561 = vpop.xlane.xlu0 %560
        %v562 = vsel %vm310, %v542, 0.0
        %563 = vadd.xlane.f32.xlu0 %v562
        %v564 = vpop.xlane.xlu0 %563
        %v565 = vsel %vm310, %v544, 0.0
        %566 = vadd.xlane.f32.xlu0 %v565
        %v567 = vpop.xlane.xlu0 %566
        %v568 = vsel %vm310, %v546, 0.0
        %569 = vadd.xlane.f32.xlu0 %v568
        %v570 = vpop.xlane.xlu0 %569
        %571 = vrot.lane.b32.xlu0 %v353, 64
        %v572 = vpop.permute.xlu0 %571
        %573 = vrot.lane.b32.xlu0 %v356, 64
        %v574 = vpop.permute.xlu0 %573
        %575 = vrot.lane.b32.xlu0 %v359, 64
        %v576 = vpop.permute.xlu0 %575
        %577 = vrot.lane.b32.xlu0 %v362, 64
        %v578 = vpop.permute.xlu0 %577
        %v584 = vsel %vm310, %v532, 0
        %v587 = vsel %vm310, %v534, 0
        %v590 = vsel %vm310, %v536, 0
        %v593 = vsel %vm310, %v538, 0
        %595 = vmatpush.msra.mxu0 0.0
        %596 = vmatpush.msra.mxu0 0.0
        %597 = vmatpush.msra.mxu0 0.0
        %598 = vmatpush.msra.mxu0 0.0
        %599 = vmatpush.msra.mxu0 0.0
        %600 = vmatpush.msra.mxu0 0.0
        %601 = vmatpush.msra.mxu0 0.0
        %602 = vmatpush.msra.mxu0 0.0
        %603 = vmatpush.msra.mxu0 0.0
        %604 = vmatpush.msra.mxu0 0.0
        %605 = vmatpush.msra.mxu0 0.0
        %606 = vmatpush.msra.mxu0 0.0
        %607 = vmatpush.msra.mxu0 %v578
        %608 = vmatpush.msra.mxu0 %v576
        %609 = vmatpush.msra.mxu0 %v574
        %610 = vmatpush.msra.mxu0 %v572
        %611 = vmatmul.f32.gmra.mxu0 %v584
        %v612 = vpop.f32.mrf.mxu0
        %v613 = vadd.f32 0.0, %v612
        %614 = vmatmul.f32.gmra.mxu0 %v587
        %v615 = vpop.f32.mrf.mxu0
        %v616 = vadd.f32 0.0, %v615
        %617 = vmatmul.f32.gmra.mxu0 %v590
        %v618 = vpop.f32.mrf.mxu0
        %v619 = vadd.f32 0.0, %v618
        %620 = vmatmul.f32.gmra.mxu0 %v593
        %v621 = vpop.f32.mrf.mxu0
        %v622 = vadd.f32 0.0, %v621
        %623 = vdwg.mxu0
        %624 = vrot.lane.b32.xlu0 %v365, 64
        %v625 = vpop.permute.xlu0 %624
        %626 = vrot.lane.b32.xlu0 %v368, 64
        %v627 = vpop.permute.xlu0 %626
        %628 = vrot.lane.b32.xlu0 %v371, 64
        %v629 = vpop.permute.xlu0 %628
        %630 = vrot.lane.b32.xlu0 %v374, 64
        %v631 = vpop.permute.xlu0 %630
        %v637 = vsel %vm310, %v540, 0
        %v640 = vsel %vm310, %v542, 0
        %v643 = vsel %vm310, %v544, 0
        %v646 = vsel %vm310, %v546, 0
        %648 = vmatpush.msra.mxu0 0.0
        %649 = vmatpush.msra.mxu0 0.0
        %650 = vmatpush.msra.mxu0 0.0
        %651 = vmatpush.msra.mxu0 0.0
        %652 = vmatpush.msra.mxu0 0.0
        %653 = vmatpush.msra.mxu0 0.0
        %654 = vmatpush.msra.mxu0 0.0
        %655 = vmatpush.msra.mxu0 0.0
        %656 = vmatpush.msra.mxu0 0.0
        %657 = vmatpush.msra.mxu0 0.0
        %658 = vmatpush.msra.mxu0 0.0
        %659 = vmatpush.msra.mxu0 0.0
        %660 = vmatpush.msra.mxu0 %v631
        %661 = vmatpush.msra.mxu0 %v629
        %662 = vmatpush.msra.mxu0 %v627
        %663 = vmatpush.msra.mxu0 %v625
        %664 = vmatmul.f32.gmra.mxu0 %v637
        %v665 = vpop.f32.mrf.mxu0
        %v666 = vadd.f32 0.0, %v665
        %667 = vmatmul.f32.gmra.mxu0 %v640
        %v668 = vpop.f32.mrf.mxu0
        %v669 = vadd.f32 0.0, %v668
        %670 = vmatmul.f32.gmra.mxu0 %v643
        %v671 = vpop.f32.mrf.mxu0
        %v672 = vadd.f32 0.0, %v671
        %673 = vmatmul.f32.gmra.mxu0 %v646
        %v674 = vpop.f32.mrf.mxu0
        %v675 = vadd.f32 0.0, %v674
        %676 = vdwg.mxu0
        %v677 = vrcp.pop %v549
        %v678 = vmul.f32 %v549, %v677
        %v679 = vsub.f32 1.0, %v678
        %v680 = vmul.f32 %v677, %v679
        %v681 = vadd.f32 %v677, %v680
        %vm682 = vweird.f32 %v549
        %vm683 = vweird.f32 %v677
        %vm684 = vmor %vm682, %vm683
        %v685 = vsel %vm684, %v677, %v681
        %v686 = vand.u32 2147483647, %v549
        %vm687 = vcmp.eq.f32.partialorder %v686, 8.507059e+37
        %v688 = vand.u32 %v549, 2147483648
        %v689 = vor.u32 1.1754944e-38, %v688
        %v690 = vsel %vm687, %v689, %v685
        %v691 = vmul.f32 %v613, %v690
        %v692 = vrcp.pop %v552
        %v693 = vmul.f32 %v552, %v692
        %v694 = vsub.f32 1.0, %v693
        %v695 = vmul.f32 %v692, %v694
        %v696 = vadd.f32 %v692, %v695
        %vm697 = vweird.f32 %v552
        %vm698 = vweird.f32 %v692
        %vm699 = vmor %vm697, %vm698
        %v700 = vsel %vm699, %v692, %v696
        %v701 = vand.u32 2147483647, %v552
        %vm702 = vcmp.eq.f32.partialorder %v701, 8.507059e+37
        %v703 = vand.u32 %v552, 2147483648
        %v704 = vor.u32 1.1754944e-38, %v703
        %v705 = vsel %vm702, %v704, %v700
        %v706 = vmul.f32 %v616, %v705
        %v707 = vrcp.pop %v555
        %v708 = vmul.f32 %v555, %v707
        %v709 = vsub.f32 1.0, %v708
        %v710 = vmul.f32 %v707, %v709
        %v711 = vadd.f32 %v707, %v710
        %vm712 = vweird.f32 %v555
        %vm713 = vweird.f32 %v707
        %vm714 = vmor %vm712, %vm713
        %v715 = vsel %vm714, %v707, %v711
        %v716 = vand.u32 2147483647, %v555
        %vm717 = vcmp.eq.f32.partialorder %v716, 8.507059e+37
        %v718 = vand.u32 %v555, 2147483648
        %v719 = vor.u32 1.1754944e-38, %v718
        %v720 = vsel %vm717, %v719, %v715
        %v721 = vmul.f32 %v619, %v720
        %v722 = vrcp.pop %v558
        %v723 = vmul.f32 %v558, %v722
        %v724 = vsub.f32 1.0, %v723
        %v725 = vmul.f32 %v722, %v724
        %v726 = vadd.f32 %v722, %v725
        %vm727 = vweird.f32 %v558
        %vm728 = vweird.f32 %v722
        %vm729 = vmor %vm727, %vm728
        %v730 = vsel %vm729, %v722, %v726
        %v731 = vand.u32 2147483647, %v558
        %vm732 = vcmp.eq.f32.partialorder %v731, 8.507059e+37
        %v733 = vand.u32 %v558, 2147483648
        %v734 = vor.u32 1.1754944e-38, %v733
        %v735 = vsel %vm732, %v734, %v730
        %v736 = vmul.f32 %v622, %v735
        %v737 = vrcp.pop %v561
        %v738 = vmul.f32 %v561, %v737
        %v739 = vsub.f32 1.0, %v738
        %v740 = vmul.f32 %v737, %v739
        %v741 = vadd.f32 %v737, %v740
        %vm742 = vweird.f32 %v561
        %vm743 = vweird.f32 %v737
        %vm744 = vmor %vm742, %vm743
        %v745 = vsel %vm744, %v737, %v741
        %v746 = vand.u32 2147483647, %v561
        %vm747 = vcmp.eq.f32.partialorder %v746, 8.507059e+37
        %v748 = vand.u32 %v561, 2147483648
        %v749 = vor.u32 1.1754944e-38, %v748
        %v750 = vsel %vm747, %v749, %v745
        %v751 = vmul.f32 %v666, %v750
        %v752 = vrcp.pop %v564
        %v753 = vmul.f32 %v564, %v752
        %v754 = vsub.f32 1.0, %v753
        %v755 = vmul.f32 %v752, %v754
        %v756 = vadd.f32 %v752, %v755
        %vm757 = vweird.f32 %v564
        %vm758 = vweird.f32 %v752
        %vm759 = vmor %vm757, %vm758
        %v760 = vsel %vm759, %v752, %v756
        %v761 = vand.u32 2147483647, %v564
        %vm762 = vcmp.eq.f32.partialorder %v761, 8.507059e+37
        %v763 = vand.u32 %v564, 2147483648
        %v764 = vor.u32 1.1754944e-38, %v763
        %v765 = vsel %vm762, %v764, %v760
        %v766 = vmul.f32 %v669, %v765
        %v767 = vrcp.pop %v567
        %v768 = vmul.f32 %v567, %v767
        %v769 = vsub.f32 1.0, %v768
        %v770 = vmul.f32 %v767, %v769
        %v771 = vadd.f32 %v767, %v770
        %vm772 = vweird.f32 %v567
        %vm773 = vweird.f32 %v767
        %vm774 = vmor %vm772, %vm773
        %v775 = vsel %vm774, %v767, %v771
        %v776 = vand.u32 2147483647, %v567
        %vm777 = vcmp.eq.f32.partialorder %v776, 8.507059e+37
        %v778 = vand.u32 %v567, 2147483648
        %v779 = vor.u32 1.1754944e-38, %v778
        %v780 = vsel %vm777, %v779, %v775
        %v781 = vmul.f32 %v672, %v780
        %v782 = vrcp.pop %v570
        %v783 = vmul.f32 %v570, %v782
        %v784 = vsub.f32 1.0, %v783
        %v785 = vmul.f32 %v782, %v784
        %v786 = vadd.f32 %v782, %v785
        %vm787 = vweird.f32 %v570
        %vm788 = vweird.f32 %v782
        %vm789 = vmor %vm787, %vm788
        %v790 = vsel %vm789, %v782, %v786
        %v791 = vand.u32 2147483647, %v570
        %vm792 = vcmp.eq.f32.partialorder %v791, 8.507059e+37
        %v793 = vand.u32 %v570, 2147483648
        %v794 = vor.u32 1.1754944e-38, %v793
        %v795 = vsel %vm792, %v794, %v790
        %v796 = vmul.f32 %v675, %v795
        %797 = vst.msk [vmem:[#allocation2] sm:$0xff] %vm396, %v691
        %798 = vst.msk [vmem:[#allocation2 + $0x8] sm:$0xff] %vm396, %v706
        %799 = vst.msk [vmem:[#allocation2 + $0x10] sm:$0xff] %vm396, %v721
        %800 = vst.msk [vmem:[#allocation2 + $0x18] sm:$0xff] %vm396, %v736
        %801 = vst.msk [vmem:[#allocation2 + $0x20] sm:$0xff] %vm396, %v751
        %802 = vst.msk [vmem:[#allocation2 + $0x28] sm:$0xff] %vm396, %v766
        %803 = vst.msk [vmem:[#allocation2 + $0x30] sm:$0xff] %vm396, %v781
        %804 = vst.msk [vmem:[#allocation2 + $0x38] sm:$0xff] %vm396, %v796
        %805 = vrot.lane.b32.xlu0 %v353, 120
        %v806 = vpop.permute.xlu0 %805
        %807 = vrot.lane.b32.xlu0 %v356, 120
        %v808 = vpop.permute.xlu0 %807
        %809 = vrot.lane.b32.xlu0 %v359, 120
        %v810 = vpop.permute.xlu0 %809
        %811 = vrot.lane.b32.xlu0 %v362, 120
        %v812 = vpop.permute.xlu0 %811
        %813 = vrot.lane.b32.xlu0 %v353, 88
        %v814 = vpop.permute.xlu0 %813
        %815 = vrot.lane.b32.xlu0 %v356, 88
        %v816 = vpop.permute.xlu0 %815
        %817 = vrot.lane.b32.xlu0 %v359, 88
        %v818 = vpop.permute.xlu0 %817
        %819 = vrot.lane.b32.xlu0 %v362, 88
        %v820 = vpop.permute.xlu0 %819
        %v821 = vsel %vm396, %v806, 0
        %v823 = vsel %vm396, %v808, 0
        %v825 = vsel %vm396, %v810, 0
        %v827 = vsel %vm396, %v812, 0
        %v829 = vsel %vm396, %v814, 0
        %v831 = vsel %vm396, %v816, 0
        %v833 = vsel %vm396, %v818, 0
        %v835 = vsel %vm396, %v820, 0
        %837 = vmatpush.xpose.msra.mxu0 0.0
        %838 = vmatpush.xpose.msra.mxu0 0.0
        %839 = vmatpush.xpose.msra.mxu0 0.0
        %840 = vmatpush.xpose.msra.mxu0 0.0
        %841 = vmatpush.xpose.msra.mxu0 0.0
        %842 = vmatpush.xpose.msra.mxu0 0.0
        %843 = vmatpush.xpose.msra.mxu0 0.0
        %844 = vmatpush.xpose.msra.mxu0 0.0
        %845 = vmatpush.xpose.msra.mxu0 0.0
        %846 = vmatpush.xpose.msra.mxu0 0.0
        %847 = vmatpush.xpose.msra.mxu0 0.0
        %848 = vmatpush.xpose.msra.mxu0 0.0
        %849 = vmatpush.xpose.msra.mxu0 %v835
        %850 = vmatpush.xpose.msra.mxu0 %v833
        %851 = vmatpush.xpose.msra.mxu0 %v831
        %852 = vmatpush.xpose.msra.mxu0 %v829
        %853 = vmatmul.f32.gmra.mxu0 %v821
        %v854 = vpop.f32.mrf.mxu0
        %v855 = vadd.f32 %v376, %v854
        %856 = vmatmul.f32.gmra.mxu0 %v823
        %v857 = vpop.f32.mrf.mxu0
        %v858 = vadd.f32 %v377, %v857
        %859 = vmatmul.f32.gmra.mxu0 %v825
        %v860 = vpop.f32.mrf.mxu0
        %v861 = vadd.f32 %v378, %v860
        %862 = vmatmul.f32.gmra.mxu0 %v827
        %v863 = vpop.f32.mrf.mxu0
        %v864 = vadd.f32 %v379, %v863
        %865 = vdwg.mxu0
        %866 = vrot.lane.b32.xlu0 %v365, 120
        %v867 = vpop.permute.xlu0 %866
        %868 = vrot.lane.b32.xlu0 %v368, 120
        %v869 = vpop.permute.xlu0 %868
        %870 = vrot.lane.b32.xlu0 %v371, 120
        %v871 = vpop.permute.xlu0 %870
        %872 = vrot.lane.b32.xlu0 %v374, 120
        %v873 = vpop.permute.xlu0 %872
        %874 = vrot.lane.b32.xlu0 %v365, 88
        %v875 = vpop.permute.xlu0 %874
        %876 = vrot.lane.b32.xlu0 %v368, 88
        %v877 = vpop.permute.xlu0 %876
        %878 = vrot.lane.b32.xlu0 %v371, 88
        %v879 = vpop.permute.xlu0 %878
        %880 = vrot.lane.b32.xlu0 %v374, 88
        %v881 = vpop.permute.xlu0 %880
        %v882 = vsel %vm396, %v867, 0
        %v884 = vsel %vm396, %v869, 0
        %v886 = vsel %vm396, %v871, 0
        %v888 = vsel %vm396, %v873, 0
        %v890 = vsel %vm396, %v875, 0
        %v892 = vsel %vm396, %v877, 0
        %v894 = vsel %vm396, %v879, 0
        %v896 = vsel %vm396, %v881, 0
        %898 = vmatpush.xpose.msra.mxu0 0.0
        %899 = vmatpush.xpose.msra.mxu0 0.0
        %900 = vmatpush.xpose.msra.mxu0 0.0
        %901 = vmatpush.xpose.msra.mxu0 0.0
        %902 = vmatpush.xpose.msra.mxu0 0.0
        %903 = vmatpush.xpose.msra.mxu0 0.0
        %904 = vmatpush.xpose.msra.mxu0 0.0
        %905 = vmatpush.xpose.msra.mxu0 0.0
        %906 = vmatpush.xpose.msra.mxu0 0.0
        %907 = vmatpush.xpose.msra.mxu0 0.0
        %908 = vmatpush.xpose.msra.mxu0 0.0
        %909 = vmatpush.xpose.msra.mxu0 0.0
        %910 = vmatpush.xpose.msra.mxu0 %v896
        %911 = vmatpush.xpose.msra.mxu0 %v894
        %912 = vmatpush.xpose.msra.mxu0 %v892
        %913 = vmatpush.xpose.msra.mxu0 %v890
        %914 = vmatmul.f32.gmra.mxu0 %v882
        %v915 = vpop.f32.mrf.mxu0
        %v916 = vadd.f32 %v380, %v915
        %917 = vmatmul.f32.gmra.mxu0 %v884
        %v918 = vpop.f32.mrf.mxu0
        %v919 = vadd.f32 %v381, %v918
        %920 = vmatmul.f32.gmra.mxu0 %v886
        %v921 = vpop.f32.mrf.mxu0
        %v922 = vadd.f32 %v382, %v921
        %923 = vmatmul.f32.gmra.mxu0 %v888
        %v924 = vpop.f32.mrf.mxu0
        %v925 = vadd.f32 %v383, %v924
        %926 = vdwg.mxu0
        %v927 = vsel %vm310, %v855, -inf
        %928 = vmax.xlane.f32.xlu0 %v927
        %v929 = vpop.xlane.xlu0 %928
        %v930 = vsel %vm310, %v858, -inf
        %931 = vmax.xlane.f32.xlu0 %v930
        %v932 = vpop.xlane.xlu0 %931
        %v933 = vsel %vm310, %v861, -inf
        %934 = vmax.xlane.f32.xlu0 %v933
        %v935 = vpop.xlane.xlu0 %934
        %v936 = vsel %vm310, %v864, -inf
        %937 = vmax.xlane.f32.xlu0 %v936
        %v938 = vpop.xlane.xlu0 %937
        %v939 = vsel %vm310, %v916, -inf
        %940 = vmax.xlane.f32.xlu0 %v939
        %v941 = vpop.xlane.xlu0 %940
        %v942 = vsel %vm310, %v919, -inf
        %943 = vmax.xlane.f32.xlu0 %v942
        %v944 = vpop.xlane.xlu0 %943
        %v945 = vsel %vm310, %v922, -inf
        %946 = vmax.xlane.f32.xlu0 %v945
        %v947 = vpop.xlane.xlu0 %946
        %v948 = vsel %vm310, %v925, -inf
        %949 = vmax.xlane.f32.xlu0 %v948
        %v950 = vpop.xlane.xlu0 %949
        %v951 = vsub.f32 %v855, %v929
        %v952 = vsub.f32 %v858, %v932
        %v953 = vsub.f32 %v861, %v935
        %v954 = vsub.f32 %v864, %v938
        %v955 = vsub.f32 %v916, %v941
        %v956 = vsub.f32 %v919, %v944
        %v957 = vsub.f32 %v922, %v947
        %v958 = vsub.f32 %v925, %v950
        %v959 = vmul.f32 %v951, 1.442695
        %v960 = vpow.pop %v959
        %v961 = vmul.f32 %v952, 1.442695
        %v962 = vpow.pop %v961
        %v963 = vmul.f32 %v953, 1.442695
        %v964 = vpow.pop %v963
        %v965 = vmul.f32 %v954, 1.442695
        %v966 = vpow.pop %v965
        %v967 = vmul.f32 %v955, 1.442695
        %v968 = vpow.pop %v967
        %v969 = vmul.f32 %v956, 1.442695
        %v970 = vpow.pop %v969
        %v971 = vmul.f32 %v957, 1.442695
        %v972 = vpow.pop %v971
        %v973 = vmul.f32 %v958, 1.442695
        %v974 = vpow.pop %v973
        %v975 = vsel %vm310, %v960, 0.0
        %976 = vadd.xlane.f32.xlu0 %v975
        %v977 = vpop.xlane.xlu0 %976
        %v978 = vsel %vm310, %v962, 0.0
        %979 = vadd.xlane.f32.xlu0 %v978
        %v980 = vpop.xlane.xlu0 %979
        %v981 = vsel %vm310, %v964, 0.0
        %982 = vadd.xlane.f32.xlu0 %v981
        %v983 = vpop.xlane.xlu0 %982
        %v984 = vsel %vm310, %v966, 0.0
        %985 = vadd.xlane.f32.xlu0 %v984
        %v986 = vpop.xlane.xlu0 %985
        %v987 = vsel %vm310, %v968, 0.0
        %988 = vadd.xlane.f32.xlu0 %v987
        %v989 = vpop.xlane.xlu0 %988
        %v990 = vsel %vm310, %v970, 0.0
        %991 = vadd.xlane.f32.xlu0 %v990
        %v992 = vpop.xlane.xlu0 %991
        %v993 = vsel %vm310, %v972, 0.0
        %994 = vadd.xlane.f32.xlu0 %v993
        %v995 = vpop.xlane.xlu0 %994
        %v996 = vsel %vm310, %v974, 0.0
        %997 = vadd.xlane.f32.xlu0 %v996
        %v998 = vpop.xlane.xlu0 %997
        %999 = vrot.lane.b32.xlu0 %v353, 56
        %v1000 = vpop.permute.xlu0 %999
        %1001 = vrot.lane.b32.xlu0 %v356, 56
        %v1002 = vpop.permute.xlu0 %1001
        %1003 = vrot.lane.b32.xlu0 %v359, 56
        %v1004 = vpop.permute.xlu0 %1003
        %1005 = vrot.lane.b32.xlu0 %v362, 56
        %v1006 = vpop.permute.xlu0 %1005
        %v1012 = vsel %vm310, %v960, 0
        %v1015 = vsel %vm310, %v962, 0
        %v1018 = vsel %vm310, %v964, 0
        %v1021 = vsel %vm310, %v966, 0
        %1023 = vmatpush.msra.mxu0 0.0
        %1024 = vmatpush.msra.mxu0 0.0
        %1025 = vmatpush.msra.mxu0 0.0
        %1026 = vmatpush.msra.mxu0 0.0
        %1027 = vmatpush.msra.mxu0 0.0
        %1028 = vmatpush.msra.mxu0 0.0
        %1029 = vmatpush.msra.mxu0 0.0
        %1030 = vmatpush.msra.mxu0 0.0
        %1031 = vmatpush.msra.mxu0 0.0
        %1032 = vmatpush.msra.mxu0 0.0
        %1033 = vmatpush.msra.mxu0 0.0
        %1034 = vmatpush.msra.mxu0 0.0
        %1035 = vmatpush.msra.mxu0 %v1006
        %1036 = vmatpush.msra.mxu0 %v1004
        %1037 = vmatpush.msra.mxu0 %v1002
        %1038 = vmatpush.msra.mxu0 %v1000
        %1039 = vmatmul.f32.gmra.mxu0 %v1012
        %v1040 = vpop.f32.mrf.mxu0
        %v1041 = vadd.f32 0.0, %v1040
        %1042 = vmatmul.f32.gmra.mxu0 %v1015
        %v1043 = vpop.f32.mrf.mxu0
        %v1044 = vadd.f32 0.0, %v1043
        %1045 = vmatmul.f32.gmra.mxu0 %v1018
        %v1046 = vpop.f32.mrf.mxu0
        %v1047 = vadd.f32 0.0, %v1046
        %1048 = vmatmul.f32.gmra.mxu0 %v1021
        %v1049 = vpop.f32.mrf.mxu0
        %v1050 = vadd.f32 0.0, %v1049
        %1051 = vdwg.mxu0
        %1052 = vrot.lane.b32.xlu0 %v365, 56
        %v1053 = vpop.permute.xlu0 %1052
        %1054 = vrot.lane.b32.xlu0 %v368, 56
        %v1055 = vpop.permute.xlu0 %1054
        %1056 = vrot.lane.b32.xlu0 %v371, 56
        %v1057 = vpop.permute.xlu0 %1056
        %1058 = vrot.lane.b32.xlu0 %v374, 56
        %v1059 = vpop.permute.xlu0 %1058
        %v1065 = vsel %vm310, %v968, 0
        %v1068 = vsel %vm310, %v970, 0
        %v1071 = vsel %vm310, %v972, 0
        %v1074 = vsel %vm310, %v974, 0
        %1076 = vmatpush.msra.mxu0 0.0
        %1077 = vmatpush.msra.mxu0 0.0
        %1078 = vmatpush.msra.mxu0 0.0
        %1079 = vmatpush.msra.mxu0 0.0
        %1080 = vmatpush.msra.mxu0 0.0
        %1081 = vmatpush.msra.mxu0 0.0
        %1082 = vmatpush.msra.mxu0 0.0
        %1083 = vmatpush.msra.mxu0 0.0
        %1084 = vmatpush.msra.mxu0 0.0
        %1085 = vmatpush.msra.mxu0 0.0
        %1086 = vmatpush.msra.mxu0 0.0
        %1087 = vmatpush.msra.mxu0 0.0
        %1088 = vmatpush.msra.mxu0 %v1059
        %1089 = vmatpush.msra.mxu0 %v1057
        %1090 = vmatpush.msra.mxu0 %v1055
        %1091 = vmatpush.msra.mxu0 %v1053
        %1092 = vmatmul.f32.gmra.mxu0 %v1065
        %v1093 = vpop.f32.mrf.mxu0
        %v1094 = vadd.f32 0.0, %v1093
        %1095 = vmatmul.f32.gmra.mxu0 %v1068
        %v1096 = vpop.f32.mrf.mxu0
        %v1097 = vadd.f32 0.0, %v1096
        %1098 = vmatmul.f32.gmra.mxu0 %v1071
        %v1099 = vpop.f32.mrf.mxu0
        %v1100 = vadd.f32 0.0, %v1099
        %1101 = vmatmul.f32.gmra.mxu0 %v1074
        %v1102 = vpop.f32.mrf.mxu0
        %v1103 = vadd.f32 0.0, %v1102
        %1104 = vdwg.mxu0
        %v1105 = vrcp.pop %v977
        %v1106 = vmul.f32 %v977, %v1105
        %v1107 = vsub.f32 1.0, %v1106
        %v1108 = vmul.f32 %v1105, %v1107
        %v1109 = vadd.f32 %v1105, %v1108
        %vm1110 = vweird.f32 %v977
        %vm1111 = vweird.f32 %v1105
        %vm1112 = vmor %vm1110, %vm1111
        %v1113 = vsel %vm1112, %v1105, %v1109
        %v1114 = vand.u32 2147483647, %v977
        %vm1115 = vcmp.eq.f32.partialorder %v1114, 8.507059e+37
        %v1116 = vand.u32 %v977, 2147483648
        %v1117 = vor.u32 1.1754944e-38, %v1116
        %v1118 = vsel %vm1115, %v1117, %v1113
        %v1119 = vmul.f32 %v1041, %v1118
        %v1120 = vrcp.pop %v980
        %v1121 = vmul.f32 %v980, %v1120
        %v1122 = vsub.f32 1.0, %v1121
        %v1123 = vmul.f32 %v1120, %v1122
        %v1124 = vadd.f32 %v1120, %v1123
        %vm1125 = vweird.f32 %v980
        %vm1126 = vweird.f32 %v1120
        %vm1127 = vmor %vm1125, %vm1126
        %v1128 = vsel %vm1127, %v1120, %v1124
        %v1129 = vand.u32 2147483647, %v980
        %vm1130 = vcmp.eq.f32.partialorder %v1129, 8.507059e+37
        %v1131 = vand.u32 %v980, 2147483648
        %v1132 = vor.u32 1.1754944e-38, %v1131
        %v1133 = vsel %vm1130, %v1132, %v1128
        %v1134 = vmul.f32 %v1044, %v1133
        %v1135 = vrcp.pop %v983
        %v1136 = vmul.f32 %v983, %v1135
        %v1137 = vsub.f32 1.0, %v1136
        %v1138 = vmul.f32 %v1135, %v1137
        %v1139 = vadd.f32 %v1135, %v1138
        %vm1140 = vweird.f32 %v983
        %vm1141 = vweird.f32 %v1135
        %vm1142 = vmor %vm1140, %vm1141
        %v1143 = vsel %vm1142, %v1135, %v1139
        %v1144 = vand.u32 2147483647, %v983
        %vm1145 = vcmp.eq.f32.partialorder %v1144, 8.507059e+37
        %v1146 = vand.u32 %v983, 2147483648
        %v1147 = vor.u32 1.1754944e-38, %v1146
        %v1148 = vsel %vm1145, %v1147, %v1143
        %v1149 = vmul.f32 %v1047, %v1148
        %v1150 = vrcp.pop %v986
        %v1151 = vmul.f32 %v986, %v1150
        %v1152 = vsub.f32 1.0, %v1151
        %v1153 = vmul.f32 %v1150, %v1152
        %v1154 = vadd.f32 %v1150, %v1153
        %vm1155 = vweird.f32 %v986
        %vm1156 = vweird.f32 %v1150
        %vm1157 = vmor %vm1155, %vm1156
        %v1158 = vsel %vm1157, %v1150, %v1154
        %v1159 = vand.u32 2147483647, %v986
        %vm1160 = vcmp.eq.f32.partialorder %v1159, 8.507059e+37
        %v1161 = vand.u32 %v986, 2147483648
        %v1162 = vor.u32 1.1754944e-38, %v1161
        %v1163 = vsel %vm1160, %v1162, %v1158
        %v1164 = vmul.f32 %v1050, %v1163
        %v1165 = vrcp.pop %v989
        %v1166 = vmul.f32 %v989, %v1165
        %v1167 = vsub.f32 1.0, %v1166
        %v1168 = vmul.f32 %v1165, %v1167
        %v1169 = vadd.f32 %v1165, %v1168
        %vm1170 = vweird.f32 %v989
        %vm1171 = vweird.f32 %v1165
        %vm1172 = vmor %vm1170, %vm1171
        %v1173 = vsel %vm1172, %v1165, %v1169
        %v1174 = vand.u32 2147483647, %v989
        %vm1175 = vcmp.eq.f32.partialorder %v1174, 8.507059e+37
        %v1176 = vand.u32 %v989, 2147483648
        %v1177 = vor.u32 1.1754944e-38, %v1176
        %v1178 = vsel %vm1175, %v1177, %v1173
        %v1179 = vmul.f32 %v1094, %v1178
        %v1180 = vrcp.pop %v992
        %v1181 = vmul.f32 %v992, %v1180
        %v1182 = vsub.f32 1.0, %v1181
        %v1183 = vmul.f32 %v1180, %v1182
        %v1184 = vadd.f32 %v1180, %v1183
        %vm1185 = vweird.f32 %v992
        %vm1186 = vweird.f32 %v1180
        %vm1187 = vmor %vm1185, %vm1186
        %v1188 = vsel %vm1187, %v1180, %v1184
        %v1189 = vand.u32 2147483647, %v992
        %vm1190 = vcmp.eq.f32.partialorder %v1189, 8.507059e+37
        %v1191 = vand.u32 %v992, 2147483648
        %v1192 = vor.u32 1.1754944e-38, %v1191
        %v1193 = vsel %vm1190, %v1192, %v1188
        %v1194 = vmul.f32 %v1097, %v1193
        %v1195 = vrcp.pop %v995
        %v1196 = vmul.f32 %v995, %v1195
        %v1197 = vsub.f32 1.0, %v1196
        %v1198 = vmul.f32 %v1195, %v1197
        %v1199 = vadd.f32 %v1195, %v1198
        %vm1200 = vweird.f32 %v995
        %vm1201 = vweird.f32 %v1195
        %vm1202 = vmor %vm1200, %vm1201
        %v1203 = vsel %vm1202, %v1195, %v1199
        %v1204 = vand.u32 2147483647, %v995
        %vm1205 = vcmp.eq.f32.partialorder %v1204, 8.507059e+37
        %v1206 = vand.u32 %v995, 2147483648
        %v1207 = vor.u32 1.1754944e-38, %v1206
        %v1208 = vsel %vm1205, %v1207, %v1203
        %v1209 = vmul.f32 %v1100, %v1208
        %v1210 = vrcp.pop %v998
        %v1211 = vmul.f32 %v998, %v1210
        %v1212 = vsub.f32 1.0, %v1211
        %v1213 = vmul.f32 %v1210, %v1212
        %v1214 = vadd.f32 %v1210, %v1213
        %vm1215 = vweird.f32 %v998
        %vm1216 = vweird.f32 %v1210
        %vm1217 = vmor %vm1215, %vm1216
        %v1218 = vsel %vm1217, %v1210, %v1214
        %v1219 = vand.u32 2147483647, %v998
        %vm1220 = vcmp.eq.f32.partialorder %v1219, 8.507059e+37
        %v1221 = vand.u32 %v998, 2147483648
        %v1222 = vor.u32 1.1754944e-38, %v1221
        %v1223 = vsel %vm1220, %v1222, %v1218
        %v1224 = vmul.f32 %v1103, %v1223
        %1233 = vrot.lane.b32.xlu0 %v1119, 8
        %v1234 = vpop.permute.xlu0 %1233
        %1235 = vrot.lane.b32.xlu0 %v1134, 8
        %v1236 = vpop.permute.xlu0 %1235
        %1237 = vrot.lane.b32.xlu0 %v1149, 8
        %v1238 = vpop.permute.xlu0 %1237
        %1239 = vrot.lane.b32.xlu0 %v1164, 8
        %v1240 = vpop.permute.xlu0 %1239
        %1241 = vrot.lane.b32.xlu0 %v1179, 8
        %v1242 = vpop.permute.xlu0 %1241
        %1243 = vrot.lane.b32.xlu0 %v1194, 8
        %v1244 = vpop.permute.xlu0 %1243
        %1245 = vrot.lane.b32.xlu0 %v1209, 8
        %v1246 = vpop.permute.xlu0 %1245
        %1247 = vrot.lane.b32.xlu0 %v1224, 8
        %v1248 = vpop.permute.xlu0 %1247
        %vm1257 = vcmask 130112
        %1258 = vst.msk [vmem:[#allocation2] sm:$0xff] %vm1257, %v1234
        %1259 = vst.msk [vmem:[#allocation2 + $0x8] sm:$0xff] %vm1257, %v1236
        %1260 = vst.msk [vmem:[#allocation2 + $0x10] sm:$0xff] %vm1257, %v1238
        %1261 = vst.msk [vmem:[#allocation2 + $0x18] sm:$0xff] %vm1257, %v1240
        %1262 = vst.msk [vmem:[#allocation2 + $0x20] sm:$0xff] %vm1257, %v1242
        %1263 = vst.msk [vmem:[#allocation2 + $0x28] sm:$0xff] %vm1257, %v1244
        %1264 = vst.msk [vmem:[#allocation2 + $0x30] sm:$0xff] %vm1257, %v1246
        %1265 = vst.msk [vmem:[#allocation2 + $0x38] sm:$0xff] %vm1257, %v1248
        %1266 = vrot.lane.b32.xlu0 %v353, 112
        %v1267 = vpop.permute.xlu0 %1266
        %1268 = vrot.lane.b32.xlu0 %v356, 112
        %v1269 = vpop.permute.xlu0 %1268
        %1270 = vrot.lane.b32.xlu0 %v359, 112
        %v1271 = vpop.permute.xlu0 %1270
        %1272 = vrot.lane.b32.xlu0 %v362, 112
        %v1273 = vpop.permute.xlu0 %1272
        %1274 = vrot.lane.b32.xlu0 %v353, 80
        %v1275 = vpop.permute.xlu0 %1274
        %1276 = vrot.lane.b32.xlu0 %v356, 80
        %v1277 = vpop.permute.xlu0 %1276
        %1278 = vrot.lane.b32.xlu0 %v359, 80
        %v1279 = vpop.permute.xlu0 %1278
        %1280 = vrot.lane.b32.xlu0 %v362, 80
        %v1281 = vpop.permute.xlu0 %1280
        %v1282 = vsel %vm396, %v1267, 0
        %v1284 = vsel %vm396, %v1269, 0
        %v1286 = vsel %vm396, %v1271, 0
        %v1288 = vsel %vm396, %v1273, 0
        %v1290 = vsel %vm396, %v1275, 0
        %v1292 = vsel %vm396, %v1277, 0
        %v1294 = vsel %vm396, %v1279, 0
        %v1296 = vsel %vm396, %v1281, 0
        %1298 = vmatpush.xpose.msra.mxu0 0.0
        %1299 = vmatpush.xpose.msra.mxu0 0.0
        %1300 = vmatpush.xpose.msra.mxu0 0.0
        %1301 = vmatpush.xpose.msra.mxu0 0.0
        %1302 = vmatpush.xpose.msra.mxu0 0.0
        %1303 = vmatpush.xpose.msra.mxu0 0.0
        %1304 = vmatpush.xpose.msra.mxu0 0.0
        %1305 = vmatpush.xpose.msra.mxu0 0.0
        %1306 = vmatpush.xpose.msra.mxu0 0.0
        %1307 = vmatpush.xpose.msra.mxu0 0.0
        %1308 = vmatpush.xpose.msra.mxu0 0.0
        %1309 = vmatpush.xpose.msra.mxu0 0.0
        %1310 = vmatpush.xpose.msra.mxu0 %v1296
        %1311 = vmatpush.xpose.msra.mxu0 %v1294
        %1312 = vmatpush.xpose.msra.mxu0 %v1292
        %1313 = vmatpush.xpose.msra.mxu0 %v1290
        %1314 = vmatmul.f32.gmra.mxu0 %v1282
        %v1315 = vpop.f32.mrf.mxu0
        %v1316 = vadd.f32 %v376, %v1315
        %1317 = vmatmul.f32.gmra.mxu0 %v1284
        %v1318 = vpop.f32.mrf.mxu0
        %v1319 = vadd.f32 %v377, %v1318
        %1320 = vmatmul.f32.gmra.mxu0 %v1286
        %v1321 = vpop.f32.mrf.mxu0
        %v1322 = vadd.f32 %v378, %v1321
        %1323 = vmatmul.f32.gmra.mxu0 %v1288
        %v1324 = vpop.f32.mrf.mxu0
        %v1325 = vadd.f32 %v379, %v1324
        %1326 = vdwg.mxu0
        %1327 = vrot.lane.b32.xlu0 %v365, 112
        %v1328 = vpop.permute.xlu0 %1327
        %1329 = vrot.lane.b32.xlu0 %v368, 112
        %v1330 = vpop.permute.xlu0 %1329
        %1331 = vrot.lane.b32.xlu0 %v371, 112
        %v1332 = vpop.permute.xlu0 %1331
        %1333 = vrot.lane.b32.xlu0 %v374, 112
        %v1334 = vpop.permute.xlu0 %1333
        %1335 = vrot.lane.b32.xlu0 %v365, 80
        %v1336 = vpop.permute.xlu0 %1335
        %1337 = vrot.lane.b32.xlu0 %v368, 80
        %v1338 = vpop.permute.xlu0 %1337
        %1339 = vrot.lane.b32.xlu0 %v371, 80
        %v1340 = vpop.permute.xlu0 %1339
        %1341 = vrot.lane.b32.xlu0 %v374, 80
        %v1342 = vpop.permute.xlu0 %1341
        %v1343 = vsel %vm396, %v1328, 0
        %v1345 = vsel %vm396, %v1330, 0
        %v1347 = vsel %vm396, %v1332, 0
        %v1349 = vsel %vm396, %v1334, 0
        %v1351 = vsel %vm396, %v1336, 0
        %v1353 = vsel %vm396, %v1338, 0
        %v1355 = vsel %vm396, %v1340, 0
        %v1357 = vsel %vm396, %v1342, 0
        %1359 = vmatpush.xpose.msra.mxu0 0.0
        %1360 = vmatpush.xpose.msra.mxu0 0.0
        %1361 = vmatpush.xpose.msra.mxu0 0.0
        %1362 = vmatpush.xpose.msra.mxu0 0.0
        %1363 = vmatpush.xpose.msra.mxu0 0.0
        %1364 = vmatpush.xpose.msra.mxu0 0.0
        %1365 = vmatpush.xpose.msra.mxu0 0.0
        %1366 = vmatpush.xpose.msra.mxu0 0.0
        %1367 = vmatpush.xpose.msra.mxu0 0.0
        %1368 = vmatpush.xpose.msra.mxu0 0.0
        %1369 = vmatpush.xpose.msra.mxu0 0.0
        %1370 = vmatpush.xpose.msra.mxu0 0.0
        %1371 = vmatpush.xpose.msra.mxu0 %v1357
        %1372 = vmatpush.xpose.msra.mxu0 %v1355
        %1373 = vmatpush.xpose.msra.mxu0 %v1353
        %1374 = vmatpush.xpose.msra.mxu0 %v1351
        %1375 = vmatmul.f32.gmra.mxu0 %v1343
        %v1376 = vpop.f32.mrf.mxu0
        %v1377 = vadd.f32 %v380, %v1376
        %1378 = vmatmul.f32.gmra.mxu0 %v1345
        %v1379 = vpop.f32.mrf.mxu0
        %v1380 = vadd.f32 %v381, %v1379
        %1381 = vmatmul.f32.gmra.mxu0 %v1347
        %v1382 = vpop.f32.mrf.mxu0
        %v1383 = vadd.f32 %v382, %v1382
        %1384 = vmatmul.f32.gmra.mxu0 %v1349
        %v1385 = vpop.f32.mrf.mxu0
        %v1386 = vadd.f32 %v383, %v1385
        %1387 = vdwg.mxu0
        %v1388 = vsel %vm310, %v1316, -inf
        %1389 = vmax.xlane.f32.xlu0 %v1388
        %v1390 = vpop.xlane.xlu0 %1389
        %v1391 = vsel %vm310, %v1319, -inf
        %1392 = vmax.xlane.f32.xlu0 %v1391
        %v1393 = vpop.xlane.xlu0 %1392
        %v1394 = vsel %vm310, %v1322, -inf
        %1395 = vmax.xlane.f32.xlu0 %v1394
        %v1396 = vpop.xlane.xlu0 %1395
        %v1397 = vsel %vm310, %v1325, -inf
        %1398 = vmax.xlane.f32.xlu0 %v1397
        %v1399 = vpop.xlane.xlu0 %1398
        %v1400 = vsel %vm310, %v1377, -inf
        %1401 = vmax.xlane.f32.xlu0 %v1400
        %v1402 = vpop.xlane.xlu0 %1401
        %v1403 = vsel %vm310, %v1380, -inf
        %1404 = vmax.xlane.f32.xlu0 %v1403
        %v1405 = vpop.xlane.xlu0 %1404
        %v1406 = vsel %vm310, %v1383, -inf
        %1407 = vmax.xlane.f32.xlu0 %v1406
        %v1408 = vpop.xlane.xlu0 %1407
        %v1409 = vsel %vm310, %v1386, -inf
        %1410 = vmax.xlane.f32.xlu0 %v1409
        %v1411 = vpop.xlane.xlu0 %1410
        %v1412 = vsub.f32 %v1316, %v1390
        %v1413 = vsub.f32 %v1319, %v1393
        %v1414 = vsub.f32 %v1322, %v1396
        %v1415 = vsub.f32 %v1325, %v1399
        %v1416 = vsub.f32 %v1377, %v1402
        %v1417 = vsub.f32 %v1380, %v1405
        %v1418 = vsub.f32 %v1383, %v1408
        %v1419 = vsub.f32 %v1386, %v1411
        %v1420 = vmul.f32 %v1412, 1.442695
        %v1421 = vpow.pop %v1420
        %v1422 = vmul.f32 %v1413, 1.442695
        %v1423 = vpow.pop %v1422
        %v1424 = vmul.f32 %v1414, 1.442695
        %v1425 = vpow.pop %v1424
        %v1426 = vmul.f32 %v1415, 1.442695
        %v1427 = vpow.pop %v1426
        %v1428 = vmul.f32 %v1416, 1.442695
        %v1429 = vpow.pop %v1428
        %v1430 = vmul.f32 %v1417, 1.442695
        %v1431 = vpow.pop %v1430
        %v1432 = vmul.f32 %v1418, 1.442695
        %v1433 = vpow.pop %v1432
        %v1434 = vmul.f32 %v1419, 1.442695
        %v1435 = vpow.pop %v1434
        %v1436 = vsel %vm310, %v1421, 0.0
        %1437 = vadd.xlane.f32.xlu0 %v1436
        %v1438 = vpop.xlane.xlu0 %1437
        %v1439 = vsel %vm310, %v1423, 0.0
        %1440 = vadd.xlane.f32.xlu0 %v1439
        %v1441 = vpop.xlane.xlu0 %1440
        %v1442 = vsel %vm310, %v1425, 0.0
        %1443 = vadd.xlane.f32.xlu0 %v1442
        %v1444 = vpop.xlane.xlu0 %1443
        %v1445 = vsel %vm310, %v1427, 0.0
        %1446 = vadd.xlane.f32.xlu0 %v1445
        %v1447 = vpop.xlane.xlu0 %1446
        %v1448 = vsel %vm310, %v1429, 0.0
        %1449 = vadd.xlane.f32.xlu0 %v1448
        %v1450 = vpop.xlane.xlu0 %1449
        %v1451 = vsel %vm310, %v1431, 0.0
        %1452 = vadd.xlane.f32.xlu0 %v1451
        %v1453 = vpop.xlane.xlu0 %1452
        %v1454 = vsel %vm310, %v1433, 0.0
        %1455 = vadd.xlane.f32.xlu0 %v1454
        %v1456 = vpop.xlane.xlu0 %1455
        %v1457 = vsel %vm310, %v1435, 0.0
        %1458 = vadd.xlane.f32.xlu0 %v1457
        %v1459 = vpop.xlane.xlu0 %1458
        %1460 = vrot.lane.b32.xlu0 %v353, 48
        %v1461 = vpop.permute.xlu0 %1460
        %1462 = vrot.lane.b32.xlu0 %v356, 48
        %v1463 = vpop.permute.xlu0 %1462
        %1464 = vrot.lane.b32.xlu0 %v359, 48
        %v1465 = vpop.permute.xlu0 %1464
        %1466 = vrot.lane.b32.xlu0 %v362, 48
        %v1467 = vpop.permute.xlu0 %1466
        %v1473 = vsel %vm310, %v1421, 0
        %v1476 = vsel %vm310, %v1423, 0
        %v1479 = vsel %vm310, %v1425, 0
        %v1482 = vsel %vm310, %v1427, 0
        %1484 = vmatpush.msra.mxu0 0.0
        %1485 = vmatpush.msra.mxu0 0.0
        %1486 = vmatpush.msra.mxu0 0.0
        %1487 = vmatpush.msra.mxu0 0.0
        %1488 = vmatpush.msra.mxu0 0.0
        %1489 = vmatpush.msra.mxu0 0.0
        %1490 = vmatpush.msra.mxu0 0.0
        %1491 = vmatpush.msra.mxu0 0.0
        %1492 = vmatpush.msra.mxu0 0.0
        %1493 = vmatpush.msra.mxu0 0.0
        %1494 = vmatpush.msra.mxu0 0.0
        %1495 = vmatpush.msra.mxu0 0.0
        %1496 = vmatpush.msra.mxu0 %v1467
        %1497 = vmatpush.msra.mxu0 %v1465
        %1498 = vmatpush.msra.mxu0 %v1463
        %1499 = vmatpush.msra.mxu0 %v1461
        %1500 = vmatmul.f32.gmra.mxu0 %v1473
        %v1501 = vpop.f32.mrf.mxu0
        %v1502 = vadd.f32 0.0, %v1501
        %1503 = vmatmul.f32.gmra.mxu0 %v1476
        %v1504 = vpop.f32.mrf.mxu0
        %v1505 = vadd.f32 0.0, %v1504
        %1506 = vmatmul.f32.gmra.mxu0 %v1479
        %v1507 = vpop.f32.mrf.mxu0
        %v1508 = vadd.f32 0.0, %v1507
        %1509 = vmatmul.f32.gmra.mxu0 %v1482
        %v1510 = vpop.f32.mrf.mxu0
        %v1511 = vadd.f32 0.0, %v1510
        %1512 = vdwg.mxu0
        %1513 = vrot.lane.b32.xlu0 %v365, 48
        %v1514 = vpop.permute.xlu0 %1513
        %1515 = vrot.lane.b32.xlu0 %v368, 48
        %v1516 = vpop.permute.xlu0 %1515
        %1517 = vrot.lane.b32.xlu0 %v371, 48
        %v1518 = vpop.permute.xlu0 %1517
        %1519 = vrot.lane.b32.xlu0 %v374, 48
        %v1520 = vpop.permute.xlu0 %1519
        %v1526 = vsel %vm310, %v1429, 0
        %v1529 = vsel %vm310, %v1431, 0
        %v1532 = vsel %vm310, %v1433, 0
        %v1535 = vsel %vm310, %v1435, 0
        %1537 = vmatpush.msra.mxu0 0.0
        %1538 = vmatpush.msra.mxu0 0.0
        %1539 = vmatpush.msra.mxu0 0.0
        %1540 = vmatpush.msra.mxu0 0.0
        %1541 = vmatpush.msra.mxu0 0.0
        %1542 = vmatpush.msra.mxu0 0.0
        %1543 = vmatpush.msra.mxu0 0.0
        %1544 = vmatpush.msra.mxu0 0.0
        %1545 = vmatpush.msra.mxu0 0.0
        %1546 = vmatpush.msra.mxu0 0.0
        %1547 = vmatpush.msra.mxu0 0.0
        %1548 = vmatpush.msra.mxu0 0.0
        %1549 = vmatpush.msra.mxu0 %v1520
        %1550 = vmatpush.msra.mxu0 %v1518
        %1551 = vmatpush.msra.mxu0 %v1516
        %1552 = vmatpush.msra.mxu0 %v1514
        %1553 = vmatmul.f32.gmra.mxu0 %v1526
        %v1554 = vpop.f32.mrf.mxu0
        %v1555 = vadd.f32 0.0, %v1554
        %1556 = vmatmul.f32.gmra.mxu0 %v1529
        %v1557 = vpop.f32.mrf.mxu0
        %v1558 = vadd.f32 0.0, %v1557
        %1559 = vmatmul.f32.gmra.mxu0 %v1532
        %v1560 = vpop.f32.mrf.mxu0
        %v1561 = vadd.f32 0.0, %v1560
        %1562 = vmatmul.f32.gmra.mxu0 %v1535
        %v1563 = vpop.f32.mrf.mxu0
        %v1564 = vadd.f32 0.0, %v1563
        %1565 = vdwg.mxu0
        %v1566 = vrcp.pop %v1438
        %v1567 = vmul.f32 %v1438, %v1566
        %v1568 = vsub.f32 1.0, %v1567
        %v1569 = vmul.f32 %v1566, %v1568
        %v1570 = vadd.f32 %v1566, %v1569
        %vm1571 = vweird.f32 %v1438
        %vm1572 = vweird.f32 %v1566
        %vm1573 = vmor %vm1571, %vm1572
        %v1574 = vsel %vm1573, %v1566, %v1570
        %v1575 = vand.u32 2147483647, %v1438
        %vm1576 = vcmp.eq.f32.partialorder %v1575, 8.507059e+37
        %v1577 = vand.u32 %v1438, 2147483648
        %v1578 = vor.u32 1.1754944e-38, %v1577
        %v1579 = vsel %vm1576, %v1578, %v1574
        %v1580 = vmul.f32 %v1502, %v1579
        %v1581 = vrcp.pop %v1441
        %v1582 = vmul.f32 %v1441, %v1581
        %v1583 = vsub.f32 1.0, %v1582
        %v1584 = vmul.f32 %v1581, %v1583
        %v1585 = vadd.f32 %v1581, %v1584
        %vm1586 = vweird.f32 %v1441
        %vm1587 = vweird.f32 %v1581
        %vm1588 = vmor %vm1586, %vm1587
        %v1589 = vsel %vm1588, %v1581, %v1585
        %v1590 = vand.u32 2147483647, %v1441
        %vm1591 = vcmp.eq.f32.partialorder %v1590, 8.507059e+37
        %v1592 = vand.u32 %v1441, 2147483648
        %v1593 = vor.u32 1.1754944e-38, %v1592
        %v1594 = vsel %vm1591, %v1593, %v1589
        %v1595 = vmul.f32 %v1505, %v1594
        %v1596 = vrcp.pop %v1444
        %v1597 = vmul.f32 %v1444, %v1596
        %v1598 = vsub.f32 1.0, %v1597
        %v1599 = vmul.f32 %v1596, %v1598
        %v1600 = vadd.f32 %v1596, %v1599
        %vm1601 = vweird.f32 %v1444
        %vm1602 = vweird.f32 %v1596
        %vm1603 = vmor %vm1601, %vm1602
        %v1604 = vsel %vm1603, %v1596, %v1600
        %v1605 = vand.u32 2147483647, %v1444
        %vm1606 = vcmp.eq.f32.partialorder %v1605, 8.507059e+37
        %v1607 = vand.u32 %v1444, 2147483648
        %v1608 = vor.u32 1.1754944e-38, %v1607
        %v1609 = vsel %vm1606, %v1608, %v1604
        %v1610 = vmul.f32 %v1508, %v1609
        %v1611 = vrcp.pop %v1447
        %v1612 = vmul.f32 %v1447, %v1611
        %v1613 = vsub.f32 1.0, %v1612
        %v1614 = vmul.f32 %v1611, %v1613
        %v1615 = vadd.f32 %v1611, %v1614
        %vm1616 = vweird.f32 %v1447
        %vm1617 = vweird.f32 %v1611
        %vm1618 = vmor %vm1616, %vm1617
        %v1619 = vsel %vm1618, %v1611, %v1615
        %v1620 = vand.u32 2147483647, %v1447
        %vm1621 = vcmp.eq.f32.partialorder %v1620, 8.507059e+37
        %v1622 = vand.u32 %v1447, 2147483648
        %v1623 = vor.u32 1.1754944e-38, %v1622
        %v1624 = vsel %vm1621, %v1623, %v1619
        %v1625 = vmul.f32 %v1511, %v1624
        %v1626 = vrcp.pop %v1450
        %v1627 = vmul.f32 %v1450, %v1626
        %v1628 = vsub.f32 1.0, %v1627
        %v1629 = vmul.f32 %v1626, %v1628
        %v1630 = vadd.f32 %v1626, %v1629
        %vm1631 = vweird.f32 %v1450
        %vm1632 = vweird.f32 %v1626
        %vm1633 = vmor %vm1631, %vm1632
        %v1634 = vsel %vm1633, %v1626, %v1630
        %v1635 = vand.u32 2147483647, %v1450
        %vm1636 = vcmp.eq.f32.partialorder %v1635, 8.507059e+37
        %v1637 = vand.u32 %v1450, 2147483648
        %v1638 = vor.u32 1.1754944e-38, %v1637
        %v1639 = vsel %vm1636, %v1638, %v1634
        %v1640 = vmul.f32 %v1555, %v1639
        %v1641 = vrcp.pop %v1453
        %v1642 = vmul.f32 %v1453, %v1641
        %v1643 = vsub.f32 1.0, %v1642
        %v1644 = vmul.f32 %v1641, %v1643
        %v1645 = vadd.f32 %v1641, %v1644
        %vm1646 = vweird.f32 %v1453
        %vm1647 = vweird.f32 %v1641
        %vm1648 = vmor %vm1646, %vm1647
        %v1649 = vsel %vm1648, %v1641, %v1645
        %v1650 = vand.u32 2147483647, %v1453
        %vm1651 = vcmp.eq.f32.partialorder %v1650, 8.507059e+37
        %v1652 = vand.u32 %v1453, 2147483648
        %v1653 = vor.u32 1.1754944e-38, %v1652
        %v1654 = vsel %vm1651, %v1653, %v1649
        %v1655 = vmul.f32 %v1558, %v1654
        %v1656 = vrcp.pop %v1456
        %v1657 = vmul.f32 %v1456, %v1656
        %v1658 = vsub.f32 1.0, %v1657
        %v1659 = vmul.f32 %v1656, %v1658
        %v1660 = vadd.f32 %v1656, %v1659
        %vm1661 = vweird.f32 %v1456
        %vm1662 = vweird.f32 %v1656
        %vm1663 = vmor %vm1661, %vm1662
        %v1664 = vsel %vm1663, %v1656, %v1660
        %v1665 = vand.u32 2147483647, %v1456
        %vm1666 = vcmp.eq.f32.partialorder %v1665, 8.507059e+37
        %v1667 = vand.u32 %v1456, 2147483648
        %v1668 = vor.u32 1.1754944e-38, %v1667
        %v1669 = vsel %vm1666, %v1668, %v1664
        %v1670 = vmul.f32 %v1561, %v1669
        %v1671 = vrcp.pop %v1459
        %v1672 = vmul.f32 %v1459, %v1671
        %v1673 = vsub.f32 1.0, %v1672
        %v1674 = vmul.f32 %v1671, %v1673
        %v1675 = vadd.f32 %v1671, %v1674
        %vm1676 = vweird.f32 %v1459
        %vm1677 = vweird.f32 %v1671
        %vm1678 = vmor %vm1676, %vm1677
        %v1679 = vsel %vm1678, %v1671, %v1675
        %v1680 = vand.u32 2147483647, %v1459
        %vm1681 = vcmp.eq.f32.partialorder %v1680, 8.507059e+37
        %v1682 = vand.u32 %v1459, 2147483648
        %v1683 = vor.u32 1.1754944e-38, %v1682
        %v1684 = vsel %vm1681, %v1683, %v1679
        %v1685 = vmul.f32 %v1564, %v1684
        %1694 = vrot.lane.b32.xlu0 %v1580, 16
        %v1695 = vpop.permute.xlu0 %1694
        %1696 = vrot.lane.b32.xlu0 %v1595, 16
        %v1697 = vpop.permute.xlu0 %1696
        %1698 = vrot.lane.b32.xlu0 %v1610, 16
        %v1699 = vpop.permute.xlu0 %1698
        %1700 = vrot.lane.b32.xlu0 %v1625, 16
        %v1701 = vpop.permute.xlu0 %1700
        %1702 = vrot.lane.b32.xlu0 %v1640, 16
        %v1703 = vpop.permute.xlu0 %1702
        %1704 = vrot.lane.b32.xlu0 %v1655, 16
        %v1705 = vpop.permute.xlu0 %1704
        %1706 = vrot.lane.b32.xlu0 %v1670, 16
        %v1707 = vpop.permute.xlu0 %1706
        %1708 = vrot.lane.b32.xlu0 %v1685, 16
        %v1709 = vpop.permute.xlu0 %1708
        %vm1718 = vcmask 195712
        %1719 = vst.msk [vmem:[#allocation2] sm:$0xff] %vm1718, %v1695
        %1720 = vst.msk [vmem:[#allocation2 + $0x8] sm:$0xff] %vm1718, %v1697
        %1721 = vst.msk [vmem:[#allocation2 + $0x10] sm:$0xff] %vm1718, %v1699
        %1722 = vst.msk [vmem:[#allocation2 + $0x18] sm:$0xff] %vm1718, %v1701
        %1723 = vst.msk [vmem:[#allocation2 + $0x20] sm:$0xff] %vm1718, %v1703
        %1724 = vst.msk [vmem:[#allocation2 + $0x28] sm:$0xff] %vm1718, %v1705
        %1725 = vst.msk [vmem:[#allocation2 + $0x30] sm:$0xff] %vm1718, %v1707
        %1726 = vst.msk [vmem:[#allocation2 + $0x38] sm:$0xff] %vm1718, %v1709
        %1727 = vrot.lane.b32.xlu0 %v353, 104
        %v1728 = vpop.permute.xlu0 %1727
        %1729 = vrot.lane.b32.xlu0 %v356, 104
        %v1730 = vpop.permute.xlu0 %1729
        %1731 = vrot.lane.b32.xlu0 %v359, 104
        %v1732 = vpop.permute.xlu0 %1731
        %1733 = vrot.lane.b32.xlu0 %v362, 104
        %v1734 = vpop.permute.xlu0 %1733
        %1735 = vrot.lane.b32.xlu0 %v353, 72
        %v1736 = vpop.permute.xlu0 %1735
        %1737 = vrot.lane.b32.xlu0 %v356, 72
        %v1738 = vpop.permute.xlu0 %1737
        %1739 = vrot.lane.b32.xlu0 %v359, 72
        %v1740 = vpop.permute.xlu0 %1739
        %1741 = vrot.lane.b32.xlu0 %v362, 72
        %v1742 = vpop.permute.xlu0 %1741
        %v1743 = vsel %vm396, %v1728, 0
        %v1745 = vsel %vm396, %v1730, 0
        %v1747 = vsel %vm396, %v1732, 0
        %v1749 = vsel %vm396, %v1734, 0
        %v1751 = vsel %vm396, %v1736, 0
        %v1753 = vsel %vm396, %v1738, 0
        %v1755 = vsel %vm396, %v1740, 0
        %v1757 = vsel %vm396, %v1742, 0
        %1759 = vmatpush.xpose.msra.mxu0 0.0
        %1760 = vmatpush.xpose.msra.mxu0 0.0
        %1761 = vmatpush.xpose.msra.mxu0 0.0
        %1762 = vmatpush.xpose.msra.mxu0 0.0
        %1763 = vmatpush.xpose.msra.mxu0 0.0
        %1764 = vmatpush.xpose.msra.mxu0 0.0
        %1765 = vmatpush.xpose.msra.mxu0 0.0
        %1766 = vmatpush.xpose.msra.mxu0 0.0
        %1767 = vmatpush.xpose.msra.mxu0 0.0
        %1768 = vmatpush.xpose.msra.mxu0 0.0
        %1769 = vmatpush.xpose.msra.mxu0 0.0
        %1770 = vmatpush.xpose.msra.mxu0 0.0
        %1771 = vmatpush.xpose.msra.mxu0 %v1757
        %1772 = vmatpush.xpose.msra.mxu0 %v1755
        %1773 = vmatpush.xpose.msra.mxu0 %v1753
        %1774 = vmatpush.xpose.msra.mxu0 %v1751
        %1775 = vmatmul.f32.gmra.mxu0 %v1743
        %v1776 = vpop.f32.mrf.mxu0
        %v1777 = vadd.f32 %v376, %v1776
        %1778 = vmatmul.f32.gmra.mxu0 %v1745
        %v1779 = vpop.f32.mrf.mxu0
        %v1780 = vadd.f32 %v377, %v1779
        %1781 = vmatmul.f32.gmra.mxu0 %v1747
        %v1782 = vpop.f32.mrf.mxu0
        %v1783 = vadd.f32 %v378, %v1782
        %1784 = vmatmul.f32.gmra.mxu0 %v1749
        %v1785 = vpop.f32.mrf.mxu0
        %v1786 = vadd.f32 %v379, %v1785
        %1787 = vdwg.mxu0
        %1788 = vrot.lane.b32.xlu0 %v365, 104
        %v1789 = vpop.permute.xlu0 %1788
        %1790 = vrot.lane.b32.xlu0 %v368, 104
        %v1791 = vpop.permute.xlu0 %1790
        %1792 = vrot.lane.b32.xlu0 %v371, 104
        %v1793 = vpop.permute.xlu0 %1792
        %1794 = vrot.lane.b32.xlu0 %v374, 104
        %v1795 = vpop.permute.xlu0 %1794
        %1796 = vrot.lane.b32.xlu0 %v365, 72
        %v1797 = vpop.permute.xlu0 %1796
        %1798 = vrot.lane.b32.xlu0 %v368, 72
        %v1799 = vpop.permute.xlu0 %1798
        %1800 = vrot.lane.b32.xlu0 %v371, 72
        %v1801 = vpop.permute.xlu0 %1800
        %1802 = vrot.lane.b32.xlu0 %v374, 72
        %v1803 = vpop.permute.xlu0 %1802
        %v1804 = vsel %vm396, %v1789, 0
        %v1806 = vsel %vm396, %v1791, 0
        %v1808 = vsel %vm396, %v1793, 0
        %v1810 = vsel %vm396, %v1795, 0
        %v1812 = vsel %vm396, %v1797, 0
        %v1814 = vsel %vm396, %v1799, 0
        %v1816 = vsel %vm396, %v1801, 0
        %v1818 = vsel %vm396, %v1803, 0
        %1820 = vmatpush.xpose.msra.mxu0 0.0
        %1821 = vmatpush.xpose.msra.mxu0 0.0
        %1822 = vmatpush.xpose.msra.mxu0 0.0
        %1823 = vmatpush.xpose.msra.mxu0 0.0
        %1824 = vmatpush.xpose.msra.mxu0 0.0
        %1825 = vmatpush.xpose.msra.mxu0 0.0
        %1826 = vmatpush.xpose.msra.mxu0 0.0
        %1827 = vmatpush.xpose.msra.mxu0 0.0
        %1828 = vmatpush.xpose.msra.mxu0 0.0
        %1829 = vmatpush.xpose.msra.mxu0 0.0
        %1830 = vmatpush.xpose.msra.mxu0 0.0
        %1831 = vmatpush.xpose.msra.mxu0 0.0
        %1832 = vmatpush.xpose.msra.mxu0 %v1818
        %1833 = vmatpush.xpose.msra.mxu0 %v1816
        %1834 = vmatpush.xpose.msra.mxu0 %v1814
        %1835 = vmatpush.xpose.msra.mxu0 %v1812
        %1836 = vmatmul.f32.gmra.mxu0 %v1804
        %v1837 = vpop.f32.mrf.mxu0
        %v1838 = vadd.f32 %v380, %v1837
        %1839 = vmatmul.f32.gmra.mxu0 %v1806
        %v1840 = vpop.f32.mrf.mxu0
        %v1841 = vadd.f32 %v381, %v1840
        %1842 = vmatmul.f32.gmra.mxu0 %v1808
        %v1843 = vpop.f32.mrf.mxu0
        %v1844 = vadd.f32 %v382, %v1843
        %1845 = vmatmul.f32.gmra.mxu0 %v1810
        %v1846 = vpop.f32.mrf.mxu0
        %v1847 = vadd.f32 %v383, %v1846
        %1848 = vdwg.mxu0
        %v1849 = vsel %vm310, %v1777, -inf
        %1850 = vmax.xlane.f32.xlu0 %v1849
        %v1851 = vpop.xlane.xlu0 %1850
        %v1852 = vsel %vm310, %v1780, -inf
        %1853 = vmax.xlane.f32.xlu0 %v1852
        %v1854 = vpop.xlane.xlu0 %1853
        %v1855 = vsel %vm310, %v1783, -inf
        %1856 = vmax.xlane.f32.xlu0 %v1855
        %v1857 = vpop.xlane.xlu0 %1856
        %v1858 = vsel %vm310, %v1786, -inf
        %1859 = vmax.xlane.f32.xlu0 %v1858
        %v1860 = vpop.xlane.xlu0 %1859
        %v1861 = vsel %vm310, %v1838, -inf
        %1862 = vmax.xlane.f32.xlu0 %v1861
        %v1863 = vpop.xlane.xlu0 %1862
        %v1864 = vsel %vm310, %v1841, -inf
        %1865 = vmax.xlane.f32.xlu0 %v1864
        %v1866 = vpop.xlane.xlu0 %1865
        %v1867 = vsel %vm310, %v1844, -inf
        %1868 = vmax.xlane.f32.xlu0 %v1867
        %v1869 = vpop.xlane.xlu0 %1868
        %v1870 = vsel %vm310, %v1847, -inf
        %1871 = vmax.xlane.f32.xlu0 %v1870
        %v1872 = vpop.xlane.xlu0 %1871
        %v1873 = vsub.f32 %v1777, %v1851
        %v1874 = vsub.f32 %v1780, %v1854
        %v1875 = vsub.f32 %v1783, %v1857
        %v1876 = vsub.f32 %v1786, %v1860
        %v1877 = vsub.f32 %v1838, %v1863
        %v1878 = vsub.f32 %v1841, %v1866
        %v1879 = vsub.f32 %v1844, %v1869
        %v1880 = vsub.f32 %v1847, %v1872
        %v1881 = vmul.f32 %v1873, 1.442695
        %v1882 = vpow.pop %v1881
        %v1883 = vmul.f32 %v1874, 1.442695
        %v1884 = vpow.pop %v1883
        %v1885 = vmul.f32 %v1875, 1.442695
        %v1886 = vpow.pop %v1885
        %v1887 = vmul.f32 %v1876, 1.442695
        %v1888 = vpow.pop %v1887
        %v1889 = vmul.f32 %v1877, 1.442695
        %v1890 = vpow.pop %v1889
        %v1891 = vmul.f32 %v1878, 1.442695
        %v1892 = vpow.pop %v1891
        %v1893 = vmul.f32 %v1879, 1.442695
        %v1894 = vpow.pop %v1893
        %v1895 = vmul.f32 %v1880, 1.442695
        %v1896 = vpow.pop %v1895
        %v1897 = vsel %vm310, %v1882, 0.0
        %1898 = vadd.xlane.f32.xlu0 %v1897
        %v1899 = vpop.xlane.xlu0 %1898
        %v1900 = vsel %vm310, %v1884, 0.0
        %1901 = vadd.xlane.f32.xlu0 %v1900
        %v1902 = vpop.xlane.xlu0 %1901
        %v1903 = vsel %vm310, %v1886, 0.0
        %1904 = vadd.xlane.f32.xlu0 %v1903
        %v1905 = vpop.xlane.xlu0 %1904
        %v1906 = vsel %vm310, %v1888, 0.0
        %1907 = vadd.xlane.f32.xlu0 %v1906
        %v1908 = vpop.xlane.xlu0 %1907
        %v1909 = vsel %vm310, %v1890, 0.0
        %1910 = vadd.xlane.f32.xlu0 %v1909
        %v1911 = vpop.xlane.xlu0 %1910
        %v1912 = vsel %vm310, %v1892, 0.0
        %1913 = vadd.xlane.f32.xlu0 %v1912
        %v1914 = vpop.xlane.xlu0 %1913
        %v1915 = vsel %vm310, %v1894, 0.0
        %1916 = vadd.xlane.f32.xlu0 %v1915
        %v1917 = vpop.xlane.xlu0 %1916
        %v1918 = vsel %vm310, %v1896, 0.0
        %1919 = vadd.xlane.f32.xlu0 %v1918
        %v1920 = vpop.xlane.xlu0 %1919
        %1921 = vrot.lane.b32.xlu0 %v353, 40
        %v1922 = vpop.permute.xlu0 %1921
        %1923 = vrot.lane.b32.xlu0 %v356, 40
        %v1924 = vpop.permute.xlu0 %1923
        %1925 = vrot.lane.b32.xlu0 %v359, 40
        %v1926 = vpop.permute.xlu0 %1925
        %1927 = vrot.lane.b32.xlu0 %v362, 40
        %v1928 = vpop.permute.xlu0 %1927
        %v1934 = vsel %vm310, %v1882, 0
        %v1937 = vsel %vm310, %v1884, 0
        %v1940 = vsel %vm310, %v1886, 0
        %v1943 = vsel %vm310, %v1888, 0
        %1945 = vmatpush.msra.mxu0 0.0
        %1946 = vmatpush.msra.mxu0 0.0
        %1947 = vmatpush.msra.mxu0 0.0
        %1948 = vmatpush.msra.mxu0 0.0
        %1949 = vmatpush.msra.mxu0 0.0
        %1950 = vmatpush.msra.mxu0 0.0
        %1951 = vmatpush.msra.mxu0 0.0
        %1952 = vmatpush.msra.mxu0 0.0
        %1953 = vmatpush.msra.mxu0 0.0
        %1954 = vmatpush.msra.mxu0 0.0
        %1955 = vmatpush.msra.mxu0 0.0
        %1956 = vmatpush.msra.mxu0 0.0
        %1957 = vmatpush.msra.mxu0 %v1928
        %1958 = vmatpush.msra.mxu0 %v1926
        %1959 = vmatpush.msra.mxu0 %v1924
        %1960 = vmatpush.msra.mxu0 %v1922
        %1961 = vmatmul.f32.gmra.mxu0 %v1934
        %v1962 = vpop.f32.mrf.mxu0
        %v1963 = vadd.f32 0.0, %v1962
        %1964 = vmatmul.f32.gmra.mxu0 %v1937
        %v1965 = vpop.f32.mrf.mxu0
        %v1966 = vadd.f32 0.0, %v1965
        %1967 = vmatmul.f32.gmra.mxu0 %v1940
        %v1968 = vpop.f32.mrf.mxu0
        %v1969 = vadd.f32 0.0, %v1968
        %1970 = vmatmul.f32.gmra.mxu0 %v1943
        %v1971 = vpop.f32.mrf.mxu0
        %v1972 = vadd.f32 0.0, %v1971
        %1973 = vdwg.mxu0
        %1974 = vrot.lane.b32.xlu0 %v365, 40
        %v1975 = vpop.permute.xlu0 %1974
        %1976 = vrot.lane.b32.xlu0 %v368, 40
        %v1977 = vpop.permute.xlu0 %1976
        %1978 = vrot.lane.b32.xlu0 %v371, 40
        %v1979 = vpop.permute.xlu0 %1978
        %1980 = vrot.lane.b32.xlu0 %v374, 40
        %v1981 = vpop.permute.xlu0 %1980
        %v1987 = vsel %vm310, %v1890, 0
        %v1990 = vsel %vm310, %v1892, 0
        %v1993 = vsel %vm310, %v1894, 0
        %v1996 = vsel %vm310, %v1896, 0
        %1998 = vmatpush.msra.mxu0 0.0
        %1999 = vmatpush.msra.mxu0 0.0
        %2000 = vmatpush.msra.mxu0 0.0
        %2001 = vmatpush.msra.mxu0 0.0
        %2002 = vmatpush.msra.mxu0 0.0
        %2003 = vmatpush.msra.mxu0 0.0
        %2004 = vmatpush.msra.mxu0 0.0
        %2005 = vmatpush.msra.mxu0 0.0
        %2006 = vmatpush.msra.mxu0 0.0
        %2007 = vmatpush.msra.mxu0 0.0
        %2008 = vmatpush.msra.mxu0 0.0
        %2009 = vmatpush.msra.mxu0 0.0
        %2010 = vmatpush.msra.mxu0 %v1981
        %2011 = vmatpush.msra.mxu0 %v1979
        %2012 = vmatpush.msra.mxu0 %v1977
        %2013 = vmatpush.msra.mxu0 %v1975
        %2014 = vmatmul.f32.gmra.mxu0 %v1987
        %v2015 = vpop.f32.mrf.mxu0
        %v2016 = vadd.f32 0.0, %v2015
        %2017 = vmatmul.f32.gmra.mxu0 %v1990
        %v2018 = vpop.f32.mrf.mxu0
        %v2019 = vadd.f32 0.0, %v2018
        %2020 = vmatmul.f32.gmra.mxu0 %v1993
        %v2021 = vpop.f32.mrf.mxu0
        %v2022 = vadd.f32 0.0, %v2021
        %2023 = vmatmul.f32.gmra.mxu0 %v1996
        %v2024 = vpop.f32.mrf.mxu0
        %v2025 = vadd.f32 0.0, %v2024
        %2026 = vdwg.mxu0
        %v2027 = vrcp.pop %v1899
        %v2028 = vmul.f32 %v1899, %v2027
        %v2029 = vsub.f32 1.0, %v2028
        %v2030 = vmul.f32 %v2027, %v2029
        %v2031 = vadd.f32 %v2027, %v2030
        %vm2032 = vweird.f32 %v1899
        %vm2033 = vweird.f32 %v2027
        %vm2034 = vmor %vm2032, %vm2033
        %v2035 = vsel %vm2034, %v2027, %v2031
        %v2036 = vand.u32 2147483647, %v1899
        %vm2037 = vcmp.eq.f32.partialorder %v2036, 8.507059e+37
        %v2038 = vand.u32 %v1899, 2147483648
        %v2039 = vor.u32 1.1754944e-38, %v2038
        %v2040 = vsel %vm2037, %v2039, %v2035
        %v2041 = vmul.f32 %v1963, %v2040
        %v2042 = vrcp.pop %v1902
        %v2043 = vmul.f32 %v1902, %v2042
        %v2044 = vsub.f32 1.0, %v2043
        %v2045 = vmul.f32 %v2042, %v2044
        %v2046 = vadd.f32 %v2042, %v2045
        %vm2047 = vweird.f32 %v1902
        %vm2048 = vweird.f32 %v2042
        %vm2049 = vmor %vm2047, %vm2048
        %v2050 = vsel %vm2049, %v2042, %v2046
        %v2051 = vand.u32 2147483647, %v1902
        %vm2052 = vcmp.eq.f32.partialorder %v2051, 8.507059e+37
        %v2053 = vand.u32 %v1902, 2147483648
        %v2054 = vor.u32 1.1754944e-38, %v2053
        %v2055 = vsel %vm2052, %v2054, %v2050
        %v2056 = vmul.f32 %v1966, %v2055
        %v2057 = vrcp.pop %v1905
        %v2058 = vmul.f32 %v1905, %v2057
        %v2059 = vsub.f32 1.0, %v2058
        %v2060 = vmul.f32 %v2057, %v2059
        %v2061 = vadd.f32 %v2057, %v2060
        %vm2062 = vweird.f32 %v1905
        %vm2063 = vweird.f32 %v2057
        %vm2064 = vmor %vm2062, %vm2063
        %v2065 = vsel %vm2064, %v2057, %v2061
        %v2066 = vand.u32 2147483647, %v1905
        %vm2067 = vcmp.eq.f32.partialorder %v2066, 8.507059e+37
        %v2068 = vand.u32 %v1905, 2147483648
        %v2069 = vor.u32 1.1754944e-38, %v2068
        %v2070 = vsel %vm2067, %v2069, %v2065
        %v2071 = vmul.f32 %v1969, %v2070
        %v2072 = vrcp.pop %v1908
        %v2073 = vmul.f32 %v1908, %v2072
        %v2074 = vsub.f32 1.0, %v2073
        %v2075 = vmul.f32 %v2072, %v2074
        %v2076 = vadd.f32 %v2072, %v2075
        %vm2077 = vweird.f32 %v1908
        %vm2078 = vweird.f32 %v2072
        %vm2079 = vmor %vm2077, %vm2078
        %v2080 = vsel %vm2079, %v2072, %v2076
        %v2081 = vand.u32 2147483647, %v1908
        %vm2082 = vcmp.eq.f32.partialorder %v2081, 8.507059e+37
        %v2083 = vand.u32 %v1908, 2147483648
        %v2084 = vor.u32 1.1754944e-38, %v2083
        %v2085 = vsel %vm2082, %v2084, %v2080
        %v2086 = vmul.f32 %v1972, %v2085
        %v2087 = vrcp.pop %v1911
        %v2088 = vmul.f32 %v1911, %v2087
        %v2089 = vsub.f32 1.0, %v2088
        %v2090 = vmul.f32 %v2087, %v2089
        %v2091 = vadd.f32 %v2087, %v2090
        %vm2092 = vweird.f32 %v1911
        %vm2093 = vweird.f32 %v2087
        %vm2094 = vmor %vm2092, %vm2093
        %v2095 = vsel %vm2094, %v2087, %v2091
        %v2096 = vand.u32 2147483647, %v1911
        %vm2097 = vcmp.eq.f32.partialorder %v2096, 8.507059e+37
        %v2098 = vand.u32 %v1911, 2147483648
        %v2099 = vor.u32 1.1754944e-38, %v2098
        %v2100 = vsel %vm2097, %v2099, %v2095
        %v2101 = vmul.f32 %v2016, %v2100
        %v2102 = vrcp.pop %v1914
        %v2103 = vmul.f32 %v1914, %v2102
        %v2104 = vsub.f32 1.0, %v2103
        %v2105 = vmul.f32 %v2102, %v2104
        %v2106 = vadd.f32 %v2102, %v2105
        %vm2107 = vweird.f32 %v1914
        %vm2108 = vweird.f32 %v2102
        %vm2109 = vmor %vm2107, %vm2108
        %v2110 = vsel %vm2109, %v2102, %v2106
        %v2111 = vand.u32 2147483647, %v1914
        %vm2112 = vcmp.eq.f32.partialorder %v2111, 8.507059e+37
        %v2113 = vand.u32 %v1914, 2147483648
        %v2114 = vor.u32 1.1754944e-38, %v2113
        %v2115 = vsel %vm2112, %v2114, %v2110
        %v2116 = vmul.f32 %v2019, %v2115
        %v2117 = vrcp.pop %v1917
        %v2118 = vmul.f32 %v1917, %v2117
        %v2119 = vsub.f32 1.0, %v2118
        %v2120 = vmul.f32 %v2117, %v2119
        %v2121 = vadd.f32 %v2117, %v2120
        %vm2122 = vweird.f32 %v1917
        %vm2123 = vweird.f32 %v2117
        %vm2124 = vmor %vm2122, %vm2123
        %v2125 = vsel %vm2124, %v2117, %v2121
        %v2126 = vand.u32 2147483647, %v1917
        %vm2127 = vcmp.eq.f32.partialorder %v2126, 8.507059e+37
        %v2128 = vand.u32 %v1917, 2147483648
        %v2129 = vor.u32 1.1754944e-38, %v2128
        %v2130 = vsel %vm2127, %v2129, %v2125
        %v2131 = vmul.f32 %v2022, %v2130
        %v2132 = vrcp.pop %v1920
        %v2133 = vmul.f32 %v1920, %v2132
        %v2134 = vsub.f32 1.0, %v2133
        %v2135 = vmul.f32 %v2132, %v2134
        %v2136 = vadd.f32 %v2132, %v2135
        %vm2137 = vweird.f32 %v1920
        %vm2138 = vweird.f32 %v2132
        %vm2139 = vmor %vm2137, %vm2138
        %v2140 = vsel %vm2139, %v2132, %v2136
        %v2141 = vand.u32 2147483647, %v1920
        %vm2142 = vcmp.eq.f32.partialorder %v2141, 8.507059e+37
        %v2143 = vand.u32 %v1920, 2147483648
        %v2144 = vor.u32 1.1754944e-38, %v2143
        %v2145 = vsel %vm2142, %v2144, %v2140
        %v2146 = vmul.f32 %v2025, %v2145
        %2155 = vrot.lane.b32.xlu0 %v2041, 24
        %v2156 = vpop.permute.xlu0 %2155
        %2157 = vrot.lane.b32.xlu0 %v2056, 24
        %v2158 = vpop.permute.xlu0 %2157
        %2159 = vrot.lane.b32.xlu0 %v2071, 24
        %v2160 = vpop.permute.xlu0 %2159
        %2161 = vrot.lane.b32.xlu0 %v2086, 24
        %v2162 = vpop.permute.xlu0 %2161
        %2163 = vrot.lane.b32.xlu0 %v2101, 24
        %v2164 = vpop.permute.xlu0 %2163
        %2165 = vrot.lane.b32.xlu0 %v2116, 24
        %v2166 = vpop.permute.xlu0 %2165
        %2167 = vrot.lane.b32.xlu0 %v2131, 24
        %v2168 = vpop.permute.xlu0 %2167
        %2169 = vrot.lane.b32.xlu0 %v2146, 24
        %v2170 = vpop.permute.xlu0 %2169
        %vm2179 = vcmask 261312
        %2180 = vst.msk [vmem:[#allocation2] sm:$0xff] %vm2179, %v2156
        %2181 = vst.msk [vmem:[#allocation2 + $0x8] sm:$0xff] %vm2179, %v2158
        %2182 = vst.msk [vmem:[#allocation2 + $0x10] sm:$0xff] %vm2179, %v2160
        %2183 = vst.msk [vmem:[#allocation2 + $0x18] sm:$0xff] %vm2179, %v2162
        %2184 = vst.msk [vmem:[#allocation2 + $0x20] sm:$0xff] %vm2179, %v2164
        %2185 = vst.msk [vmem:[#allocation2 + $0x28] sm:$0xff] %vm2179, %v2166
        %2186 = vst.msk [vmem:[#allocation2 + $0x30] sm:$0xff] %vm2179, %v2168
        %2187 = vst.msk [vmem:[#allocation2 + $0x38] sm:$0xff] %vm2179, %v2170
        %v2188 = vld [vmem:[#allocation2] sm:$0xff]
        %v2189 = vld [vmem:[#allocation2 + $0x8] sm:$0xff]
        %v2190 = vld [vmem:[#allocation2 + $0x10] sm:$0xff]
        %v2191 = vld [vmem:[#allocation2 + $0x18] sm:$0xff]
        %v2192 = vld [vmem:[#allocation2 + $0x20] sm:$0xff]
        %v2193 = vld [vmem:[#allocation2 + $0x28] sm:$0xff]
        %v2194 = vld [vmem:[#allocation2 + $0x30] sm:$0xff]
        %v2195 = vld [vmem:[#allocation2 + $0x38] sm:$0xff]
        %v2196 = vld [vmem:[#allocation9] sm:$0xff]
        %v2197 = vld [vmem:[#allocation9 + $0x8] sm:$0xff]
        %v2198 = vld [vmem:[#allocation9 + $0x10] sm:$0xff]
        %v2199 = vld [vmem:[#allocation9 + $0x18] sm:$0xff]
        %v2200 = vld [vmem:[%s4] sm:$0x1]
        %v2202 = vperm.slane %v2200, 0
        %v2205 = vsel %vm310, %v2188, 0
        %v2208 = vsel %vm310, %v2189, 0
        %v2211 = vsel %vm310, %v2190, 0
        %v2214 = vsel %vm310, %v2191, 0
        %v2217 = vsel %vm310, %v2192, 0
        %v2220 = vsel %vm310, %v2193, 0
        %v2223 = vsel %vm310, %v2194, 0
        %v2226 = vsel %vm310, %v2195, 0
        %2228 = vmatpush.msra.mxu0 0.0
        %2229 = vmatpush.msra.mxu0 0.0
        %2230 = vmatpush.msra.mxu0 0.0
        %2231 = vmatpush.msra.mxu0 0.0
        %2232 = vmatpush.msra.mxu0 0.0
        %2233 = vmatpush.msra.mxu0 0.0
        %2234 = vmatpush.msra.mxu0 0.0
        %2235 = vmatpush.msra.mxu0 0.0
        %2236 = vmatpush.msra.mxu0 0.0
        %2237 = vmatpush.msra.mxu0 0.0
        %2238 = vmatpush.msra.mxu0 0.0
        %2239 = vmatpush.msra.mxu0 0.0
        %2240 = vmatpush.msra.mxu0 %v2199
        %2241 = vmatpush.msra.mxu0 %v2198
        %2242 = vmatpush.msra.mxu0 %v2197
        %2243 = vmatpush.msra.mxu0 %v2196
        %2244 = vmatmul.f32.gmra.mxu0 %v2205
        %v2245 = vpop.f32.mrf.mxu0
        %v2246 = vadd.f32 %v2202, %v2245
        %2247 = vmatmul.f32.gmra.mxu0 %v2208
        %v2248 = vpop.f32.mrf.mxu0
        %v2249 = vadd.f32 %v2202, %v2248
        %2250 = vmatmul.f32.gmra.mxu0 %v2211
        %v2251 = vpop.f32.mrf.mxu0
        %v2252 = vadd.f32 %v2202, %v2251
        %2253 = vmatmul.f32.gmra.mxu0 %v2214
        %v2254 = vpop.f32.mrf.mxu0
        %v2255 = vadd.f32 %v2202, %v2254
        %2256 = vmatmul.f32.gmra.mxu0 %v2217
        %v2257 = vpop.f32.mrf.mxu0
        %v2258 = vadd.f32 %v2202, %v2257
        %2259 = vmatmul.f32.gmra.mxu0 %v2220
        %v2260 = vpop.f32.mrf.mxu0
        %v2261 = vadd.f32 %v2202, %v2260
        %2262 = vmatmul.f32.gmra.mxu0 %v2223
        %v2263 = vpop.f32.mrf.mxu0
        %v2264 = vadd.f32 %v2202, %v2263
        %2265 = vmatmul.f32.gmra.mxu0 %v2226
        %v2266 = vpop.f32.mrf.mxu0
        %v2267 = vadd.f32 %v2202, %v2266
        %2268 = vdwg.mxu0
        %2269 = vst.msk [vmem:[%s295] sm:$0xff] %vm310, %v2246
        %2270 = vst.msk [vmem:[%s295 + $0x8] sm:$0xff] %vm310, %v2249
        %2271 = vst.msk [vmem:[%s295 + $0x10] sm:$0xff] %vm310, %v2252
        %2272 = vst.msk [vmem:[%s295 + $0x18] sm:$0xff] %vm310, %v2255
        %2273 = vst.msk [vmem:[%s295 + $0x20] sm:$0xff] %vm310, %v2258
        %2274 = vst.msk [vmem:[%s295 + $0x28] sm:$0xff] %vm310, %v2261
        %2275 = vst.msk [vmem:[%s295 + $0x30] sm:$0xff] %vm310, %v2264
        %2276 = vst.msk [vmem:[%s295 + $0x38] sm:$0xff] %vm310, %v2267
        %s2277 = sand.u32 %s142, 1
        %s2278 = scalar_lea.sflag [#allocation5], %s2277
        %s2279 = sand.u32 %s142, 1
        %s2280 = smul.addr %s2279, 64
        %s2281 = scalar_lea.vmem [#allocation11], %s2280
        // Predicated region
        $region57: #{tpu_custom_call.1} parent=39 // pred_check
          %p2282 = pneg %p152
        $region58: #{tpu_custom_call.1} parent=39 // pred_check_branch
          %2284 = sbr.rel (%p2282) target = $region60
        $region59: #{tpu_custom_call.1} parent=39 // pred_region
          %s2285 = smul.u32 2, %s24
          %2287 = vsyncadd %s2278, 0
          %s2288 = smul.addr %s2285, 4
          %s2289 = smul.addr %s2288, 8
          %s2290 = scalar_lea.hbm %s5, %s2289
          %s2291 = sshll.u32 %s2281, 4
          %s2292 = int_to_ptr.vmem [resolvable:$true] %s2291
          %s2293 = sshll.u32 %s2290, 4
          %s2294 = int_to_ptr.hbm [resolvable:$true] %s2293
          %2299 = dma.vmem_to_hbm [thread:$0]  %s2292, 1024, %s2294, %s2278, 128, 128, 8
        $region60: #{tpu_custom_call.1} parent=39 // pred_fallthru
          _
      $region40: #{tpu_custom_call.1} parent=5 // pred_fallthru
        _
      %p2300 = scmp.le.s32.totalorder 2, %s19
      // Predicated region
      $region61: #{tpu_custom_call.1} parent=5 // pred_check
        %p2301 = pneg %p2300
      $region62: #{tpu_custom_call.1} parent=5 // pred_check_branch
        %2303 = sbr.rel (%p2301) target = $region64
      $region63: #{tpu_custom_call.1} parent=5 // pred_region
        %s2304 = ssub.s32 %s19, 2
        // Predicated region
        $region65: #{tpu_custom_call.1} parent=63 // pred_check
          %p2305 = pneg %p158
        $region66: #{tpu_custom_call.1} parent=63 // pred_check_branch
          %2307 = sbr.rel (%p2305) target = $region68
        $region67: #{tpu_custom_call.1} parent=63 // pred_region
          %s2308 = sand.u32 %s143, 1
          %s2309 = scalar_lea.sflag [#allocation5], %s2308
          %s2310 = sand.u32 %s143, 1
          %s2311 = smul.addr %s2310, 64
          %s2312 = scalar_lea.vmem [#allocation11], %s2311
          %2314 = dma.done %s2309, 1024
        $region68: #{tpu_custom_call.1} parent=63 // pred_fallthru
          _
      $region64: #{tpu_custom_call.1} parent=5 // pred_fallthru
        _
    $region6: #{tpu_custom_call.1} parent=1 // loop_footer
      %s23 = sadd.s32 1, %s19
    $region7: #{tpu_custom_call.1} parent=1 // loop_footer_branch
      %18 = sbr.rel target = $region3
    $region8: #{tpu_custom_call.1} parent=1 // loop_exit
      _
    %2315 = vsyncpa [#allocation4], 1
    %s2316 = scalar_lea.sflag [#allocation4], 1
    %2317 = vsyncpa %s2316, 1
    %2318 = vsyncpa [#allocation7], 1
    %2319 = vsyncpa [#allocation10], 1
    %2320 = vsyncpa [#allocation5], 1
    %s2321 = scalar_lea.sflag [#allocation5], 1
    %2322 = vsyncpa %s2321, 1

</llo_original>
